<compile_context>
chip_gen: v6e
topology: v6e:2x2x1
jax: 0.10.0
libtpu: 0.0.40
codegen_flags: <defaults>
</compile_context>

<pallas_src>
import functools

import jax
import jax.numpy as jnp
from jax.experimental import pallas as pl
from jax.experimental.pallas import tpu as pltpu

MXU_DTYPE = jnp.bfloat16   # node-feature matmul operand dtype; accumulation f32


def _silu(x):
    return x * jax.nn.sigmoid(x)


# ----------------------------------------------------------------------------
# Fused Pallas kernel body: one (layer, receiver-tile) grid step
# ----------------------------------------------------------------------------
def painn_kernel(sf0_ref, e_sv_ref, e_dir_ref,
                 phi1_w, phi1_b, phi2_w, phi2_b,
                 wf_s, wf_vv, wf_r,
                 uv_w, a1w_s, a1w_v, a1_b, a2_w, a2_b,
                 o1_w, o1_b, o2_w, o2_b,
                 out_ref,
                 sf_buf, vf_buf, phi_scr, dvf_acc):
    l = pl.program_id(0)            # layer (outer, sequential)
    t = pl.program_id(1)            # receiver-node tile (inner)
    L = pl.num_programs(0)
    Npad, F = sf0_ref.shape
    TI = out_ref.shape[0]
    mx = phi1_w.dtype               # bf16 for node-feature matmuls
    F2, F3 = 2 * F, 3 * F

    cur = l % 2                     # sf/vf buffer read this layer
    nxt = 1 - cur                   # sf/vf buffer written this layer
    row0 = pl.multiple_of(t * TI, TI)

    # ---- one-time init of the node-state scratch ----
    @pl.when(jnp.logical_and(l == 0, t == 0))
    def _():
        sf_buf[0] = sf0_ref[...]
        vf_buf[0] = jnp.zeros((3, Npad, F), jnp.float32)

    # ---- per-layer: phi(sf_j) for all sender nodes, computed once per layer ----
    @pl.when(t == 0)
    def _():
        sf_all = sf_buf[cur]                                               # [N, F]
        h = _silu(jnp.dot(sf_all.astype(mx), phi1_w[...],
                          preferred_element_type=jnp.float32) + phi1_b[...])
        phi_scr[...] = jnp.dot(h.astype(mx), phi2_w[...],
                               preferred_element_type=jnp.float32) + phi2_b[...]

    phi = phi_scr[...]                                                     # [N, 3F]
    phi_s, phi_vv, phi_vr = phi[:, :F], phi[:, F:F2], phi[:, F2:]

    # -------- Message block for this receiver tile (senders j = all nodes) ----
    e_sv = e_sv_ref[...]                                                   # [TI*N, Kp] f32
    W_s = jnp.dot(e_sv, wf_s[...],
                  preferred_element_type=jnp.float32).reshape(TI, Npad, F)
    W_vv = jnp.dot(e_sv, wf_vv[...],
                   preferred_element_type=jnp.float32).reshape(TI, Npad, F)

    dsf = jnp.sum(W_s * phi_s[None, :, :], axis=1)                         # [TI, F]

    # Direction term fully from the MXU: e_dir already carries dir_d * rbf_aug.
    wr = wf_r[...]                                                         # [Kp, F]
    for d in range(3):
        Wrd = jnp.dot(e_dir_ref[d], wr,
                      preferred_element_type=jnp.float32).reshape(TI, Npad, F)
        dvf_acc[d] = jnp.sum(Wrd * phi_vr[None, :, :], axis=1)             # [TI, F]

    # vv gating term — skipped at runtime for layer 0 where vf == 0.
    @pl.when(l > 0)
    def _():
        G = W_vv * phi_vv[None, :, :]                                      # [TI, N, F]
        vfp = vf_buf[cur]                                                  # [3, N, F]
        for d in range(3):
            dvf_acc[d] = dvf_acc[d] + jnp.sum(G * vfp[d][None, :, :], axis=1)

    dvf = dvf_acc[...]                                                     # [3, TI, F]

    # -------- Update block (node-local, this tile only) --------
    sf_prev_t = sf_buf[cur, pl.ds(row0, TI), :]                            # [TI, F]
    vf_prev_t = vf_buf[cur, :, pl.ds(row0, TI), :]                         # [3, TI, F]
    sf1 = sf_prev_t + dsf
    vf1 = vf_prev_t + dvf

    uv = jnp.dot(vf1.reshape(3 * TI, F).astype(mx), uv_w[...],
                 preferred_element_type=jnp.float32).reshape(3, TI, F2)
    Uv, Vv = uv[:, :, :F], uv[:, :, F:]                                    # [3, TI, F]
    vnorm = jnp.sqrt(Vv[0] * Vv[0] + Vv[1] * Vv[1] + Vv[2] * Vv[2] + 1e-8)

    ah = _silu(jnp.dot(sf1.astype(mx), a1w_s[...], preferred_element_type=jnp.float32)
               + jnp.dot(vnorm.astype(mx), a1w_v[...], preferred_element_type=jnp.float32)
               + a1_b[...])
    a = jnp.dot(ah.astype(mx), a2_w[...],
                preferred_element_type=jnp.float32) + a2_b[...]            # [TI, 3F]
    a_vv, a_sv, a_ss = a[:, :F], a[:, F:F2], a[:, F2:]

    uv_dot = Uv[0] * Vv[0] + Uv[1] * Vv[1] + Uv[2] * Vv[2]                 # [TI, F]
    sf2 = sf1 + a_sv * uv_dot + a_ss

    # Reference forward re-adds the message deltas after the update step.
    sf_new = sf2 + dsf
    vf_new = vf1 + a_vv[None, :, :] * Uv + dvf

    sf_buf[nxt, pl.ds(row0, TI), :] = sf_new
    vf_buf[nxt, :, pl.ds(row0, TI), :] = vf_new

    # -------- Readout at the last layer (lane-dense padded hidden dim) --------
    @pl.when(l == L - 1)
    def _():
        hro = _silu(jnp.dot(sf_new.astype(mx), o1_w[...],
                            preferred_element_type=jnp.float32) + o1_b[...])
        out_ref[...] = jnp.sum(hro * o2_w[...], axis=1, keepdims=True) + o2_b[...]


# ----------------------------------------------------------------------------
# Plain-JAX glue: dense edge preprocessing (local_edges + RDF), dir folded into
# the RBF operand, cutoff weight + filter bias folded in as well.
# ----------------------------------------------------------------------------
def compute_edges(pos, graph_idx, cutoff, num_rbf, Kp):
    N = pos.shape[0]
    diff = pos[None, :, :] - pos[:, None, :]                  # diff[i, j] = pos_j - pos_i
    dist = jnp.sqrt(jnp.sum(diff * diff, axis=-1) + 1e-12)    # [N, N]
    same_graph = graph_idx[:, None] == graph_idx[None, :]
    not_self = jnp.logical_not(jnp.eye(N, dtype=bool))
    mask = same_graph & not_self & (dist < cutoff)

    safe_d = jnp.where(mask, dist, 1.0)
    dirs = (diff / safe_d[..., None]) * mask[..., None].astype(jnp.float32)   # [N, N, 3]

    n = jnp.arange(1, num_rbf + 1, dtype=jnp.float32)
    rbf = jnp.sin(n[None, None, :] * jnp.pi * safe_d[..., None] / cutoff) / safe_d[..., None]

    fcut = 0.5 * (jnp.cos(jnp.pi * dist / cutoff) + 1.0)
    w = jnp.where(mask, fcut, 0.0).astype(jnp.float32)        # [N, N]

    # (rbf*w | w | 0-pad) so the in-kernel matmul against [rbf_w ; rbf_b ; 0]
    # yields w * (rbf @ rbf_w + b); masked edges contribute exactly zero.
    rbf_aug = jnp.concatenate([rbf * w[..., None], w[..., None]], axis=-1)    # [N, N, R+1]
    rbf_aug = jnp.pad(rbf_aug, ((0, 0), (0, 0), (0, Kp - (num_rbf + 1))))
    e_sv = rbf_aug.reshape(N * N, Kp).astype(jnp.float32)

    # Fold the unit-direction component into the operand (dir term -> MXU).
    dir3 = jnp.transpose(dirs, (2, 0, 1)).reshape(3, N * N, 1).astype(jnp.float32)
    e_dir = dir3 * e_sv[None, :, :]                                           # [3, N*N, Kp]
    return e_sv, e_dir


def painn_forward(atoms, positions, graph_indexes, params, *, cutoff, num_rbf, tile_i=8):
    L, _, F = params['phi1_w'].shape
    Kp = params['wf_s'].shape[1]
    Hp = params['o1_w'].shape[-1]
    N = atoms.shape[0]
    TI = tile_i
    assert TI % 8 == 0, "receiver tile must be a multiple of 8 sublanes"
    Npad = ((N + TI - 1) // TI) * TI
    pad = Npad - N

    if pad:
        atoms_p = jnp.concatenate([atoms, jnp.zeros((pad,), atoms.dtype)])
        pos_p = jnp.concatenate([positions, jnp.zeros((pad, 3), positions.dtype)])
        # Distinct negative graph ids -> padded atoms form no edges at all.
        gidx_p = jnp.concatenate(
            [graph_indexes, -1 - jnp.arange(pad, dtype=graph_indexes.dtype)])
    else:
        atoms_p, pos_p, gidx_p = atoms, positions, graph_indexes

    sf0 = jnp.take(params['embedding'], atoms_p, axis=0)      # glue: embedding gather
    e_sv, e_dir = compute_edges(pos_p, gidx_p, cutoff, num_rbf, Kp)

    T = Npad // TI
    mx = MXU_DTYPE

    def per_layer(*last2):         # per-layer weight: [L, *last2], squeezed layer dim
        return pl.BlockSpec((None,) + last2, lambda l, t: (l, 0, 0))

    def whole(*shape):             # layer-invariant input, loaded once
        return pl.BlockSpec(shape, lambda l, t: (0, 0))

    in_specs = [
        whole(Npad, F),                                            # sf0
        pl.BlockSpec((TI * Npad, Kp), lambda l, t: (t, 0)),        # e_sv (i-tile)
        pl.BlockSpec((3, TI * Npad, Kp), lambda l, t: (0, t, 0)),  # e_dir (i-tile)
        per_layer(F, F),       # phi1_w
        per_layer(1, F),       # phi1_b
        per_layer(F, 3 * F),   # phi2_w
        per_layer(1, 3 * F),   # phi2_b
        per_layer(Kp, F),      # wf_s
        per_layer(Kp, F),      # wf_vv
        per_layer(Kp, F),      # wf_r
        per_layer(F, 2 * F),   # uv_w
        per_layer(F, F),       # a1w_s
        per_layer(F, F),       # a1w_v
        per_layer(1, F),       # a1_b
        per_layer(F, 3 * F),   # a2_w
        per_layer(1, 3 * F),   # a2_b
        whole(F, Hp),          # o1_w
        whole(1, Hp),          # o1_b
        whole(1, Hp),          # o2_w
        whole(1, 1),           # o2_b
    ]
    out_spec = pl.BlockSpec((TI, 1), lambda l, t: (t, 0))

    scratch = [
        pltpu.VMEM((2, Npad, F), jnp.float32),      # sf, double-buffered over layers
        pltpu.VMEM((2, 3, Npad, F), jnp.float32),   # vf, double-buffered over layers
        pltpu.VMEM((Npad, 3 * F), jnp.float32),     # phi(sf_j), recomputed per layer
        pltpu.VMEM((3, TI, F), jnp.float32),        # dvf accumulator (per tile)
    ]

    out = pl.pallas_call(
        painn_kernel,
        out_shape=jax.ShapeDtypeStruct((Npad, 1), jnp.float32),
        grid_spec=pltpu.PrefetchScalarGridSpec(
            num_scalar_prefetch=0,
            grid=(L, T),
            in_specs=in_specs,
            out_specs=out_spec,
            scratch_shapes=scratch),
        compiler_params=pltpu.CompilerParams(
            # layer axis is sequential; i-tile axis must also be sequential
            # because all tiles of layer l write the sf/vf scratch read by l+1.
            dimension_semantics=("arbitrary", "arbitrary"),
            vmem_limit_bytes=48 * 1024 * 1024),
    )(sf0, e_sv, e_dir,
      params['phi1_w'].astype(mx), params['phi1_b'],
      params['phi2_w'].astype(mx), params['phi2_b'],
      params['wf_s'], params['wf_vv'], params['wf_r'],         # filter mats kept f32
      params['uv_w'].astype(mx),
      params['a1w_s'].astype(mx), params['a1w_v'].astype(mx), params['a1_b'],
      params['a2_w'].astype(mx), params['a2_b'],
      params['o1_w'].astype(mx), params['o1_b'],
      params['o2_w'], params['o2_b'])
    return out[:N]


# ----------------------------------------------------------------------------
# Deterministic parameter initialization (shapes from PaiNN.__init__), with the
# message/update weights split per head, stacked over layers, and padded
# (RBF dim -> Kp, readout hidden -> Hp).
# ----------------------------------------------------------------------------
def init_params(seed, num_layers, F, R, num_unique_atoms, Kp=32, Hp=128):
    H = F // 2
    key = jax.random.PRNGKey(seed)
    keys = iter(jax.random.split(key, 16 * num_layers + 16))

    def dense(shape, fan_in):
        return jax.random.normal(next(keys), shape, dtype=jnp.float32) / jnp.sqrt(float(fan_in))

    def filt():
        # rows 0..R-1: filter weight; row R: bias slot (init 0); rest: zero pad.
        return jnp.pad(dense((R, F), R), ((0, Kp - R), (0, 0)))

    L = num_layers
    p = {'embedding': jax.random.normal(next(keys), (num_unique_atoms, F), dtype=jnp.float32)}
    p['phi1_w'] = jnp.stack([dense((F, F), F) for _ in range(L)])
    p['phi1_b'] = jnp.zeros((L, 1, F), jnp.float32)
    p['phi2_w'] = jnp.stack([dense((F, 3 * F), F) for _ in range(L)])
    p['phi2_b'] = jnp.zeros((L, 1, 3 * F), jnp.float32)
    p['wf_s'] = jnp.stack([filt() for _ in range(L)])
    p['wf_vv'] = jnp.stack([filt() for _ in range(L)])
    p['wf_r'] = jnp.stack([filt() for _ in range(L)])
    p['uv_w'] = jnp.stack([dense((F, 2 * F), F) for _ in range(L)])
    p['a1w_s'] = jnp.stack([dense((F, F), 2 * F) for _ in range(L)])   # acts on sf
    p['a1w_v'] = jnp.stack([dense((F, F), 2 * F) for _ in range(L)])   # acts on ||V v||
    p['a1_b'] = jnp.zeros((L, 1, F), jnp.float32)
    p['a2_w'] = jnp.stack([dense((F, 3 * F), F) for _ in range(L)])
    p['a2_b'] = jnp.zeros((L, 1, 3 * F), jnp.float32)
    p['o1_w'] = jnp.pad(dense((F, H), F), ((0, 0), (0, Hp - H)))       # lane-dense readout
    p['o1_b'] = jnp.zeros((1, Hp), jnp.float32)
    p['o2_w'] = jnp.pad(dense((1, H), H), ((0, 0), (0, Hp - H)))
    p['o2_b'] = jnp.zeros((1, 1), jnp.float32)
    return p


# ----------------------------------------------------------------------------
if __name__ == "__main__":
    N, F, R = 16, 128, 20         # 16 atoms, module-default 128 features, 20 RBFs
    NUM_LAYERS = 3
    NUM_UNIQUE = 100
    CUTOFF = 5.0

    key = jax.random.PRNGKey(0)
    k_atom, k_pos = jax.random.split(key)
    atoms = jax.random.randint(k_atom, (N,), 0, NUM_UNIQUE, dtype=jnp.int32)
    atom_positions = jax.random.uniform(k_pos, (N, 3), dtype=jnp.float32,
                                        minval=0.0, maxval=3.0)
    graph_indexes = jnp.repeat(jnp.arange(2, dtype=jnp.int32), N // 2)

    params = init_params(0, NUM_LAYERS, F, R, NUM_UNIQUE)

    fwd = jax.jit(functools.partial(painn_forward, cutoff=CUTOFF, num_rbf=R, tile_i=8))
    out = fwd(atoms, atom_positions, graph_indexes, params)
    out = jax.block_until_ready(out)

    assert out.shape == (N, 1), out.shape
    assert bool(jnp.all(jnp.isfinite(out)))
    print("KERNEL_OK")
</pallas_src>

<mosaic_0001>
module attributes {stable_mosaic.version = 11 : i64} {
  func.func @painn_kernel(%arg0: i32, %arg1: i32, %arg2: memref<16x128xf32, #tpu.memory_space<vmem>>, %arg3: memref<128x32xf32, #tpu.memory_space<vmem>>, %arg4: memref<3x128x32xf32, #tpu.memory_space<vmem>>, %arg5: memref<1x128x128xbf16, #tpu.memory_space<vmem>>, %arg6: memref<1x1x128xf32, #tpu.memory_space<vmem>>, %arg7: memref<1x128x384xbf16, #tpu.memory_space<vmem>>, %arg8: memref<1x1x384xf32, #tpu.memory_space<vmem>>, %arg9: memref<1x32x128xf32, #tpu.memory_space<vmem>>, %arg10: memref<1x32x128xf32, #tpu.memory_space<vmem>>, %arg11: memref<1x32x128xf32, #tpu.memory_space<vmem>>, %arg12: memref<1x128x256xbf16, #tpu.memory_space<vmem>>, %arg13: memref<1x128x128xbf16, #tpu.memory_space<vmem>>, %arg14: memref<1x128x128xbf16, #tpu.memory_space<vmem>>, %arg15: memref<1x1x128xf32, #tpu.memory_space<vmem>>, %arg16: memref<1x128x384xbf16, #tpu.memory_space<vmem>>, %arg17: memref<1x1x384xf32, #tpu.memory_space<vmem>>, %arg18: memref<128x128xbf16, #tpu.memory_space<vmem>>, %arg19: memref<1x128xf32, #tpu.memory_space<vmem>>, %arg20: memref<1x128xf32, #tpu.memory_space<vmem>>, %arg21: memref<1x1xf32, #tpu.memory_space<vmem>>, %arg22: memref<8x1xf32, #tpu.memory_space<vmem>>, %arg23: memref<2x16x128xf32, #tpu.memory_space<vmem>>, %arg24: memref<2x3x16x128xf32, #tpu.memory_space<vmem>>, %arg25: memref<16x384xf32, #tpu.memory_space<vmem>>, %arg26: memref<3x8x128xf32, #tpu.memory_space<vmem>>) attributes {dimension_semantics = [#tpu.dimension_semantics<arbitrary>, #tpu.dimension_semantics<arbitrary>], iteration_bounds = array<i64: 3, 2>, scalar_prefetch = 0 : i64, scratch_operands = 4 : i64, tpu.core_type = #tpu.core_type<tc>, window_params = [{pipeline_mode = #tpu.pipeline_mode<synchronous>, transform_indices = @transform_0, window_bounds = array<i64: 16, 128>}, {transform_indices = @transform_1, window_bounds = array<i64: 128, 32>}, {transform_indices = @transform_2, window_bounds = array<i64: 3, 128, 32>}, {transform_indices = @transform_3, window_bounds = array<i64: 1, 128, 128>}, {transform_indices = @transform_4, window_bounds = array<i64: 1, 1, 128>}, {transform_indices = @transform_5, window_bounds = array<i64: 1, 128, 384>}, {transform_indices = @transform_6, window_bounds = array<i64: 1, 1, 384>}, {transform_indices = @transform_7, window_bounds = array<i64: 1, 32, 128>}, {transform_indices = @transform_8, window_bounds = array<i64: 1, 32, 128>}, {transform_indices = @transform_9, window_bounds = array<i64: 1, 32, 128>}, {transform_indices = @transform_10, window_bounds = array<i64: 1, 128, 256>}, {transform_indices = @transform_11, window_bounds = array<i64: 1, 128, 128>}, {transform_indices = @transform_12, window_bounds = array<i64: 1, 128, 128>}, {transform_indices = @transform_13, window_bounds = array<i64: 1, 1, 128>}, {transform_indices = @transform_14, window_bounds = array<i64: 1, 128, 384>}, {transform_indices = @transform_15, window_bounds = array<i64: 1, 1, 384>}, {pipeline_mode = #tpu.pipeline_mode<synchronous>, transform_indices = @transform_16, window_bounds = array<i64: 128, 128>}, {pipeline_mode = #tpu.pipeline_mode<synchronous>, transform_indices = @transform_17, window_bounds = array<i64: 1, 128>}, {pipeline_mode = #tpu.pipeline_mode<synchronous>, transform_indices = @transform_18, window_bounds = array<i64: 1, 128>}, {pipeline_mode = #tpu.pipeline_mode<synchronous>, transform_indices = @transform_19, window_bounds = array<i64: 1, 1>}, {transform_indices = @transform_20, window_bounds = array<i64: 8, 1>}]} {
    %c2_i32 = arith.constant 2 : i32
    %c0_i32 = arith.constant 0 : i32
    %0 = arith.cmpi eq, %c2_i32, %c0_i32 : i32
    %c1_i32 = arith.constant 1 : i32
    %1 = arith.select %0, %c1_i32, %c2_i32 : i32
    %2 = arith.remsi %arg0, %1 : i32
    %c0_i32_0 = arith.constant 0 : i32
    %3 = arith.cmpi ne, %2, %c0_i32_0 : i32
    %c0_i32_1 = arith.constant 0 : i32
    %4 = arith.cmpi slt, %2, %c0_i32_1 : i32
    %c0_i32_2 = arith.constant 0 : i32
    %5 = arith.cmpi slt, %1, %c0_i32_2 : i32
    %6 = arith.xori %4, %5 : i1
    %7 = arith.andi %6, %3 : i1
    %8 = arith.addi %2, %1 : i32
    %9 = arith.select %7, %8, %2 : i32
    %c1_i32_3 = arith.constant 1 : i32
    %10 = arith.subi %c1_i32_3, %9 : i32
    %c8_i32 = arith.constant 8 : i32
    %11 = arith.muli %arg1, %c8_i32 : i32
    %12 = tpu.assume_multiple %11, 8 : i32
    %c0_i32_4 = arith.constant 0 : i32
    %13 = arith.cmpi eq, %arg0, %c0_i32_4 : i32
    %c0_i32_5 = arith.constant 0 : i32
    %14 = arith.cmpi eq, %arg1, %c0_i32_5 : i32
    %15 = arith.andi %13, %14 : i1
    %16 = arith.extui %15 : i1 to i32
    %c0_i32_6 = arith.constant 0 : i32
    %17 = arith.cmpi ne, %16, %c0_i32_6 : i32
    scf.if %17 {
      %c0_82 = arith.constant 0 : index
      %c0_83 = arith.constant 0 : index
      %184 = vector.load %arg2[%c0_82, %c0_83] : memref<16x128xf32, #tpu.memory_space<vmem>>, vector<16x128xf32>
      %c0_84 = arith.constant 0 : index
      %c0_85 = arith.constant 0 : index
      %c0_86 = arith.constant 0 : index
      %185 = vector.load %arg23[%c0_84, %c0_85, %c0_86] : memref<2x16x128xf32, #tpu.memory_space<vmem>>, vector<1x16x128xf32>
      %186 = vector.shape_cast %185 : vector<1x16x128xf32> to vector<16x128xf32>
      %187 = vector.shape_cast %184 : vector<16x128xf32> to vector<1x16x128xf32>
      tpu.vector_store %arg23[%c0_84, %c0_85, %c0_86], %187 {strides = array<i32>} : memref<2x16x128xf32, #tpu.memory_space<vmem>>, vector<1x16x128xf32>,
      %cst_87 = arith.constant 0.000000e+00 : f32
      %188 = vector.broadcast %cst_87 : f32 to vector<3x16x128xf32>
      %c0_88 = arith.constant 0 : index
      %c0_89 = arith.constant 0 : index
      %c0_90 = arith.constant 0 : index
      %c0_91 = arith.constant 0 : index
      %189 = vector.load %arg24[%c0_88, %c0_89, %c0_90, %c0_91] : memref<2x3x16x128xf32, #tpu.memory_space<vmem>>, vector<1x3x16x128xf32>
      %190 = vector.shape_cast %189 : vector<1x3x16x128xf32> to vector<3x16x128xf32>
      %191 = vector.shape_cast %188 : vector<3x16x128xf32> to vector<1x3x16x128xf32>
      tpu.vector_store %arg24[%c0_88, %c0_89, %c0_90, %c0_91], %191 {strides = array<i32>} : memref<2x3x16x128xf32, #tpu.memory_space<vmem>>, vector<1x3x16x128xf32>,
    } else {
    }
    %c0_i32_7 = arith.constant 0 : i32
    %18 = arith.cmpi eq, %arg1, %c0_i32_7 : i32
    %19 = arith.extui %18 : i1 to i32
    %c0_i32_8 = arith.constant 0 : i32
    %20 = arith.cmpi ne, %19, %c0_i32_8 : i32
    scf.if %20 {
      %184 = arith.index_cast %9 : i32 to index
      %c0_82 = arith.constant 0 : index
      %c0_83 = arith.constant 0 : index
      %185 = vector.load %arg23[%184, %c0_82, %c0_83] : memref<2x16x128xf32, #tpu.memory_space<vmem>>, vector<1x16x128xf32>
      %186 = vector.shape_cast %185 : vector<1x16x128xf32> to vector<16x128xf32>
      %187 = arith.truncf %186 : vector<16x128xf32> to vector<16x128xbf16>
      %c0_84 = arith.constant 0 : index
      %c0_85 = arith.constant 0 : index
      %c0_86 = arith.constant 0 : index
      %188 = vector.load %arg5[%c0_84, %c0_85, %c0_86] : memref<1x128x128xbf16, #tpu.memory_space<vmem>>, vector<1x128x128xbf16>
      %189 = vector.shape_cast %188 : vector<1x128x128xbf16> to vector<128x128xbf16>
      %cst_87 = arith.constant dense<0.000000e+00> : vector<16x128xf32>
      %190 = tpu.matmul %187, %189, %cst_87 {dimension_numbers = #tpu.dot_dimension_numbers<[1], [0], [0], [1], [0, 0, 1, 1], [], []>} : vector<16x128xbf16>, vector<128x128xbf16>, vector<16x128xf32> -> vector<16x128xf32>
      %c0_88 = arith.constant 0 : index
      %c0_89 = arith.constant 0 : index
      %c0_90 = arith.constant 0 : index
      %191 = vector.load %arg6[%c0_88, %c0_89, %c0_90] : memref<1x1x128xf32, #tpu.memory_space<vmem>>, vector<1x1x128xf32>
      %192 = vector.shape_cast %191 : vector<1x1x128xf32> to vector<1x128xf32>
      %193 = vector.broadcast %192 : vector<1x128xf32> to vector<16x128xf32>
      %194 = arith.addf %190, %193 : vector<16x128xf32>
      %195 = arith.negf %194 : vector<16x128xf32>
      %196 = math.exp %195 : vector<16x128xf32>
      %cst_91 = arith.constant 1.000000e+00 : f32
      %197 = vector.broadcast %cst_91 : f32 to vector<16x128xf32>
      %198 = arith.addf %197, %196 : vector<16x128xf32>
      %199 = arith.divf %197, %198 : vector<16x128xf32>
      %200 = arith.mulf %194, %199 : vector<16x128xf32>
      %201 = arith.truncf %200 : vector<16x128xf32> to vector<16x128xbf16>
      %c0_92 = arith.constant 0 : index
      %c0_93 = arith.constant 0 : index
      %c0_94 = arith.constant 0 : index
      %202 = vector.load %arg7[%c0_92, %c0_93, %c0_94] : memref<1x128x384xbf16, #tpu.memory_space<vmem>>, vector<1x128x384xbf16>
      %203 = vector.shape_cast %202 : vector<1x128x384xbf16> to vector<128x384xbf16>
      %cst_95 = arith.constant dense<0.000000e+00> : vector<16x384xf32>
      %204 = tpu.matmul %201, %203, %cst_95 {dimension_numbers = #tpu.dot_dimension_numbers<[1], [0], [0], [1], [0, 0, 1, 1], [], []>} : vector<16x128xbf16>, vector<128x384xbf16>, vector<16x384xf32> -> vector<16x384xf32>
      %c0_96 = arith.constant 0 : index
      %c0_97 = arith.constant 0 : index
      %c0_98 = arith.constant 0 : index
      %205 = vector.load %arg8[%c0_96, %c0_97, %c0_98] : memref<1x1x384xf32, #tpu.memory_space<vmem>>, vector<1x1x384xf32>
      %206 = vector.shape_cast %205 : vector<1x1x384xf32> to vector<1x384xf32>
      %207 = vector.broadcast %206 : vector<1x384xf32> to vector<16x384xf32>
      %208 = arith.addf %204, %207 : vector<16x384xf32>
      %c0_99 = arith.constant 0 : index
      %c0_100 = arith.constant 0 : index
      %209 = vector.load %arg25[%c0_99, %c0_100] : memref<16x384xf32, #tpu.memory_space<vmem>>, vector<16x384xf32>
      tpu.vector_store %arg25[%c0_99, %c0_100], %208 {strides = array<i32>} : memref<16x384xf32, #tpu.memory_space<vmem>>, vector<16x384xf32>,
    } else {
    }
    %c0 = arith.constant 0 : index
    %c0_9 = arith.constant 0 : index
    %21 = vector.load %arg25[%c0, %c0_9] : memref<16x384xf32, #tpu.memory_space<vmem>>, vector<16x384xf32>
    %22 = vector.extract_strided_slice %21 {offsets = [0, 0], sizes = [16, 128], strides = [1, 1]} : vector<16x384xf32> to vector<16x128xf32>
    %23 = vector.extract_strided_slice %21 {offsets = [0, 128], sizes = [16, 128], strides = [1, 1]} : vector<16x384xf32> to vector<16x128xf32>
    %24 = vector.extract_strided_slice %21 {offsets = [0, 256], sizes = [16, 128], strides = [1, 1]} : vector<16x384xf32> to vector<16x128xf32>
    %c0_10 = arith.constant 0 : index
    %c0_11 = arith.constant 0 : index
    %25 = vector.load %arg3[%c0_10, %c0_11] : memref<128x32xf32, #tpu.memory_space<vmem>>, vector<128x32xf32>
    %c0_12 = arith.constant 0 : index
    %c0_13 = arith.constant 0 : index
    %c0_14 = arith.constant 0 : index
    %26 = vector.load %arg9[%c0_12, %c0_13, %c0_14] : memref<1x32x128xf32, #tpu.memory_space<vmem>>, vector<1x32x128xf32>
    %27 = vector.shape_cast %26 : vector<1x32x128xf32> to vector<32x128xf32>
    %cst = arith.constant dense<0.000000e+00> : vector<128x128xf32>
    %28 = tpu.matmul %25, %27, %cst {dimension_numbers = #tpu.dot_dimension_numbers<[1], [0], [0], [1], [0, 0, 1, 1], [], []>} : vector<128x32xf32>, vector<32x128xf32>, vector<128x128xf32> -> vector<128x128xf32>
    %29 = vector.shape_cast %28 : vector<128x128xf32> to vector<8x16x128xf32>
    %c0_15 = arith.constant 0 : index
    %c0_16 = arith.constant 0 : index
    %c0_17 = arith.constant 0 : index
    %30 = vector.load %arg10[%c0_15, %c0_16, %c0_17] : memref<1x32x128xf32, #tpu.memory_space<vmem>>, vector<1x32x128xf32>
    %31 = vector.shape_cast %30 : vector<1x32x128xf32> to vector<32x128xf32>
    %cst_18 = arith.constant dense<0.000000e+00> : vector<128x128xf32>
    %32 = tpu.matmul %25, %31, %cst_18 {dimension_numbers = #tpu.dot_dimension_numbers<[1], [0], [0], [1], [0, 0, 1, 1], [], []>} : vector<128x32xf32>, vector<32x128xf32>, vector<128x128xf32> -> vector<128x128xf32>
    %33 = vector.shape_cast %32 : vector<128x128xf32> to vector<8x16x128xf32>
    %34 = vector.shape_cast %22 : vector<16x128xf32> to vector<1x16x128xf32>
    %35 = vector.broadcast %34 : vector<1x16x128xf32> to vector<8x16x128xf32>
    %36 = arith.mulf %29, %35 : vector<8x16x128xf32>
    %cst_19 = arith.constant dense<0.000000e+00> : vector<8x128xf32>
    %37 = vector.multi_reduction <add>, %36, %cst_19 [1] : vector<8x16x128xf32> to vector<8x128xf32>
    %c0_20 = arith.constant 0 : index
    %c0_21 = arith.constant 0 : index
    %c0_22 = arith.constant 0 : index
    %38 = vector.load %arg11[%c0_20, %c0_21, %c0_22] : memref<1x32x128xf32, #tpu.memory_space<vmem>>, vector<1x32x128xf32>
    %39 = vector.shape_cast %38 : vector<1x32x128xf32> to vector<32x128xf32>
    %c0_23 = arith.constant 0 : index
    %c0_24 = arith.constant 0 : index
    %c0_25 = arith.constant 0 : index
    %40 = vector.load %arg4[%c0_23, %c0_24, %c0_25] : memref<3x128x32xf32, #tpu.memory_space<vmem>>, vector<1x128x32xf32>
    %41 = vector.shape_cast %40 : vector<1x128x32xf32> to vector<128x32xf32>
    %cst_26 = arith.constant dense<0.000000e+00> : vector<128x128xf32>
    %42 = tpu.matmul %41, %39, %cst_26 {dimension_numbers = #tpu.dot_dimension_numbers<[1], [0], [0], [1], [0, 0, 1, 1], [], []>} : vector<128x32xf32>, vector<32x128xf32>, vector<128x128xf32> -> vector<128x128xf32>
    %43 = vector.shape_cast %42 : vector<128x128xf32> to vector<8x16x128xf32>
    %44 = vector.shape_cast %24 : vector<16x128xf32> to vector<1x16x128xf32>
    %45 = vector.broadcast %44 : vector<1x16x128xf32> to vector<8x16x128xf32>
    %46 = arith.mulf %43, %45 : vector<8x16x128xf32>
    %cst_27 = arith.constant dense<0.000000e+00> : vector<8x128xf32>
    %47 = vector.multi_reduction <add>, %46, %cst_27 [1] : vector<8x16x128xf32> to vector<8x128xf32>
    %c0_28 = arith.constant 0 : index
    %c0_29 = arith.constant 0 : index
    %c0_30 = arith.constant 0 : index
    %48 = vector.load %arg26[%c0_28, %c0_29, %c0_30] : memref<3x8x128xf32, #tpu.memory_space<vmem>>, vector<1x8x128xf32>
    %49 = vector.shape_cast %48 : vector<1x8x128xf32> to vector<8x128xf32>
    %50 = vector.shape_cast %47 : vector<8x128xf32> to vector<1x8x128xf32>
    tpu.vector_store %arg26[%c0_28, %c0_29, %c0_30], %50 {strides = array<i32>} : memref<3x8x128xf32, #tpu.memory_space<vmem>>, vector<1x8x128xf32>,
    %c1 = arith.constant 1 : index
    %c0_31 = arith.constant 0 : index
    %c0_32 = arith.constant 0 : index
    %51 = vector.load %arg4[%c1, %c0_31, %c0_32] : memref<3x128x32xf32, #tpu.memory_space<vmem>>, vector<1x128x32xf32>
    %52 = vector.shape_cast %51 : vector<1x128x32xf32> to vector<128x32xf32>
    %cst_33 = arith.constant dense<0.000000e+00> : vector<128x128xf32>
    %53 = tpu.matmul %52, %39, %cst_33 {dimension_numbers = #tpu.dot_dimension_numbers<[1], [0], [0], [1], [0, 0, 1, 1], [], []>} : vector<128x32xf32>, vector<32x128xf32>, vector<128x128xf32> -> vector<128x128xf32>
    %54 = vector.shape_cast %53 : vector<128x128xf32> to vector<8x16x128xf32>
    %55 = vector.shape_cast %24 : vector<16x128xf32> to vector<1x16x128xf32>
    %56 = vector.broadcast %55 : vector<1x16x128xf32> to vector<8x16x128xf32>
    %57 = arith.mulf %54, %56 : vector<8x16x128xf32>
    %cst_34 = arith.constant dense<0.000000e+00> : vector<8x128xf32>
    %58 = vector.multi_reduction <add>, %57, %cst_34 [1] : vector<8x16x128xf32> to vector<8x128xf32>
    %c1_35 = arith.constant 1 : index
    %c0_36 = arith.constant 0 : index
    %c0_37 = arith.constant 0 : index
    %59 = vector.load %arg26[%c1_35, %c0_36, %c0_37] : memref<3x8x128xf32, #tpu.memory_space<vmem>>, vector<1x8x128xf32>
    %60 = vector.shape_cast %59 : vector<1x8x128xf32> to vector<8x128xf32>
    %61 = vector.shape_cast %58 : vector<8x128xf32> to vector<1x8x128xf32>
    tpu.vector_store %arg26[%c1_35, %c0_36, %c0_37], %61 {strides = array<i32>} : memref<3x8x128xf32, #tpu.memory_space<vmem>>, vector<1x8x128xf32>,
    %c2 = arith.constant 2 : index
    %c0_38 = arith.constant 0 : index
    %c0_39 = arith.constant 0 : index
    %62 = vector.load %arg4[%c2, %c0_38, %c0_39] : memref<3x128x32xf32, #tpu.memory_space<vmem>>, vector<1x128x32xf32>
    %63 = vector.shape_cast %62 : vector<1x128x32xf32> to vector<128x32xf32>
    %cst_40 = arith.constant dense<0.000000e+00> : vector<128x128xf32>
    %64 = tpu.matmul %63, %39, %cst_40 {dimension_numbers = #tpu.dot_dimension_numbers<[1], [0], [0], [1], [0, 0, 1, 1], [], []>} : vector<128x32xf32>, vector<32x128xf32>, vector<128x128xf32> -> vector<128x128xf32>
    %65 = vector.shape_cast %64 : vector<128x128xf32> to vector<8x16x128xf32>
    %66 = vector.shape_cast %24 : vector<16x128xf32> to vector<1x16x128xf32>
    %67 = vector.broadcast %66 : vector<1x16x128xf32> to vector<8x16x128xf32>
    %68 = arith.mulf %65, %67 : vector<8x16x128xf32>
    %cst_41 = arith.constant dense<0.000000e+00> : vector<8x128xf32>
    %69 = vector.multi_reduction <add>, %68, %cst_41 [1] : vector<8x16x128xf32> to vector<8x128xf32>
    %c2_42 = arith.constant 2 : index
    %c0_43 = arith.constant 0 : index
    %c0_44 = arith.constant 0 : index
    %70 = vector.load %arg26[%c2_42, %c0_43, %c0_44] : memref<3x8x128xf32, #tpu.memory_space<vmem>>, vector<1x8x128xf32>
    %71 = vector.shape_cast %70 : vector<1x8x128xf32> to vector<8x128xf32>
    %72 = vector.shape_cast %69 : vector<8x128xf32> to vector<1x8x128xf32>
    tpu.vector_store %arg26[%c2_42, %c0_43, %c0_44], %72 {strides = array<i32>} : memref<3x8x128xf32, #tpu.memory_space<vmem>>, vector<1x8x128xf32>,
    %c0_i32_45 = arith.constant 0 : i32
    %73 = arith.cmpi sgt, %arg0, %c0_i32_45 : i32
    %74 = arith.extui %73 : i1 to i32
    %c0_i32_46 = arith.constant 0 : i32
    %75 = arith.cmpi ne, %74, %c0_i32_46 : i32
    scf.if %75 {
      %184 = vector.shape_cast %23 : vector<16x128xf32> to vector<1x16x128xf32>
      %185 = vector.broadcast %184 : vector<1x16x128xf32> to vector<8x16x128xf32>
      %186 = arith.mulf %33, %185 : vector<8x16x128xf32>
      %187 = arith.index_cast %9 : i32 to index
      %c0_82 = arith.constant 0 : index
      %c0_83 = arith.constant 0 : index
      %c0_84 = arith.constant 0 : index
      %188 = vector.load %arg24[%187, %c0_82, %c0_83, %c0_84] : memref<2x3x16x128xf32, #tpu.memory_space<vmem>>, vector<1x3x16x128xf32>
      %189 = vector.shape_cast %188 : vector<1x3x16x128xf32> to vector<3x16x128xf32>
      %c0_85 = arith.constant 0 : index
      %c0_86 = arith.constant 0 : index
      %c0_87 = arith.constant 0 : index
      %190 = vector.load %arg26[%c0_85, %c0_86, %c0_87] : memref<3x8x128xf32, #tpu.memory_space<vmem>>, vector<1x8x128xf32>
      %191 = vector.shape_cast %190 : vector<1x8x128xf32> to vector<8x128xf32>
      %192 = vector.extract_strided_slice %189 {offsets = [0, 0, 0], sizes = [1, 16, 128], strides = [1, 1, 1]} : vector<3x16x128xf32> to vector<1x16x128xf32>
      %193 = vector.shape_cast %192 : vector<1x16x128xf32> to vector<16x128xf32>
      %194 = vector.shape_cast %193 : vector<16x128xf32> to vector<1x16x128xf32>
      %195 = vector.broadcast %194 : vector<1x16x128xf32> to vector<8x16x128xf32>
      %196 = arith.mulf %186, %195 : vector<8x16x128xf32>
      %cst_88 = arith.constant dense<0.000000e+00> : vector<8x128xf32>
      %197 = vector.multi_reduction <add>, %196, %cst_88 [1] : vector<8x16x128xf32> to vector<8x128xf32>
      %198 = arith.addf %191, %197 : vector<8x128xf32>
      %c0_89 = arith.constant 0 : index
      %c0_90 = arith.constant 0 : index
      %c0_91 = arith.constant 0 : index
      %199 = vector.load %arg26[%c0_89, %c0_90, %c0_91] : memref<3x8x128xf32, #tpu.memory_space<vmem>>, vector<1x8x128xf32>
      %200 = vector.shape_cast %199 : vector<1x8x128xf32> to vector<8x128xf32>
      %201 = vector.shape_cast %198 : vector<8x128xf32> to vector<1x8x128xf32>
      tpu.vector_store %arg26[%c0_89, %c0_90, %c0_91], %201 {strides = array<i32>} : memref<3x8x128xf32, #tpu.memory_space<vmem>>, vector<1x8x128xf32>,
      %c1_92 = arith.constant 1 : index
      %c0_93 = arith.constant 0 : index
      %c0_94 = arith.constant 0 : index
      %202 = vector.load %arg26[%c1_92, %c0_93, %c0_94] : memref<3x8x128xf32, #tpu.memory_space<vmem>>, vector<1x8x128xf32>
      %203 = vector.shape_cast %202 : vector<1x8x128xf32> to vector<8x128xf32>
      %204 = vector.extract_strided_slice %189 {offsets = [1, 0, 0], sizes = [1, 16, 128], strides = [1, 1, 1]} : vector<3x16x128xf32> to vector<1x16x128xf32>
      %205 = vector.shape_cast %204 : vector<1x16x128xf32> to vector<16x128xf32>
      %206 = vector.shape_cast %205 : vector<16x128xf32> to vector<1x16x128xf32>
      %207 = vector.broadcast %206 : vector<1x16x128xf32> to vector<8x16x128xf32>
      %208 = arith.mulf %186, %207 : vector<8x16x128xf32>
      %cst_95 = arith.constant dense<0.000000e+00> : vector<8x128xf32>
      %209 = vector.multi_reduction <add>, %208, %cst_95 [1] : vector<8x16x128xf32> to vector<8x128xf32>
      %210 = arith.addf %203, %209 : vector<8x128xf32>
      %c1_96 = arith.constant 1 : index
      %c0_97 = arith.constant 0 : index
      %c0_98 = arith.constant 0 : index
      %211 = vector.load %arg26[%c1_96, %c0_97, %c0_98] : memref<3x8x128xf32, #tpu.memory_space<vmem>>, vector<1x8x128xf32>
      %212 = vector.shape_cast %211 : vector<1x8x128xf32> to vector<8x128xf32>
      %213 = vector.shape_cast %210 : vector<8x128xf32> to vector<1x8x128xf32>
      tpu.vector_store %arg26[%c1_96, %c0_97, %c0_98], %213 {strides = array<i32>} : memref<3x8x128xf32, #tpu.memory_space<vmem>>, vector<1x8x128xf32>,
      %c2_99 = arith.constant 2 : index
      %c0_100 = arith.constant 0 : index
      %c0_101 = arith.constant 0 : index
      %214 = vector.load %arg26[%c2_99, %c0_100, %c0_101] : memref<3x8x128xf32, #tpu.memory_space<vmem>>, vector<1x8x128xf32>
      %215 = vector.shape_cast %214 : vector<1x8x128xf32> to vector<8x128xf32>
      %216 = vector.extract_strided_slice %189 {offsets = [2, 0, 0], sizes = [1, 16, 128], strides = [1, 1, 1]} : vector<3x16x128xf32> to vector<1x16x128xf32>
      %217 = vector.shape_cast %216 : vector<1x16x128xf32> to vector<16x128xf32>
      %218 = vector.shape_cast %217 : vector<16x128xf32> to vector<1x16x128xf32>
      %219 = vector.broadcast %218 : vector<1x16x128xf32> to vector<8x16x128xf32>
      %220 = arith.mulf %186, %219 : vector<8x16x128xf32>
      %cst_102 = arith.constant dense<0.000000e+00> : vector<8x128xf32>
      %221 = vector.multi_reduction <add>, %220, %cst_102 [1] : vector<8x16x128xf32> to vector<8x128xf32>
      %222 = arith.addf %215, %221 : vector<8x128xf32>
      %c2_103 = arith.constant 2 : index
      %c0_104 = arith.constant 0 : index
      %c0_105 = arith.constant 0 : index
      %223 = vector.load %arg26[%c2_103, %c0_104, %c0_105] : memref<3x8x128xf32, #tpu.memory_space<vmem>>, vector<1x8x128xf32>
      %224 = vector.shape_cast %223 : vector<1x8x128xf32> to vector<8x128xf32>
      %225 = vector.shape_cast %222 : vector<8x128xf32> to vector<1x8x128xf32>
      tpu.vector_store %arg26[%c2_103, %c0_104, %c0_105], %225 {strides = array<i32>} : memref<3x8x128xf32, #tpu.memory_space<vmem>>, vector<1x8x128xf32>,
    } else {
    }
    %c0_47 = arith.constant 0 : index
    %c0_48 = arith.constant 0 : index
    %c0_49 = arith.constant 0 : index
    %76 = vector.load %arg26[%c0_47, %c0_48, %c0_49] : memref<3x8x128xf32, #tpu.memory_space<vmem>>, vector<3x8x128xf32>
    %77 = arith.index_cast %9 : i32 to index
    %78 = arith.index_cast %12 : i32 to index
    %c0_50 = arith.constant 0 : index
    %79 = vector.load %arg23[%77, %78, %c0_50] : memref<2x16x128xf32, #tpu.memory_space<vmem>>, vector<1x8x128xf32>
    %80 = vector.shape_cast %79 : vector<1x8x128xf32> to vector<8x128xf32>
    %81 = arith.index_cast %9 : i32 to index
    %c0_51 = arith.constant 0 : index
    %82 = arith.index_cast %12 : i32 to index
    %c0_52 = arith.constant 0 : index
    %83 = vector.load %arg24[%81, %c0_51, %82, %c0_52] : memref<2x3x16x128xf32, #tpu.memory_space<vmem>>, vector<1x3x8x128xf32>
    %84 = vector.shape_cast %83 : vector<1x3x8x128xf32> to vector<3x8x128xf32>
    %85 = arith.addf %80, %37 : vector<8x128xf32>
    %86 = arith.addf %84, %76 : vector<3x8x128xf32>
    %87 = vector.shape_cast %86 : vector<3x8x128xf32> to vector<24x128xf32>
    %88 = arith.truncf %87 : vector<24x128xf32> to vector<24x128xbf16>
    %c0_53 = arith.constant 0 : index
    %c0_54 = arith.constant 0 : index
    %c0_55 = arith.constant 0 : index
    %89 = vector.load %arg12[%c0_53, %c0_54, %c0_55] : memref<1x128x256xbf16, #tpu.memory_space<vmem>>, vector<1x128x256xbf16>
    %90 = vector.shape_cast %89 : vector<1x128x256xbf16> to vector<128x256xbf16>
    %cst_56 = arith.constant dense<0.000000e+00> : vector<24x256xf32>
    %91 = tpu.matmul %88, %90, %cst_56 {dimension_numbers = #tpu.dot_dimension_numbers<[1], [0], [0], [1], [0, 0, 1, 1], [], []>} : vector<24x128xbf16>, vector<128x256xbf16>, vector<24x256xf32> -> vector<24x256xf32>
    %92 = vector.shape_cast %91 : vector<24x256xf32> to vector<3x8x256xf32>
    %93 = vector.extract_strided_slice %92 {offsets = [0, 0, 0], sizes = [3, 8, 128], strides = [1, 1, 1]} : vector<3x8x256xf32> to vector<3x8x128xf32>
    %94 = vector.extract_strided_slice %92 {offsets = [0, 0, 128], sizes = [3, 8, 128], strides = [1, 1, 1]} : vector<3x8x256xf32> to vector<3x8x128xf32>
    %95 = vector.extract_strided_slice %94 {offsets = [0, 0, 0], sizes = [1, 8, 128], strides = [1, 1, 1]} : vector<3x8x128xf32> to vector<1x8x128xf32>
    %96 = vector.shape_cast %95 : vector<1x8x128xf32> to vector<8x128xf32>
    %97 = vector.extract_strided_slice %94 {offsets = [0, 0, 0], sizes = [1, 8, 128], strides = [1, 1, 1]} : vector<3x8x128xf32> to vector<1x8x128xf32>
    %98 = vector.shape_cast %97 : vector<1x8x128xf32> to vector<8x128xf32>
    %99 = arith.mulf %96, %98 : vector<8x128xf32>
    %100 = vector.extract_strided_slice %94 {offsets = [1, 0, 0], sizes = [1, 8, 128], strides = [1, 1, 1]} : vector<3x8x128xf32> to vector<1x8x128xf32>
    %101 = vector.shape_cast %100 : vector<1x8x128xf32> to vector<8x128xf32>
    %102 = vector.extract_strided_slice %94 {offsets = [1, 0, 0], sizes = [1, 8, 128], strides = [1, 1, 1]} : vector<3x8x128xf32> to vector<1x8x128xf32>
    %103 = vector.shape_cast %102 : vector<1x8x128xf32> to vector<8x128xf32>
    %104 = arith.mulf %101, %103 : vector<8x128xf32>
    %105 = arith.addf %99, %104 : vector<8x128xf32>
    %106 = vector.extract_strided_slice %94 {offsets = [2, 0, 0], sizes = [1, 8, 128], strides = [1, 1, 1]} : vector<3x8x128xf32> to vector<1x8x128xf32>
    %107 = vector.shape_cast %106 : vector<1x8x128xf32> to vector<8x128xf32>
    %108 = vector.extract_strided_slice %94 {offsets = [2, 0, 0], sizes = [1, 8, 128], strides = [1, 1, 1]} : vector<3x8x128xf32> to vector<1x8x128xf32>
    %109 = vector.shape_cast %108 : vector<1x8x128xf32> to vector<8x128xf32>
    %110 = arith.mulf %107, %109 : vector<8x128xf32>
    %111 = arith.addf %105, %110 : vector<8x128xf32>
    %cst_57 = arith.constant 9.99999993E-9 : f32
    %112 = vector.broadcast %cst_57 : f32 to vector<8x128xf32>
    %113 = arith.addf %111, %112 : vector<8x128xf32>
    %114 = math.sqrt %113 : vector<8x128xf32>
    %115 = arith.truncf %85 : vector<8x128xf32> to vector<8x128xbf16>
    %c0_58 = arith.constant 0 : index
    %c0_59 = arith.constant 0 : index
    %c0_60 = arith.constant 0 : index
    %116 = vector.load %arg13[%c0_58, %c0_59, %c0_60] : memref<1x128x128xbf16, #tpu.memory_space<vmem>>, vector<1x128x128xbf16>
    %117 = vector.shape_cast %116 : vector<1x128x128xbf16> to vector<128x128xbf16>
    %cst_61 = arith.constant dense<0.000000e+00> : vector<8x128xf32>
    %118 = tpu.matmul %115, %117, %cst_61 {dimension_numbers = #tpu.dot_dimension_numbers<[1], [0], [0], [1], [0, 0, 1, 1], [], []>} : vector<8x128xbf16>, vector<128x128xbf16>, vector<8x128xf32> -> vector<8x128xf32>
    %119 = arith.truncf %114 : vector<8x128xf32> to vector<8x128xbf16>
    %c0_62 = arith.constant 0 : index
    %c0_63 = arith.constant 0 : index
    %c0_64 = arith.constant 0 : index
    %120 = vector.load %arg14[%c0_62, %c0_63, %c0_64] : memref<1x128x128xbf16, #tpu.memory_space<vmem>>, vector<1x128x128xbf16>
    %121 = vector.shape_cast %120 : vector<1x128x128xbf16> to vector<128x128xbf16>
    %cst_65 = arith.constant dense<0.000000e+00> : vector<8x128xf32>
    %122 = tpu.matmul %119, %121, %cst_65 {dimension_numbers = #tpu.dot_dimension_numbers<[1], [0], [0], [1], [0, 0, 1, 1], [], []>} : vector<8x128xbf16>, vector<128x128xbf16>, vector<8x128xf32> -> vector<8x128xf32>
    %123 = arith.addf %118, %122 : vector<8x128xf32>
    %c0_66 = arith.constant 0 : index
    %c0_67 = arith.constant 0 : index
    %c0_68 = arith.constant 0 : index
    %124 = vector.load %arg15[%c0_66, %c0_67, %c0_68] : memref<1x1x128xf32, #tpu.memory_space<vmem>>, vector<1x1x128xf32>
    %125 = vector.shape_cast %124 : vector<1x1x128xf32> to vector<1x128xf32>
    %126 = vector.broadcast %125 : vector<1x128xf32> to vector<8x128xf32>
    %127 = arith.addf %123, %126 : vector<8x128xf32>
    %128 = arith.negf %127 : vector<8x128xf32>
    %129 = math.exp %128 : vector<8x128xf32>
    %cst_69 = arith.constant 1.000000e+00 : f32
    %130 = vector.broadcast %cst_69 : f32 to vector<8x128xf32>
    %131 = arith.addf %130, %129 : vector<8x128xf32>
    %132 = arith.divf %130, %131 : vector<8x128xf32>
    %133 = arith.mulf %127, %132 : vector<8x128xf32>
    %134 = arith.truncf %133 : vector<8x128xf32> to vector<8x128xbf16>
    %c0_70 = arith.constant 0 : index
    %c0_71 = arith.constant 0 : index
    %c0_72 = arith.constant 0 : index
    %135 = vector.load %arg16[%c0_70, %c0_71, %c0_72] : memref<1x128x384xbf16, #tpu.memory_space<vmem>>, vector<1x128x384xbf16>
    %136 = vector.shape_cast %135 : vector<1x128x384xbf16> to vector<128x384xbf16>
    %cst_73 = arith.constant dense<0.000000e+00> : vector<8x384xf32>
    %137 = tpu.matmul %134, %136, %cst_73 {dimension_numbers = #tpu.dot_dimension_numbers<[1], [0], [0], [1], [0, 0, 1, 1], [], []>} : vector<8x128xbf16>, vector<128x384xbf16>, vector<8x384xf32> -> vector<8x384xf32>
    %c0_74 = arith.constant 0 : index
    %c0_75 = arith.constant 0 : index
    %c0_76 = arith.constant 0 : index
    %138 = vector.load %arg17[%c0_74, %c0_75, %c0_76] : memref<1x1x384xf32, #tpu.memory_space<vmem>>, vector<1x1x384xf32>
    %139 = vector.shape_cast %138 : vector<1x1x384xf32> to vector<1x384xf32>
    %140 = vector.broadcast %139 : vector<1x384xf32> to vector<8x384xf32>
    %141 = arith.addf %137, %140 : vector<8x384xf32>
    %142 = vector.extract_strided_slice %141 {offsets = [0, 0], sizes = [8, 128], strides = [1, 1]} : vector<8x384xf32> to vector<8x128xf32>
    %143 = vector.extract_strided_slice %141 {offsets = [0, 128], sizes = [8, 128], strides = [1, 1]} : vector<8x384xf32> to vector<8x128xf32>
    %144 = vector.extract_strided_slice %141 {offsets = [0, 256], sizes = [8, 128], strides = [1, 1]} : vector<8x384xf32> to vector<8x128xf32>
    %145 = vector.extract_strided_slice %93 {offsets = [0, 0, 0], sizes = [1, 8, 128], strides = [1, 1, 1]} : vector<3x8x128xf32> to vector<1x8x128xf32>
    %146 = vector.shape_cast %145 : vector<1x8x128xf32> to vector<8x128xf32>
    %147 = vector.extract_strided_slice %94 {offsets = [0, 0, 0], sizes = [1, 8, 128], strides = [1, 1, 1]} : vector<3x8x128xf32> to vector<1x8x128xf32>
    %148 = vector.shape_cast %147 : vector<1x8x128xf32> to vector<8x128xf32>
    %149 = arith.mulf %146, %148 : vector<8x128xf32>
    %150 = vector.extract_strided_slice %93 {offsets = [1, 0, 0], sizes = [1, 8, 128], strides = [1, 1, 1]} : vector<3x8x128xf32> to vector<1x8x128xf32>
    %151 = vector.shape_cast %150 : vector<1x8x128xf32> to vector<8x128xf32>
    %152 = vector.extract_strided_slice %94 {offsets = [1, 0, 0], sizes = [1, 8, 128], strides = [1, 1, 1]} : vector<3x8x128xf32> to vector<1x8x128xf32>
    %153 = vector.shape_cast %152 : vector<1x8x128xf32> to vector<8x128xf32>
    %154 = arith.mulf %151, %153 : vector<8x128xf32>
    %155 = arith.addf %149, %154 : vector<8x128xf32>
    %156 = vector.extract_strided_slice %93 {offsets = [2, 0, 0], sizes = [1, 8, 128], strides = [1, 1, 1]} : vector<3x8x128xf32> to vector<1x8x128xf32>
    %157 = vector.shape_cast %156 : vector<1x8x128xf32> to vector<8x128xf32>
    %158 = vector.extract_strided_slice %94 {offsets = [2, 0, 0], sizes = [1, 8, 128], strides = [1, 1, 1]} : vector<3x8x128xf32> to vector<1x8x128xf32>
    %159 = vector.shape_cast %158 : vector<1x8x128xf32> to vector<8x128xf32>
    %160 = arith.mulf %157, %159 : vector<8x128xf32>
    %161 = arith.addf %155, %160 : vector<8x128xf32>
    %162 = arith.mulf %143, %161 : vector<8x128xf32>
    %163 = arith.addf %85, %162 : vector<8x128xf32>
    %164 = arith.addf %163, %144 : vector<8x128xf32>
    %165 = arith.addf %164, %37 : vector<8x128xf32>
    %166 = vector.shape_cast %142 : vector<8x128xf32> to vector<1x8x128xf32>
    %167 = vector.broadcast %166 : vector<1x8x128xf32> to vector<3x8x128xf32>
    %168 = arith.mulf %167, %93 : vector<3x8x128xf32>
    %169 = arith.addf %86, %168 : vector<3x8x128xf32>
    %170 = arith.addf %169, %76 : vector<3x8x128xf32>
    %171 = arith.index_cast %10 : i32 to index
    %172 = arith.index_cast %12 : i32 to index
    %c0_77 = arith.constant 0 : index
    %173 = vector.load %arg23[%171, %172, %c0_77] : memref<2x16x128xf32, #tpu.memory_space<vmem>>, vector<1x8x128xf32>
    %174 = vector.shape_cast %173 : vector<1x8x128xf32> to vector<8x128xf32>
    %175 = vector.shape_cast %165 : vector<8x128xf32> to vector<1x8x128xf32>
    tpu.vector_store %arg23[%171, %172, %c0_77], %175 {strides = array<i32>} : memref<2x16x128xf32, #tpu.memory_space<vmem>>, vector<1x8x128xf32>,
    %176 = arith.index_cast %10 : i32 to index
    %c0_78 = arith.constant 0 : index
    %177 = arith.index_cast %12 : i32 to index
    %c0_79 = arith.constant 0 : index
    %178 = vector.load %arg24[%176, %c0_78, %177, %c0_79] : memref<2x3x16x128xf32, #tpu.memory_space<vmem>>, vector<1x3x8x128xf32>
    %179 = vector.shape_cast %178 : vector<1x3x8x128xf32> to vector<3x8x128xf32>
    %180 = vector.shape_cast %170 : vector<3x8x128xf32> to vector<1x3x8x128xf32>
    tpu.vector_store %arg24[%176, %c0_78, %177, %c0_79], %180 {strides = array<i32>} : memref<2x3x16x128xf32, #tpu.memory_space<vmem>>, vector<1x3x8x128xf32>,
    %c2_i32_80 = arith.constant 2 : i32
    %181 = arith.cmpi eq, %arg0, %c2_i32_80 : i32
    %182 = arith.extui %181 : i1 to i32
    %c0_i32_81 = arith.constant 0 : i32
    %183 = arith.cmpi ne, %182, %c0_i32_81 : i32
    scf.if %183 {
      %184 = arith.truncf %165 : vector<8x128xf32> to vector<8x128xbf16>
      %c0_82 = arith.constant 0 : index
      %c0_83 = arith.constant 0 : index
      %185 = vector.load %arg18[%c0_82, %c0_83] : memref<128x128xbf16, #tpu.memory_space<vmem>>, vector<128x128xbf16>
      %cst_84 = arith.constant dense<0.000000e+00> : vector<8x128xf32>
      %186 = tpu.matmul %184, %185, %cst_84 {dimension_numbers = #tpu.dot_dimension_numbers<[1], [0], [0], [1], [0, 0, 1, 1], [], []>} : vector<8x128xbf16>, vector<128x128xbf16>, vector<8x128xf32> -> vector<8x128xf32>
      %c0_85 = arith.constant 0 : index
      %c0_86 = arith.constant 0 : index
      %187 = vector.load %arg19[%c0_85, %c0_86] : memref<1x128xf32, #tpu.memory_space<vmem>>, vector<1x128xf32>
      %188 = vector.broadcast %187 : vector<1x128xf32> to vector<8x128xf32>
      %189 = arith.addf %186, %188 : vector<8x128xf32>
      %190 = arith.negf %189 : vector<8x128xf32>
      %191 = math.exp %190 : vector<8x128xf32>
      %cst_87 = arith.constant 1.000000e+00 : f32
      %192 = vector.broadcast %cst_87 : f32 to vector<8x128xf32>
      %193 = arith.addf %192, %191 : vector<8x128xf32>
      %194 = arith.divf %192, %193 : vector<8x128xf32>
      %195 = arith.mulf %189, %194 : vector<8x128xf32>
      %c0_88 = arith.constant 0 : index
      %c0_89 = arith.constant 0 : index
      %196 = vector.load %arg20[%c0_88, %c0_89] : memref<1x128xf32, #tpu.memory_space<vmem>>, vector<1x128xf32>
      %197 = vector.broadcast %196 : vector<1x128xf32> to vector<8x128xf32>
      %198 = arith.mulf %195, %197 : vector<8x128xf32>
      %cst_90 = arith.constant dense<0.000000e+00> : vector<8xf32>
      %199 = vector.multi_reduction <add>, %198, %cst_90 [1] : vector<8x128xf32> to vector<8xf32>
      %200 = vector.shape_cast %199 : vector<8xf32> to vector<8x1xf32>
      %c0_91 = arith.constant 0 : index
      %c0_92 = arith.constant 0 : index
      %201 = vector.load %arg21[%c0_91, %c0_92] : memref<1x1xf32, #tpu.memory_space<vmem>>, vector<1x1xf32>
      %202 = vector.broadcast %201 : vector<1x1xf32> to vector<8x1xf32>
      %203 = arith.addf %200, %202 : vector<8x1xf32>
      %c0_93 = arith.constant 0 : index
      %c0_94 = arith.constant 0 : index
      %204 = vector.load %arg22[%c0_93, %c0_94] : memref<8x1xf32, #tpu.memory_space<vmem>>, vector<8x1xf32>
      tpu.vector_store %arg22[%c0_93, %c0_94], %203 {strides = array<i32>} : memref<8x1xf32, #tpu.memory_space<vmem>>, vector<8x1xf32>,
    } else {
    }
    return
  }
  func.func @transform_0(%arg0: i32, %arg1: i32) -> (i32, i32) {
    %c0_i32 = arith.constant 0 : i32
    %c0_i32_0 = arith.constant 0 : i32
    %c0_i32_1 = arith.constant 0 : i32
    return %c0_i32, %c0_i32_0 : i32, i32
  }
  func.func @transform_1(%arg0: i32, %arg1: i32) -> (i32, i32) {
    %c0_i32 = arith.constant 0 : i32
    %c0_i32_0 = arith.constant 0 : i32
    return %arg1, %c0_i32 : i32, i32
  }
  func.func @transform_2(%arg0: i32, %arg1: i32) -> (i32, i32, i32) {
    %c0_i32 = arith.constant 0 : i32
    %c0_i32_0 = arith.constant 0 : i32
    %c0_i32_1 = arith.constant 0 : i32
    return %c0_i32, %arg1, %c0_i32_0 : i32, i32, i32
  }
  func.func @transform_3(%arg0: i32, %arg1: i32) -> (i32, i32, i32) {
    %c0_i32 = arith.constant 0 : i32
    %c0_i32_0 = arith.constant 0 : i32
    %c0_i32_1 = arith.constant 0 : i32
    return %arg0, %c0_i32, %c0_i32_0 : i32, i32, i32
  }
  func.func @transform_4(%arg0: i32, %arg1: i32) -> (i32, i32, i32) {
    %c0_i32 = arith.constant 0 : i32
    %c0_i32_0 = arith.constant 0 : i32
    %c0_i32_1 = arith.constant 0 : i32
    return %arg0, %c0_i32, %c0_i32_0 : i32, i32, i32
  }
  func.func @transform_5(%arg0: i32, %arg1: i32) -> (i32, i32, i32) {
    %c0_i32 = arith.constant 0 : i32
    %c0_i32_0 = arith.constant 0 : i32
    %c0_i32_1 = arith.constant 0 : i32
    return %arg0, %c0_i32, %c0_i32_0 : i32, i32, i32
  }
  func.func @transform_6(%arg0: i32, %arg1: i32) -> (i32, i32, i32) {
    %c0_i32 = arith.constant 0 : i32
    %c0_i32_0 = arith.constant 0 : i32
    %c0_i32_1 = arith.constant 0 : i32
    return %arg0, %c0_i32, %c0_i32_0 : i32, i32, i32
  }
  func.func @transform_7(%arg0: i32, %arg1: i32) -> (i32, i32, i32) {
    %c0_i32 = arith.constant 0 : i32
    %c0_i32_0 = arith.constant 0 : i32
    %c0_i32_1 = arith.constant 0 : i32
    return %arg0, %c0_i32, %c0_i32_0 : i32, i32, i32
  }
  func.func @transform_8(%arg0: i32, %arg1: i32) -> (i32, i32, i32) {
    %c0_i32 = arith.constant 0 : i32
    %c0_i32_0 = arith.constant 0 : i32
    %c0_i32_1 = arith.constant 0 : i32
    return %arg0, %c0_i32, %c0_i32_0 : i32, i32, i32
  }
  func.func @transform_9(%arg0: i32, %arg1: i32) -> (i32, i32, i32) {
    %c0_i32 = arith.constant 0 : i32
    %c0_i32_0 = arith.constant 0 : i32
    %c0_i32_1 = arith.constant 0 : i32
    return %arg0, %c0_i32, %c0_i32_0 : i32, i32, i32
  }
  func.func @transform_10(%arg0: i32, %arg1: i32) -> (i32, i32, i32) {
    %c0_i32 = arith.constant 0 : i32
    %c0_i32_0 = arith.constant 0 : i32
    %c0_i32_1 = arith.constant 0 : i32
    return %arg0, %c0_i32, %c0_i32_0 : i32, i32, i32
  }
  func.func @transform_11(%arg0: i32, %arg1: i32) -> (i32, i32, i32) {
    %c0_i32 = arith.constant 0 : i32
    %c0_i32_0 = arith.constant 0 : i32
    %c0_i32_1 = arith.constant 0 : i32
    return %arg0, %c0_i32, %c0_i32_0 : i32, i32, i32
  }
  func.func @transform_12(%arg0: i32, %arg1: i32) -> (i32, i32, i32) {
    %c0_i32 = arith.constant 0 : i32
    %c0_i32_0 = arith.constant 0 : i32
    %c0_i32_1 = arith.constant 0 : i32
    return %arg0, %c0_i32, %c0_i32_0 : i32, i32, i32
  }
  func.func @transform_13(%arg0: i32, %arg1: i32) -> (i32, i32, i32) {
    %c0_i32 = arith.constant 0 : i32
    %c0_i32_0 = arith.constant 0 : i32
    %c0_i32_1 = arith.constant 0 : i32
    return %arg0, %c0_i32, %c0_i32_0 : i32, i32, i32
  }
  func.func @transform_14(%arg0: i32, %arg1: i32) -> (i32, i32, i32) {
    %c0_i32 = arith.constant 0 : i32
    %c0_i32_0 = arith.constant 0 : i32
    %c0_i32_1 = arith.constant 0 : i32
    return %arg0, %c0_i32, %c0_i32_0 : i32, i32, i32
  }
  func.func @transform_15(%arg0: i32, %arg1: i32) -> (i32, i32, i32) {
    %c0_i32 = arith.constant 0 : i32
    %c0_i32_0 = arith.constant 0 : i32
    %c0_i32_1 = arith.constant 0 : i32
    return %arg0, %c0_i32, %c0_i32_0 : i32, i32, i32
  }
  func.func @transform_16(%arg0: i32, %arg1: i32) -> (i32, i32) {
    %c0_i32 = arith.constant 0 : i32
    %c0_i32_0 = arith.constant 0 : i32
    %c0_i32_1 = arith.constant 0 : i32
    return %c0_i32, %c0_i32_0 : i32, i32
  }
  func.func @transform_17(%arg0: i32, %arg1: i32) -> (i32, i32) {
    %c0_i32 = arith.constant 0 : i32
    %c0_i32_0 = arith.constant 0 : i32
    %c0_i32_1 = arith.constant 0 : i32
    return %c0_i32, %c0_i32_0 : i32, i32
  }
  func.func @transform_18(%arg0: i32, %arg1: i32) -> (i32, i32) {
    %c0_i32 = arith.constant 0 : i32
    %c0_i32_0 = arith.constant 0 : i32
    %c0_i32_1 = arith.constant 0 : i32
    return %c0_i32, %c0_i32_0 : i32, i32
  }
  func.func @transform_19(%arg0: i32, %arg1: i32) -> (i32, i32) {
    %c0_i32 = arith.constant 0 : i32
    %c0_i32_0 = arith.constant 0 : i32
    %c0_i32_1 = arith.constant 0 : i32
    return %c0_i32, %c0_i32_0 : i32, i32
  }
  func.func @transform_20(%arg0: i32, %arg1: i32) -> (i32, i32) {
    %c0_i32 = arith.constant 0 : i32
    %c0_i32_0 = arith.constant 0 : i32
    return %arg1, %c0_i32 : i32, i32
  }
}

</mosaic_0001>

<llo_original>
// kernel: painn_forward.1
$region0: #{painn_forward.1}
  #allocation0 [shape = 'u32[]', space=smem, size = 0x4, offset = 0x4, fixed_abs, tag = 'smem constant byte address 0x4 - core index']
  #allocation1 [shape = 'u32[144,128]{1,0:T(1,128)}', space=vmem, size = 0x12000, scoped, tag = 'internal scratch']
  #allocation2 [shape = 'f32[2,16,128]{2,1,0:T(8,128)}', space=vmem, size = 0x4000, scoped, tag = 'scratch operand']
  #allocation3 [shape = 'f32[2,3,16,128]{3,2,1,0:T(8,128)}', space=vmem, size = 0xc000, scoped, tag = 'scratch operand']
  #allocation4 [shape = 'f32[16,384]{1,0:T(8,128)}', space=vmem, size = 0x6000, scoped, tag = 'scratch operand']
  #allocation5 [shape = 'f32[3,8,128]{2,1,0:T(8,128)}', space=vmem, size = 0x3000, scoped, tag = 'scratch operand']
  #allocation6 [shape = 'f32[1,1]{1,0:T(1,128)S(1)}', space=vmem, size = 0x200, scoped, tag = 'scoped memory for painn_forward.1']
  %s0 = inlined_call_operand.vmem [shape: f32[16,128], index: 0, kind: input, shape index: {}]
  %s1 = inlined_call_operand.vmem [shape: f32[256,32], index: 1, kind: input, shape index: {}]
  %s2 = inlined_call_operand.vmem [shape: f32[3,256,32], index: 2, kind: input, shape index: {}]
  %s3 = inlined_call_operand.vmem [shape: bf16[3,128,128], index: 3, kind: input, shape index: {}]
  %s4 = inlined_call_operand.vmem [shape: f32[3,1,128], index: 4, kind: input, shape index: {}]
  %s5 = inlined_call_operand.vmem [shape: bf16[3,128,384], index: 5, kind: input, shape index: {}]
  %s6 = inlined_call_operand.vmem [shape: f32[3,1,384], index: 6, kind: input, shape index: {}]
  %s7 = inlined_call_operand.vmem [shape: f32[3,32,128], index: 7, kind: input, shape index: {}]
  %s8 = inlined_call_operand.vmem [shape: f32[3,32,128], index: 8, kind: input, shape index: {}]
  %s9 = inlined_call_operand.vmem [shape: f32[3,32,128], index: 9, kind: input, shape index: {}]
  %s10 = inlined_call_operand.vmem [shape: bf16[3,128,256], index: 10, kind: input, shape index: {}]
  %s11 = inlined_call_operand.vmem [shape: bf16[3,128,128], index: 11, kind: input, shape index: {}]
  %s12 = inlined_call_operand.vmem [shape: bf16[3,128,128], index: 12, kind: input, shape index: {}]
  %s13 = inlined_call_operand.vmem [shape: f32[3,1,128], index: 13, kind: input, shape index: {}]
  %s14 = inlined_call_operand.vmem [shape: bf16[3,128,384], index: 14, kind: input, shape index: {}]
  %s15 = inlined_call_operand.vmem [shape: f32[3,1,384], index: 15, kind: input, shape index: {}]
  %s16 = inlined_call_operand.vmem [shape: bf16[128,128], index: 16, kind: input, shape index: {}]
  %s17 = inlined_call_operand.vmem [shape: f32[1,128], index: 17, kind: input, shape index: {}]
  %s18 = inlined_call_operand.vmem [shape: f32[1,128], index: 18, kind: input, shape index: {}]
  %s19 = inlined_call_operand.<no memory space> [shape: f32[1,1], index: 19, kind: input, shape index: {}]
  %s20 = inlined_call_operand.vmem [shape: f32[16,1], index: 20, kind: output, shape index: {}]
  %s21 = sld [smem:[#allocation0]]
  $region167: #{painn_forward.1} parent=0
    _
  %s23 = ssub.s32 1, %s21
  %s24 = scalar_select 0, %s23, %s21
  %v25 = vstv %s19
  %26 = vst [vmem:[#allocation6] sm:$0x1] %v25
  $region1: #{painn_forward.1} parent=0
    #allocation7 [shape = 'u8[393216]{0}', space=vmem, size = 0x60000, scoped, tag = 'input window, operand 2']
    loop: start=0, step=1, limit=8
    $region2: #{painn_forward.1} parent=1 // loop_pre_header
      _
    $region3: #{painn_forward.1} parent=1 // loop_header
      %s28 = sphi 0, %s32
      %p29 = scmp.ge.s32.totalorder %s28, 8
      %s35 = sphi 0, %s47
      %s36 = sphi 0, %s43
      %s37 = sphi 0, %s35
      %s38 = sphi 0, %s36
      %s39 = sphi 0, %s37
      %s40 = sphi 0, %s38
      %s48 = sphi 0, %s48
      %s50 = sphi 0, %s48
      %s51 = sphi 0, %s50
      %s65 = sphi 0, %s51
      %s71 = sphi 0, %s73
      %s74 = sphi 0, %s71
      %s75 = sphi 0, %s74
      %s91 = sphi 0, %s75
      %s97 = sphi 0, %s99
      %s100 = sphi 0, %s97
      %s101 = sphi 0, %s100
      %s117 = sphi 0, %s101
      %s123 = sphi 0, %s125
      %s126 = sphi 0, %s123
      %s127 = sphi 0, %s126
      %s143 = sphi 0, %s127
      %s149 = sphi 0, %s151
      %s152 = sphi 0, %s149
      %s153 = sphi 0, %s152
      %s169 = sphi 0, %s153
      %s175 = sphi 0, %s177
      %s178 = sphi 0, %s175
      %s179 = sphi 0, %s178
      %s195 = sphi 0, %s179
      %s201 = sphi 0, %s203
      %s204 = sphi 0, %s201
      %s205 = sphi 0, %s204
      %s221 = sphi 0, %s205
      %s227 = sphi 0, %s229
      %s230 = sphi 0, %s227
      %s231 = sphi 0, %s230
      %s247 = sphi 0, %s231
      %s253 = sphi 0, %s255
      %s256 = sphi 0, %s253
      %s257 = sphi 0, %s256
      %s273 = sphi 0, %s257
      %s279 = sphi 0, %s281
      %s282 = sphi 0, %s279
      %s283 = sphi 0, %s282
      %s299 = sphi 0, %s283
      %s305 = sphi 0, %s307
      %s308 = sphi 0, %s305
      %s309 = sphi 0, %s308
      %s325 = sphi 0, %s309
      %s331 = sphi 0, %s333
      %s334 = sphi 0, %s331
      %s335 = sphi 0, %s334
      %s351 = sphi 0, %s335
      %s357 = sphi 0, %s359
      %s360 = sphi 0, %s357
      %s361 = sphi 0, %s360
      %s377 = sphi 0, %s361
      %s383 = sphi 0, %s385
      %s386 = sphi 0, %s383
      %s387 = sphi 0, %s386
      %s403 = sphi 0, %s387
      %s409 = sphi 0, %s411
      %s412 = sphi 0, %s409
      %s413 = sphi 0, %s412
      %s429 = sphi 0, %s413
      %s435 = sphi 0, %s437
      %s438 = sphi 0, %s435
      %s439 = sphi 0, %s438
      %s455 = sphi 0, %s439
      %s459 = sphi 0, %s459
      %s461 = sphi 0, %s459
      %s462 = sphi 0, %s461
      %s476 = sphi 0, %s462
      %s480 = sphi 0, %s480
      %s482 = sphi 0, %s480
      %s483 = sphi 0, %s482
      %s497 = sphi 0, %s483
      %s501 = sphi 0, %s501
      %s503 = sphi 0, %s501
      %s504 = sphi 0, %s503
      %s518 = sphi 0, %s504
      %s522 = sphi 0, %s522
      %s524 = sphi 0, %s522
      %s525 = sphi 0, %s524
      %s539 = sphi 0, %s525
      %s545 = sphi 0, %s547
      %s548 = sphi 0, %s545
      %s549 = sphi 0, %s548
      %s565 = sphi 0, %s549
    $region4: #{painn_forward.1} parent=1 // loop_header_branch
      %31 = sbr.rel (%p29) target = $region8
    $region5: #{painn_forward.1} parent=1 // loop_body
      %s33 = ssub.s32 %s28, 1
      %s34 = ssub.s32 %s28, 2
      %s41 = sadd.s32 1, %s36
      %p42 = scmp.ge.s32.totalorder %s41, 2
      %s43 = scalar_select %p42, 0, %s41
      %s44 = sadd.s32 1, %s35
      %s45 = scalar_select %p42, %s44, %s35
      %p46 = scmp.ge.s32.totalorder %s45, 3
      %s47 = scalar_select %p46, 0, %s45
      %s49 = sadd.s32 %s48, 1
      %p52 = scmp.eq.s32.totalorder %s28, 5
      %p53 = scmp.ne.s32.totalorder %s48, %s50
      %p54 = scmp.eq.s32.totalorder %s28, 0
      %p55 = por %p53, %p54
      %p56 = scmp.ne.s32.totalorder %s48, %s50
      %p57 = scmp.eq.s32.totalorder %s33, 5
      %p58 = por %p56, %p57
      %p59 = scmp.ne.s32.totalorder %s50, %s51
      %p60 = scmp.eq.s32.totalorder %s33, 0
      %p61 = por %p59, %p60
      %p62 = scmp.ne.s32.totalorder %s50, %s51
      %p63 = scmp.eq.s32.totalorder %s34, 5
      %p64 = por %p62, %p63
      %p66 = scmp.ne.s32.totalorder %s51, %s65
      %p67 = scmp.eq.s32.totalorder %s34, 0
      %p68 = por %p66, %p67
      %s69 = ssub.s32 %s36, %s43
      %p70 = scmp.eq.s32.totalorder %s69, 0
      %s72 = sadd.s32 %s71, 1
      %s73 = scalar_select %p70, %s71, %s72
      %p76 = pneg %p70
      %p77 = scmp.eq.s32.totalorder %s28, 5
      %p78 = por %p76, %p77
      %p79 = scmp.ne.s32.totalorder %s71, %s74
      %p80 = scmp.eq.s32.totalorder %s28, 0
      %p81 = por %p79, %p80
      %p82 = scmp.ne.s32.totalorder %s71, %s74
      %p83 = scmp.eq.s32.totalorder %s33, 5
      %p84 = por %p82, %p83
      %p85 = scmp.ne.s32.totalorder %s74, %s75
      %p86 = scmp.eq.s32.totalorder %s33, 0
      %p87 = por %p85, %p86
      %p88 = scmp.ne.s32.totalorder %s74, %s75
      %p89 = scmp.eq.s32.totalorder %s34, 5
      %p90 = por %p88, %p89
      %p92 = scmp.ne.s32.totalorder %s75, %s91
      %p93 = scmp.eq.s32.totalorder %s34, 0
      %p94 = por %p92, %p93
      %s95 = ssub.s32 %s36, %s43
      %p96 = scmp.eq.s32.totalorder %s95, 0
      %s98 = sadd.s32 %s97, 1
      %s99 = scalar_select %p96, %s97, %s98
      %p102 = pneg %p96
      %p103 = scmp.eq.s32.totalorder %s28, 5
      %p104 = por %p102, %p103
      %p105 = scmp.ne.s32.totalorder %s97, %s100
      %p106 = scmp.eq.s32.totalorder %s28, 0
      %p107 = por %p105, %p106
      %p108 = scmp.ne.s32.totalorder %s97, %s100
      %p109 = scmp.eq.s32.totalorder %s33, 5
      %p110 = por %p108, %p109
      %p111 = scmp.ne.s32.totalorder %s100, %s101
      %p112 = scmp.eq.s32.totalorder %s33, 0
      %p113 = por %p111, %p112
      %p114 = scmp.ne.s32.totalorder %s100, %s101
      %p115 = scmp.eq.s32.totalorder %s34, 5
      %p116 = por %p114, %p115
      %p118 = scmp.ne.s32.totalorder %s101, %s117
      %p119 = scmp.eq.s32.totalorder %s34, 0
      %p120 = por %p118, %p119
      %s121 = ssub.s32 %s35, %s47
      %p122 = scmp.eq.s32.totalorder %s121, 0
      %s124 = sadd.s32 %s123, 1
      %s125 = scalar_select %p122, %s123, %s124
      %p128 = pneg %p122
      %p129 = scmp.eq.s32.totalorder %s28, 5
      %p130 = por %p128, %p129
      %p131 = scmp.ne.s32.totalorder %s123, %s126
      %p132 = scmp.eq.s32.totalorder %s28, 0
      %p133 = por %p131, %p132
      %p134 = scmp.ne.s32.totalorder %s123, %s126
      %p135 = scmp.eq.s32.totalorder %s33, 5
      %p136 = por %p134, %p135
      %p137 = scmp.ne.s32.totalorder %s126, %s127
      %p138 = scmp.eq.s32.totalorder %s33, 0
      %p139 = por %p137, %p138
      %p140 = scmp.ne.s32.totalorder %s126, %s127
      %p141 = scmp.eq.s32.totalorder %s34, 5
      %p142 = por %p140, %p141
      %p144 = scmp.ne.s32.totalorder %s127, %s143
      %p145 = scmp.eq.s32.totalorder %s34, 0
      %p146 = por %p144, %p145
      %s147 = ssub.s32 %s35, %s47
      %p148 = scmp.eq.s32.totalorder %s147, 0
      %s150 = sadd.s32 %s149, 1
      %s151 = scalar_select %p148, %s149, %s150
      %p154 = pneg %p148
      %p155 = scmp.eq.s32.totalorder %s28, 5
      %p156 = por %p154, %p155
      %p157 = scmp.ne.s32.totalorder %s149, %s152
      %p158 = scmp.eq.s32.totalorder %s28, 0
      %p159 = por %p157, %p158
      %p160 = scmp.ne.s32.totalorder %s149, %s152
      %p161 = scmp.eq.s32.totalorder %s33, 5
      %p162 = por %p160, %p161
      %p163 = scmp.ne.s32.totalorder %s152, %s153
      %p164 = scmp.eq.s32.totalorder %s33, 0
      %p165 = por %p163, %p164
      %p166 = scmp.ne.s32.totalorder %s152, %s153
      %p167 = scmp.eq.s32.totalorder %s34, 5
      %p168 = por %p166, %p167
      %p170 = scmp.ne.s32.totalorder %s153, %s169
      %p171 = scmp.eq.s32.totalorder %s34, 0
      %p172 = por %p170, %p171
      %s173 = ssub.s32 %s35, %s47
      %p174 = scmp.eq.s32.totalorder %s173, 0
      %s176 = sadd.s32 %s175, 1
      %s177 = scalar_select %p174, %s175, %s176
      %p180 = pneg %p174
      %p181 = scmp.eq.s32.totalorder %s28, 5
      %p182 = por %p180, %p181
      %p183 = scmp.ne.s32.totalorder %s175, %s178
      %p184 = scmp.eq.s32.totalorder %s28, 0
      %p185 = por %p183, %p184
      %p186 = scmp.ne.s32.totalorder %s175, %s178
      %p187 = scmp.eq.s32.totalorder %s33, 5
      %p188 = por %p186, %p187
      %p189 = scmp.ne.s32.totalorder %s178, %s179
      %p190 = scmp.eq.s32.totalorder %s33, 0
      %p191 = por %p189, %p190
      %p192 = scmp.ne.s32.totalorder %s178, %s179
      %p193 = scmp.eq.s32.totalorder %s34, 5
      %p194 = por %p192, %p193
      %p196 = scmp.ne.s32.totalorder %s179, %s195
      %p197 = scmp.eq.s32.totalorder %s34, 0
      %p198 = por %p196, %p197
      %s199 = ssub.s32 %s35, %s47
      %p200 = scmp.eq.s32.totalorder %s199, 0
      %s202 = sadd.s32 %s201, 1
      %s203 = scalar_select %p200, %s201, %s202
      %p206 = pneg %p200
      %p207 = scmp.eq.s32.totalorder %s28, 5
      %p208 = por %p206, %p207
      %p209 = scmp.ne.s32.totalorder %s201, %s204
      %p210 = scmp.eq.s32.totalorder %s28, 0
      %p211 = por %p209, %p210
      %p212 = scmp.ne.s32.totalorder %s201, %s204
      %p213 = scmp.eq.s32.totalorder %s33, 5
      %p214 = por %p212, %p213
      %p215 = scmp.ne.s32.totalorder %s204, %s205
      %p216 = scmp.eq.s32.totalorder %s33, 0
      %p217 = por %p215, %p216
      %p218 = scmp.ne.s32.totalorder %s204, %s205
      %p219 = scmp.eq.s32.totalorder %s34, 5
      %p220 = por %p218, %p219
      %p222 = scmp.ne.s32.totalorder %s205, %s221
      %p223 = scmp.eq.s32.totalorder %s34, 0
      %p224 = por %p222, %p223
      %s225 = ssub.s32 %s35, %s47
      %p226 = scmp.eq.s32.totalorder %s225, 0
      %s228 = sadd.s32 %s227, 1
      %s229 = scalar_select %p226, %s227, %s228
      %p232 = pneg %p226
      %p233 = scmp.eq.s32.totalorder %s28, 5
      %p234 = por %p232, %p233
      %p235 = scmp.ne.s32.totalorder %s227, %s230
      %p236 = scmp.eq.s32.totalorder %s28, 0
      %p237 = por %p235, %p236
      %p238 = scmp.ne.s32.totalorder %s227, %s230
      %p239 = scmp.eq.s32.totalorder %s33, 5
      %p240 = por %p238, %p239
      %p241 = scmp.ne.s32.totalorder %s230, %s231
      %p242 = scmp.eq.s32.totalorder %s33, 0
      %p243 = por %p241, %p242
      %p244 = scmp.ne.s32.totalorder %s230, %s231
      %p245 = scmp.eq.s32.totalorder %s34, 5
      %p246 = por %p244, %p245
      %p248 = scmp.ne.s32.totalorder %s231, %s247
      %p249 = scmp.eq.s32.totalorder %s34, 0
      %p250 = por %p248, %p249
      %s251 = ssub.s32 %s35, %s47
      %p252 = scmp.eq.s32.totalorder %s251, 0
      %s254 = sadd.s32 %s253, 1
      %s255 = scalar_select %p252, %s253, %s254
      %p258 = pneg %p252
      %p259 = scmp.eq.s32.totalorder %s28, 5
      %p260 = por %p258, %p259
      %p261 = scmp.ne.s32.totalorder %s253, %s256
      %p262 = scmp.eq.s32.totalorder %s28, 0
      %p263 = por %p261, %p262
      %p264 = scmp.ne.s32.totalorder %s253, %s256
      %p265 = scmp.eq.s32.totalorder %s33, 5
      %p266 = por %p264, %p265
      %p267 = scmp.ne.s32.totalorder %s256, %s257
      %p268 = scmp.eq.s32.totalorder %s33, 0
      %p269 = por %p267, %p268
      %p270 = scmp.ne.s32.totalorder %s256, %s257
      %p271 = scmp.eq.s32.totalorder %s34, 5
      %p272 = por %p270, %p271
      %p274 = scmp.ne.s32.totalorder %s257, %s273
      %p275 = scmp.eq.s32.totalorder %s34, 0
      %p276 = por %p274, %p275
      %s277 = ssub.s32 %s35, %s47
      %p278 = scmp.eq.s32.totalorder %s277, 0
      %s280 = sadd.s32 %s279, 1
      %s281 = scalar_select %p278, %s279, %s280
      %p284 = pneg %p278
      %p285 = scmp.eq.s32.totalorder %s28, 5
      %p286 = por %p284, %p285
      %p287 = scmp.ne.s32.totalorder %s279, %s282
      %p288 = scmp.eq.s32.totalorder %s28, 0
      %p289 = por %p287, %p288
      %p290 = scmp.ne.s32.totalorder %s279, %s282
      %p291 = scmp.eq.s32.totalorder %s33, 5
      %p292 = por %p290, %p291
      %p293 = scmp.ne.s32.totalorder %s282, %s283
      %p294 = scmp.eq.s32.totalorder %s33, 0
      %p295 = por %p293, %p294
      %p296 = scmp.ne.s32.totalorder %s282, %s283
      %p297 = scmp.eq.s32.totalorder %s34, 5
      %p298 = por %p296, %p297
      %p300 = scmp.ne.s32.totalorder %s283, %s299
      %p301 = scmp.eq.s32.totalorder %s34, 0
      %p302 = por %p300, %p301
      %s303 = ssub.s32 %s35, %s47
      %p304 = scmp.eq.s32.totalorder %s303, 0
      %s306 = sadd.s32 %s305, 1
      %s307 = scalar_select %p304, %s305, %s306
      %p310 = pneg %p304
      %p311 = scmp.eq.s32.totalorder %s28, 5
      %p312 = por %p310, %p311
      %p313 = scmp.ne.s32.totalorder %s305, %s308
      %p314 = scmp.eq.s32.totalorder %s28, 0
      %p315 = por %p313, %p314
      %p316 = scmp.ne.s32.totalorder %s305, %s308
      %p317 = scmp.eq.s32.totalorder %s33, 5
      %p318 = por %p316, %p317
      %p319 = scmp.ne.s32.totalorder %s308, %s309
      %p320 = scmp.eq.s32.totalorder %s33, 0
      %p321 = por %p319, %p320
      %p322 = scmp.ne.s32.totalorder %s308, %s309
      %p323 = scmp.eq.s32.totalorder %s34, 5
      %p324 = por %p322, %p323
      %p326 = scmp.ne.s32.totalorder %s309, %s325
      %p327 = scmp.eq.s32.totalorder %s34, 0
      %p328 = por %p326, %p327
      %s329 = ssub.s32 %s35, %s47
      %p330 = scmp.eq.s32.totalorder %s329, 0
      %s332 = sadd.s32 %s331, 1
      %s333 = scalar_select %p330, %s331, %s332
      %p336 = pneg %p330
      %p337 = scmp.eq.s32.totalorder %s28, 5
      %p338 = por %p336, %p337
      %p339 = scmp.ne.s32.totalorder %s331, %s334
      %p340 = scmp.eq.s32.totalorder %s28, 0
      %p341 = por %p339, %p340
      %p342 = scmp.ne.s32.totalorder %s331, %s334
      %p343 = scmp.eq.s32.totalorder %s33, 5
      %p344 = por %p342, %p343
      %p345 = scmp.ne.s32.totalorder %s334, %s335
      %p346 = scmp.eq.s32.totalorder %s33, 0
      %p347 = por %p345, %p346
      %p348 = scmp.ne.s32.totalorder %s334, %s335
      %p349 = scmp.eq.s32.totalorder %s34, 5
      %p350 = por %p348, %p349
      %p352 = scmp.ne.s32.totalorder %s335, %s351
      %p353 = scmp.eq.s32.totalorder %s34, 0
      %p354 = por %p352, %p353
      %s355 = ssub.s32 %s35, %s47
      %p356 = scmp.eq.s32.totalorder %s355, 0
      %s358 = sadd.s32 %s357, 1
      %s359 = scalar_select %p356, %s357, %s358
      %p362 = pneg %p356
      %p363 = scmp.eq.s32.totalorder %s28, 5
      %p364 = por %p362, %p363
      %p365 = scmp.ne.s32.totalorder %s357, %s360
      %p366 = scmp.eq.s32.totalorder %s28, 0
      %p367 = por %p365, %p366
      %p368 = scmp.ne.s32.totalorder %s357, %s360
      %p369 = scmp.eq.s32.totalorder %s33, 5
      %p370 = por %p368, %p369
      %p371 = scmp.ne.s32.totalorder %s360, %s361
      %p372 = scmp.eq.s32.totalorder %s33, 0
      %p373 = por %p371, %p372
      %p374 = scmp.ne.s32.totalorder %s360, %s361
      %p375 = scmp.eq.s32.totalorder %s34, 5
      %p376 = por %p374, %p375
      %p378 = scmp.ne.s32.totalorder %s361, %s377
      %p379 = scmp.eq.s32.totalorder %s34, 0
      %p380 = por %p378, %p379
      %s381 = ssub.s32 %s35, %s47
      %p382 = scmp.eq.s32.totalorder %s381, 0
      %s384 = sadd.s32 %s383, 1
      %s385 = scalar_select %p382, %s383, %s384
      %p388 = pneg %p382
      %p389 = scmp.eq.s32.totalorder %s28, 5
      %p390 = por %p388, %p389
      %p391 = scmp.ne.s32.totalorder %s383, %s386
      %p392 = scmp.eq.s32.totalorder %s28, 0
      %p393 = por %p391, %p392
      %p394 = scmp.ne.s32.totalorder %s383, %s386
      %p395 = scmp.eq.s32.totalorder %s33, 5
      %p396 = por %p394, %p395
      %p397 = scmp.ne.s32.totalorder %s386, %s387
      %p398 = scmp.eq.s32.totalorder %s33, 0
      %p399 = por %p397, %p398
      %p400 = scmp.ne.s32.totalorder %s386, %s387
      %p401 = scmp.eq.s32.totalorder %s34, 5
      %p402 = por %p400, %p401
      %p404 = scmp.ne.s32.totalorder %s387, %s403
      %p405 = scmp.eq.s32.totalorder %s34, 0
      %p406 = por %p404, %p405
      %s407 = ssub.s32 %s35, %s47
      %p408 = scmp.eq.s32.totalorder %s407, 0
      %s410 = sadd.s32 %s409, 1
      %s411 = scalar_select %p408, %s409, %s410
      %p414 = pneg %p408
      %p415 = scmp.eq.s32.totalorder %s28, 5
      %p416 = por %p414, %p415
      %p417 = scmp.ne.s32.totalorder %s409, %s412
      %p418 = scmp.eq.s32.totalorder %s28, 0
      %p419 = por %p417, %p418
      %p420 = scmp.ne.s32.totalorder %s409, %s412
      %p421 = scmp.eq.s32.totalorder %s33, 5
      %p422 = por %p420, %p421
      %p423 = scmp.ne.s32.totalorder %s412, %s413
      %p424 = scmp.eq.s32.totalorder %s33, 0
      %p425 = por %p423, %p424
      %p426 = scmp.ne.s32.totalorder %s412, %s413
      %p427 = scmp.eq.s32.totalorder %s34, 5
      %p428 = por %p426, %p427
      %p430 = scmp.ne.s32.totalorder %s413, %s429
      %p431 = scmp.eq.s32.totalorder %s34, 0
      %p432 = por %p430, %p431
      %s433 = ssub.s32 %s35, %s47
      %p434 = scmp.eq.s32.totalorder %s433, 0
      %s436 = sadd.s32 %s435, 1
      %s437 = scalar_select %p434, %s435, %s436
      %p440 = pneg %p434
      %p441 = scmp.eq.s32.totalorder %s28, 5
      %p442 = por %p440, %p441
      %p443 = scmp.ne.s32.totalorder %s435, %s438
      %p444 = scmp.eq.s32.totalorder %s28, 0
      %p445 = por %p443, %p444
      %p446 = scmp.ne.s32.totalorder %s435, %s438
      %p447 = scmp.eq.s32.totalorder %s33, 5
      %p448 = por %p446, %p447
      %p449 = scmp.ne.s32.totalorder %s438, %s439
      %p450 = scmp.eq.s32.totalorder %s33, 0
      %p451 = por %p449, %p450
      %p452 = scmp.ne.s32.totalorder %s438, %s439
      %p453 = scmp.eq.s32.totalorder %s34, 5
      %p454 = por %p452, %p453
      %p456 = scmp.ne.s32.totalorder %s439, %s455
      %p457 = scmp.eq.s32.totalorder %s34, 0
      %p458 = por %p456, %p457
      %s460 = sadd.s32 %s459, 1
      %p463 = scmp.eq.s32.totalorder %s28, 5
      %p464 = scmp.ne.s32.totalorder %s459, %s461
      %p465 = scmp.eq.s32.totalorder %s28, 0
      %p466 = por %p464, %p465
      %p467 = scmp.ne.s32.totalorder %s459, %s461
      %p468 = scmp.eq.s32.totalorder %s33, 5
      %p469 = por %p467, %p468
      %p470 = scmp.ne.s32.totalorder %s461, %s462
      %p471 = scmp.eq.s32.totalorder %s33, 0
      %p472 = por %p470, %p471
      %p473 = scmp.ne.s32.totalorder %s461, %s462
      %p474 = scmp.eq.s32.totalorder %s34, 5
      %p475 = por %p473, %p474
      %p477 = scmp.ne.s32.totalorder %s462, %s476
      %p478 = scmp.eq.s32.totalorder %s34, 0
      %p479 = por %p477, %p478
      %s481 = sadd.s32 %s480, 1
      %p484 = scmp.eq.s32.totalorder %s28, 5
      %p485 = scmp.ne.s32.totalorder %s480, %s482
      %p486 = scmp.eq.s32.totalorder %s28, 0
      %p487 = por %p485, %p486
      %p488 = scmp.ne.s32.totalorder %s480, %s482
      %p489 = scmp.eq.s32.totalorder %s33, 5
      %p490 = por %p488, %p489
      %p491 = scmp.ne.s32.totalorder %s482, %s483
      %p492 = scmp.eq.s32.totalorder %s33, 0
      %p493 = por %p491, %p492
      %p494 = scmp.ne.s32.totalorder %s482, %s483
      %p495 = scmp.eq.s32.totalorder %s34, 5
      %p496 = por %p494, %p495
      %p498 = scmp.ne.s32.totalorder %s483, %s497
      %p499 = scmp.eq.s32.totalorder %s34, 0
      %p500 = por %p498, %p499
      %s502 = sadd.s32 %s501, 1
      %p505 = scmp.eq.s32.totalorder %s28, 5
      %p506 = scmp.ne.s32.totalorder %s501, %s503
      %p507 = scmp.eq.s32.totalorder %s28, 0
      %p508 = por %p506, %p507
      %p509 = scmp.ne.s32.totalorder %s501, %s503
      %p510 = scmp.eq.s32.totalorder %s33, 5
      %p511 = por %p509, %p510
      %p512 = scmp.ne.s32.totalorder %s503, %s504
      %p513 = scmp.eq.s32.totalorder %s33, 0
      %p514 = por %p512, %p513
      %p515 = scmp.ne.s32.totalorder %s503, %s504
      %p516 = scmp.eq.s32.totalorder %s34, 5
      %p517 = por %p515, %p516
      %p519 = scmp.ne.s32.totalorder %s504, %s518
      %p520 = scmp.eq.s32.totalorder %s34, 0
      %p521 = por %p519, %p520
      %s523 = sadd.s32 %s522, 1
      %p526 = scmp.eq.s32.totalorder %s28, 5
      %p527 = scmp.ne.s32.totalorder %s522, %s524
      %p528 = scmp.eq.s32.totalorder %s28, 0
      %p529 = por %p527, %p528
      %p530 = scmp.ne.s32.totalorder %s522, %s524
      %p531 = scmp.eq.s32.totalorder %s33, 5
      %p532 = por %p530, %p531
      %p533 = scmp.ne.s32.totalorder %s524, %s525
      %p534 = scmp.eq.s32.totalorder %s33, 0
      %p535 = por %p533, %p534
      %p536 = scmp.ne.s32.totalorder %s524, %s525
      %p537 = scmp.eq.s32.totalorder %s34, 5
      %p538 = por %p536, %p537
      %p540 = scmp.ne.s32.totalorder %s525, %s539
      %p541 = scmp.eq.s32.totalorder %s34, 0
      %p542 = por %p540, %p541
      %s543 = ssub.s32 %s36, %s43
      %p544 = scmp.eq.s32.totalorder %s543, 0
      %s546 = sadd.s32 %s545, 1
      %s547 = scalar_select %p544, %s545, %s546
      %p550 = pneg %p544
      %p551 = scmp.eq.s32.totalorder %s28, 5
      %p552 = por %p550, %p551
      %p553 = scmp.ne.s32.totalorder %s545, %s548
      %p554 = scmp.eq.s32.totalorder %s28, 0
      %p555 = por %p553, %p554
      %p556 = scmp.ne.s32.totalorder %s545, %s548
      %p557 = scmp.eq.s32.totalorder %s33, 5
      %p558 = por %p556, %p557
      %p559 = scmp.ne.s32.totalorder %s548, %s549
      %p560 = scmp.eq.s32.totalorder %s33, 0
      %p561 = por %p559, %p560
      %p562 = scmp.ne.s32.totalorder %s548, %s549
      %p563 = scmp.eq.s32.totalorder %s34, 5
      %p564 = por %p562, %p563
      %p566 = scmp.ne.s32.totalorder %s549, %s565
      %p567 = scmp.eq.s32.totalorder %s34, 0
      %p568 = por %p566, %p567
      %p569 = scmp.le.s32.totalorder 1, %s28
      %p570 = scmp.lt.s32.totalorder %s28, 7
      %p571 = pnand %p569, %p570
      %p572 = pneg %p571
      // Predicated region
      $region9: #{painn_forward.1} parent=5 // pred_check
        _
      $region10: #{painn_forward.1} parent=5 // pred_check_branch
        %574 = sbr.rel (%p571) target = $region12
      $region11: #{painn_forward.1} parent=5 // pred_region
        %s575 = ssub.s32 %s28, 1
        // Predicated region
        $region13: #{painn_forward.1} parent=11 // pred_check
          %p576 = pneg %p61
        $region14: #{painn_forward.1} parent=11 // pred_check_branch
          %578 = sbr.rel (%p576) target = $region16
        $region15: #{painn_forward.1} parent=11 // pred_region
          _
        $region16: #{painn_forward.1} parent=11 // pred_fallthru
          _
        // Predicated region
        $region17: #{painn_forward.1} parent=11 // pred_check
          %p579 = pneg %p472
        $region18: #{painn_forward.1} parent=11 // pred_check_branch
          %581 = sbr.rel (%p579) target = $region20
        $region19: #{painn_forward.1} parent=11 // pred_region
          _
        $region20: #{painn_forward.1} parent=11 // pred_fallthru
          _
        // Predicated region
        $region21: #{painn_forward.1} parent=11 // pred_check
          %p582 = pneg %p493
        $region22: #{painn_forward.1} parent=11 // pred_check_branch
          %584 = sbr.rel (%p582) target = $region24
        $region23: #{painn_forward.1} parent=11 // pred_region
          _
        $region24: #{painn_forward.1} parent=11 // pred_fallthru
          _
        // Predicated region
        $region25: #{painn_forward.1} parent=11 // pred_check
          %p585 = pneg %p514
        $region26: #{painn_forward.1} parent=11 // pred_check_branch
          %587 = sbr.rel (%p585) target = $region28
        $region27: #{painn_forward.1} parent=11 // pred_region
          _
        $region28: #{painn_forward.1} parent=11 // pred_fallthru
          _
        // Predicated region
        $region29: #{painn_forward.1} parent=11 // pred_check
          %p588 = pneg %p535
        $region30: #{painn_forward.1} parent=11 // pred_check_branch
          %590 = sbr.rel (%p588) target = $region32
        $region31: #{painn_forward.1} parent=11 // pred_region
          _
        $region32: #{painn_forward.1} parent=11 // pred_fallthru
          _
      $region12: #{painn_forward.1} parent=5 // pred_fallthru
        _
      %p591 = scmp.lt.s32.totalorder %s28, 6
      // Predicated region
      $region33: #{painn_forward.1} parent=5 // pred_check
        %p592 = pneg %p591
      $region34: #{painn_forward.1} parent=5 // pred_check_branch
        %594 = sbr.rel (%p592) target = $region36
      $region35: #{painn_forward.1} parent=5 // pred_region
        // Predicated region
        $region37: #{painn_forward.1} parent=35 // pred_check
          %p595 = pneg %p81
        $region38: #{painn_forward.1} parent=35 // pred_check_branch
          %597 = sbr.rel (%p595) target = $region40
        $region39: #{painn_forward.1} parent=35 // pred_region
          %s598 = smul.u32 16, %s36
          %p599 = scmp.lt.s32.totalorder %s598, 31
          %s600 = scalar_select %p599, %s598, 31
          %s601 = smul.addr %s600, 8
          %s602 = scalar_lea.vmem %s1, %s601
          %s603 = smul.u32 16, %s36
        $region40: #{painn_forward.1} parent=35 // pred_fallthru
          _
        // Predicated region
        $region41: #{painn_forward.1} parent=35 // pred_check
          %p604 = pneg %p107
        $region42: #{painn_forward.1} parent=35 // pred_check_branch
          %606 = sbr.rel (%p604) target = $region44
        $region43: #{painn_forward.1} parent=35 // pred_region
          %s607 = sand.u32 %s97, 1
          %s608 = sand.u32 %s97, 1
          %s609 = smul.addr %s608, 384
          %s610 = scalar_lea.vmem [#allocation7], %s609
          %s611 = smul.u32 16, %s36
          %s612 = smul.addr %s611, 8
          %s613 = scalar_lea.vmem %s2, %s612
          // Predicated region
          $region45: #{painn_forward.1} parent=43 // pred_check
            _
          $region46: #{painn_forward.1} parent=43 // pred_check_branch
            %615 = sbr.rel (0) target = $region48
          $region47: #{painn_forward.1} parent=43 // pred_region
            // Predicated region
            $region49: #{painn_forward.1} parent=47 // pred_check
              _
            $region50: #{painn_forward.1} parent=47 // pred_check_branch
              %617 = sbr.rel (0) target = $region52
            $region51: #{painn_forward.1} parent=47 // pred_region
              // Predicated region
              $region64: #{painn_forward.1} parent=51 // pred_check
                _
              $region65: #{painn_forward.1} parent=51 // pred_check_branch
                %727 = sbr.rel (0) target = $region67
              $region66: #{painn_forward.1} parent=51 // pred_region
                loop: start=0, step=1, limit=1
                $region68: #{painn_forward.1} parent=66 // loop_pre_header
                  _
                $region69: #{painn_forward.1} parent=66 // loop_header
                  %s729 = sphi 0, %s733
                  %p730 = scmp.ge.s32.totalorder %s729, 1
                  %s734 = sphi %s613, %s613
                  %s735 = sphi %s610, %s610
                $region70: #{painn_forward.1} parent=66 // loop_header_branch
                  %732 = sbr.rel (%p730) target = $region74
                $region71: #{painn_forward.1} parent=66 // loop_body
                  %v736 = vld [vmem:[%s734] sm:$0xff]
                  %737 = vst [vmem:[%s735] sm:$0xff] %v736
                  %v738 = vld [vmem:[%s734 + $0x8] sm:$0xff]
                  %739 = vst [vmem:[%s735 + $0x8] sm:$0xff] %v738
                  %v740 = vld [vmem:[%s734 + $0x10] sm:$0xff]
                  %741 = vst [vmem:[%s735 + $0x10] sm:$0xff] %v740
                  %v742 = vld [vmem:[%s734 + $0x18] sm:$0xff]
                  %743 = vst [vmem:[%s735 + $0x18] sm:$0xff] %v742
                  %v744 = vld [vmem:[%s734 + $0x20] sm:$0xff]
                  %745 = vst [vmem:[%s735 + $0x20] sm:$0xff] %v744
                  %v746 = vld [vmem:[%s734 + $0x28] sm:$0xff]
                  %747 = vst [vmem:[%s735 + $0x28] sm:$0xff] %v746
                  %v748 = vld [vmem:[%s734 + $0x30] sm:$0xff]
                  %749 = vst [vmem:[%s735 + $0x30] sm:$0xff] %v748
                  %v750 = vld [vmem:[%s734 + $0x38] sm:$0xff]
                  %751 = vst [vmem:[%s735 + $0x38] sm:$0xff] %v750
                  %v752 = vld [vmem:[%s734 + $0x40] sm:$0xff]
                  %753 = vst [vmem:[%s735 + $0x40] sm:$0xff] %v752
                  %v754 = vld [vmem:[%s734 + $0x48] sm:$0xff]
                  %755 = vst [vmem:[%s735 + $0x48] sm:$0xff] %v754
                  %v756 = vld [vmem:[%s734 + $0x50] sm:$0xff]
                  %757 = vst [vmem:[%s735 + $0x50] sm:$0xff] %v756
                  %v758 = vld [vmem:[%s734 + $0x58] sm:$0xff]
                  %759 = vst [vmem:[%s735 + $0x58] sm:$0xff] %v758
                  %v760 = vld [vmem:[%s734 + $0x60] sm:$0xff]
                  %761 = vst [vmem:[%s735 + $0x60] sm:$0xff] %v760
                  %v762 = vld [vmem:[%s734 + $0x68] sm:$0xff]
                  %763 = vst [vmem:[%s735 + $0x68] sm:$0xff] %v762
                  %v764 = vld [vmem:[%s734 + $0x70] sm:$0xff]
                  %765 = vst [vmem:[%s735 + $0x70] sm:$0xff] %v764
                  %v766 = vld [vmem:[%s734 + $0x78] sm:$0xff]
                  %767 = vst [vmem:[%s735 + $0x78] sm:$0xff] %v766
                  %v768 = vld [vmem:[%s734 + $0x100] sm:$0xff]
                  %769 = vst [vmem:[%s735 + $0x80] sm:$0xff] %v768
                  %v770 = vld [vmem:[%s734 + $0x108] sm:$0xff]
                  %771 = vst [vmem:[%s735 + $0x88] sm:$0xff] %v770
                  %v772 = vld [vmem:[%s734 + $0x110] sm:$0xff]
                  %773 = vst [vmem:[%s735 + $0x90] sm:$0xff] %v772
                  %v774 = vld [vmem:[%s734 + $0x118] sm:$0xff]
                  %775 = vst [vmem:[%s735 + $0x98] sm:$0xff] %v774
                  %v776 = vld [vmem:[%s734 + $0x120] sm:$0xff]
                  %777 = vst [vmem:[%s735 + $0xa0] sm:$0xff] %v776
                  %v778 = vld [vmem:[%s734 + $0x128] sm:$0xff]
                  %779 = vst [vmem:[%s735 + $0xa8] sm:$0xff] %v778
                  %v780 = vld [vmem:[%s734 + $0x130] sm:$0xff]
                  %781 = vst [vmem:[%s735 + $0xb0] sm:$0xff] %v780
                  %v782 = vld [vmem:[%s734 + $0x138] sm:$0xff]
                  %783 = vst [vmem:[%s735 + $0xb8] sm:$0xff] %v782
                  %v784 = vld [vmem:[%s734 + $0x140] sm:$0xff]
                  %785 = vst [vmem:[%s735 + $0xc0] sm:$0xff] %v784
                  %v786 = vld [vmem:[%s734 + $0x148] sm:$0xff]
                  %787 = vst [vmem:[%s735 + $0xc8] sm:$0xff] %v786
                  %v788 = vld [vmem:[%s734 + $0x150] sm:$0xff]
                  %789 = vst [vmem:[%s735 + $0xd0] sm:$0xff] %v788
                  %v790 = vld [vmem:[%s734 + $0x158] sm:$0xff]
                  %791 = vst [vmem:[%s735 + $0xd8] sm:$0xff] %v790
                  %v792 = vld [vmem:[%s734 + $0x160] sm:$0xff]
                  %793 = vst [vmem:[%s735 + $0xe0] sm:$0xff] %v792
                  %v794 = vld [vmem:[%s734 + $0x168] sm:$0xff]
                  %795 = vst [vmem:[%s735 + $0xe8] sm:$0xff] %v794
                  %v796 = vld [vmem:[%s734 + $0x170] sm:$0xff]
                  %797 = vst [vmem:[%s735 + $0xf0] sm:$0xff] %v796
                  %v798 = vld [vmem:[%s734 + $0x178] sm:$0xff]
                  %799 = vst [vmem:[%s735 + $0xf8] sm:$0xff] %v798
                  %v800 = vld [vmem:[%s734 + $0x200] sm:$0xff]
                  %801 = vst [vmem:[%s735 + $0x100] sm:$0xff] %v800
                  %v802 = vld [vmem:[%s734 + $0x208] sm:$0xff]
                  %803 = vst [vmem:[%s735 + $0x108] sm:$0xff] %v802
                  %v804 = vld [vmem:[%s734 + $0x210] sm:$0xff]
                  %805 = vst [vmem:[%s735 + $0x110] sm:$0xff] %v804
                  %v806 = vld [vmem:[%s734 + $0x218] sm:$0xff]
                  %807 = vst [vmem:[%s735 + $0x118] sm:$0xff] %v806
                  %v808 = vld [vmem:[%s734 + $0x220] sm:$0xff]
                  %809 = vst [vmem:[%s735 + $0x120] sm:$0xff] %v808
                  %v810 = vld [vmem:[%s734 + $0x228] sm:$0xff]
                  %811 = vst [vmem:[%s735 + $0x128] sm:$0xff] %v810
                  %v812 = vld [vmem:[%s734 + $0x230] sm:$0xff]
                  %813 = vst [vmem:[%s735 + $0x130] sm:$0xff] %v812
                  %v814 = vld [vmem:[%s734 + $0x238] sm:$0xff]
                  %815 = vst [vmem:[%s735 + $0x138] sm:$0xff] %v814
                  %v816 = vld [vmem:[%s734 + $0x240] sm:$0xff]
                  %817 = vst [vmem:[%s735 + $0x140] sm:$0xff] %v816
                  %v818 = vld [vmem:[%s734 + $0x248] sm:$0xff]
                  %819 = vst [vmem:[%s735 + $0x148] sm:$0xff] %v818
                  %v820 = vld [vmem:[%s734 + $0x250] sm:$0xff]
                  %821 = vst [vmem:[%s735 + $0x150] sm:$0xff] %v820
                  %v822 = vld [vmem:[%s734 + $0x258] sm:$0xff]
                  %823 = vst [vmem:[%s735 + $0x158] sm:$0xff] %v822
                  %v824 = vld [vmem:[%s734 + $0x260] sm:$0xff]
                  %825 = vst [vmem:[%s735 + $0x160] sm:$0xff] %v824
                  %v826 = vld [vmem:[%s734 + $0x268] sm:$0xff]
                  %827 = vst [vmem:[%s735 + $0x168] sm:$0xff] %v826
                  %v828 = vld [vmem:[%s734 + $0x270] sm:$0xff]
                  %829 = vst [vmem:[%s735 + $0x170] sm:$0xff] %v828
                  %v830 = vld [vmem:[%s734 + $0x278] sm:$0xff]
                  %831 = vst [vmem:[%s735 + $0x178] sm:$0xff] %v830
                $region72: #{painn_forward.1} parent=66 // loop_footer
                  %s733 = sadd.s32 1, %s729
                $region73: #{painn_forward.1} parent=66 // loop_footer_branch
                  %728 = sbr.rel target = $region69
                $region74: #{painn_forward.1} parent=66 // loop_exit
                  _
              $region67: #{painn_forward.1} parent=51 // pred_fallthru
                _
              // Predicated region
              $region75: #{painn_forward.1} parent=51 // pred_check
                _
              $region76: #{painn_forward.1} parent=51 // pred_check_branch
                %833 = sbr.rel target = $region78
              $region77: #{painn_forward.1} parent=51 // pred_region
                _
              $region78: #{painn_forward.1} parent=51 // pred_fallthru
                _
            $region52: #{painn_forward.1} parent=47 // pred_fallthru
              _
            // Predicated region
            $region53: #{painn_forward.1} parent=47 // pred_check
              _
            $region54: #{painn_forward.1} parent=47 // pred_check_branch
              %619 = sbr.rel target = $region56
            $region55: #{painn_forward.1} parent=47 // pred_region
              %s621 = ssub.s32 256, 1
              loop: start=0, step=1, limit=1
              $region57: #{painn_forward.1} parent=55 // loop_pre_header
                _
              $region58: #{painn_forward.1} parent=55 // loop_header
                %s623 = sphi 0, %s627
                %p624 = scmp.ge.s32.totalorder %s623, 1
                %s628 = sphi %s613, %s613
                %s629 = sphi %s610, %s610
              $region59: #{painn_forward.1} parent=55 // loop_header_branch
                %626 = sbr.rel (%p624) target = $region63
              $region60: #{painn_forward.1} parent=55 // loop_body
                %v630 = vld [vmem:[%s628] sm:%s621]
                %631 = vst [vmem:[%s629] sm:%s621] %v630
                %v632 = vld [vmem:[%s628 + $0x8] sm:%s621]
                %633 = vst [vmem:[%s629 + $0x8] sm:%s621] %v632
                %v634 = vld [vmem:[%s628 + $0x10] sm:%s621]
                %635 = vst [vmem:[%s629 + $0x10] sm:%s621] %v634
                %v636 = vld [vmem:[%s628 + $0x18] sm:%s621]
                %637 = vst [vmem:[%s629 + $0x18] sm:%s621] %v636
                %v638 = vld [vmem:[%s628 + $0x20] sm:%s621]
                %639 = vst [vmem:[%s629 + $0x20] sm:%s621] %v638
                %v640 = vld [vmem:[%s628 + $0x28] sm:%s621]
                %641 = vst [vmem:[%s629 + $0x28] sm:%s621] %v640
                %v642 = vld [vmem:[%s628 + $0x30] sm:%s621]
                %643 = vst [vmem:[%s629 + $0x30] sm:%s621] %v642
                %v644 = vld [vmem:[%s628 + $0x38] sm:%s621]
                %645 = vst [vmem:[%s629 + $0x38] sm:%s621] %v644
                %v646 = vld [vmem:[%s628 + $0x40] sm:%s621]
                %647 = vst [vmem:[%s629 + $0x40] sm:%s621] %v646
                %v648 = vld [vmem:[%s628 + $0x48] sm:%s621]
                %649 = vst [vmem:[%s629 + $0x48] sm:%s621] %v648
                %v650 = vld [vmem:[%s628 + $0x50] sm:%s621]
                %651 = vst [vmem:[%s629 + $0x50] sm:%s621] %v650
                %v652 = vld [vmem:[%s628 + $0x58] sm:%s621]
                %653 = vst [vmem:[%s629 + $0x58] sm:%s621] %v652
                %v654 = vld [vmem:[%s628 + $0x60] sm:%s621]
                %655 = vst [vmem:[%s629 + $0x60] sm:%s621] %v654
                %v656 = vld [vmem:[%s628 + $0x68] sm:%s621]
                %657 = vst [vmem:[%s629 + $0x68] sm:%s621] %v656
                %v658 = vld [vmem:[%s628 + $0x70] sm:%s621]
                %659 = vst [vmem:[%s629 + $0x70] sm:%s621] %v658
                %v660 = vld [vmem:[%s628 + $0x78] sm:%s621]
                %661 = vst [vmem:[%s629 + $0x78] sm:%s621] %v660
                %v662 = vld [vmem:[%s628 + $0x100] sm:%s621]
                %663 = vst [vmem:[%s629 + $0x80] sm:%s621] %v662
                %v664 = vld [vmem:[%s628 + $0x108] sm:%s621]
                %665 = vst [vmem:[%s629 + $0x88] sm:%s621] %v664
                %v666 = vld [vmem:[%s628 + $0x110] sm:%s621]
                %667 = vst [vmem:[%s629 + $0x90] sm:%s621] %v666
                %v668 = vld [vmem:[%s628 + $0x118] sm:%s621]
                %669 = vst [vmem:[%s629 + $0x98] sm:%s621] %v668
                %v670 = vld [vmem:[%s628 + $0x120] sm:%s621]
                %671 = vst [vmem:[%s629 + $0xa0] sm:%s621] %v670
                %v672 = vld [vmem:[%s628 + $0x128] sm:%s621]
                %673 = vst [vmem:[%s629 + $0xa8] sm:%s621] %v672
                %v674 = vld [vmem:[%s628 + $0x130] sm:%s621]
                %675 = vst [vmem:[%s629 + $0xb0] sm:%s621] %v674
                %v676 = vld [vmem:[%s628 + $0x138] sm:%s621]
                %677 = vst [vmem:[%s629 + $0xb8] sm:%s621] %v676
                %v678 = vld [vmem:[%s628 + $0x140] sm:%s621]
                %679 = vst [vmem:[%s629 + $0xc0] sm:%s621] %v678
                %v680 = vld [vmem:[%s628 + $0x148] sm:%s621]
                %681 = vst [vmem:[%s629 + $0xc8] sm:%s621] %v680
                %v682 = vld [vmem:[%s628 + $0x150] sm:%s621]
                %683 = vst [vmem:[%s629 + $0xd0] sm:%s621] %v682
                %v684 = vld [vmem:[%s628 + $0x158] sm:%s621]
                %685 = vst [vmem:[%s629 + $0xd8] sm:%s621] %v684
                %v686 = vld [vmem:[%s628 + $0x160] sm:%s621]
                %687 = vst [vmem:[%s629 + $0xe0] sm:%s621] %v686
                %v688 = vld [vmem:[%s628 + $0x168] sm:%s621]
                %689 = vst [vmem:[%s629 + $0xe8] sm:%s621] %v688
                %v690 = vld [vmem:[%s628 + $0x170] sm:%s621]
                %691 = vst [vmem:[%s629 + $0xf0] sm:%s621] %v690
                %v692 = vld [vmem:[%s628 + $0x178] sm:%s621]
                %693 = vst [vmem:[%s629 + $0xf8] sm:%s621] %v692
                %v694 = vld [vmem:[%s628 + $0x200] sm:%s621]
                %695 = vst [vmem:[%s629 + $0x100] sm:%s621] %v694
                %v696 = vld [vmem:[%s628 + $0x208] sm:%s621]
                %697 = vst [vmem:[%s629 + $0x108] sm:%s621] %v696
                %v698 = vld [vmem:[%s628 + $0x210] sm:%s621]
                %699 = vst [vmem:[%s629 + $0x110] sm:%s621] %v698
                %v700 = vld [vmem:[%s628 + $0x218] sm:%s621]
                %701 = vst [vmem:[%s629 + $0x118] sm:%s621] %v700
                %v702 = vld [vmem:[%s628 + $0x220] sm:%s621]
                %703 = vst [vmem:[%s629 + $0x120] sm:%s621] %v702
                %v704 = vld [vmem:[%s628 + $0x228] sm:%s621]
                %705 = vst [vmem:[%s629 + $0x128] sm:%s621] %v704
                %v706 = vld [vmem:[%s628 + $0x230] sm:%s621]
                %707 = vst [vmem:[%s629 + $0x130] sm:%s621] %v706
                %v708 = vld [vmem:[%s628 + $0x238] sm:%s621]
                %709 = vst [vmem:[%s629 + $0x138] sm:%s621] %v708
                %v710 = vld [vmem:[%s628 + $0x240] sm:%s621]
                %711 = vst [vmem:[%s629 + $0x140] sm:%s621] %v710
                %v712 = vld [vmem:[%s628 + $0x248] sm:%s621]
                %713 = vst [vmem:[%s629 + $0x148] sm:%s621] %v712
                %v714 = vld [vmem:[%s628 + $0x250] sm:%s621]
                %715 = vst [vmem:[%s629 + $0x150] sm:%s621] %v714
                %v716 = vld [vmem:[%s628 + $0x258] sm:%s621]
                %717 = vst [vmem:[%s629 + $0x158] sm:%s621] %v716
                %v718 = vld [vmem:[%s628 + $0x260] sm:%s621]
                %719 = vst [vmem:[%s629 + $0x160] sm:%s621] %v718
                %v720 = vld [vmem:[%s628 + $0x268] sm:%s621]
                %721 = vst [vmem:[%s629 + $0x168] sm:%s621] %v720
                %v722 = vld [vmem:[%s628 + $0x270] sm:%s621]
                %723 = vst [vmem:[%s629 + $0x170] sm:%s621] %v722
                %v724 = vld [vmem:[%s628 + $0x278] sm:%s621]
                %725 = vst [vmem:[%s629 + $0x178] sm:%s621] %v724
              $region61: #{painn_forward.1} parent=55 // loop_footer
                %s627 = sadd.s32 1, %s623
              $region62: #{painn_forward.1} parent=55 // loop_footer_branch
                %622 = sbr.rel target = $region58
              $region63: #{painn_forward.1} parent=55 // loop_exit
                _
            $region56: #{painn_forward.1} parent=47 // pred_fallthru
              _
          $region48: #{painn_forward.1} parent=43 // pred_fallthru
            _
          %834 = vnop
        $region44: #{painn_forward.1} parent=35 // pred_fallthru
          _
        // Predicated region
        $region79: #{painn_forward.1} parent=35 // pred_check
          %p835 = pneg %p133
        $region80: #{painn_forward.1} parent=35 // pred_check_branch
          %837 = sbr.rel (%p835) target = $region82
        $region81: #{painn_forward.1} parent=35 // pred_region
          %p838 = scmp.lt.s32.totalorder %s35, 2
          %s839 = scalar_select %p838, %s35, 2
          %s840 = smul.addr %s839, 16
          %s841 = smul.addr %s840, 4
          %s842 = scalar_lea.vmem %s3, %s841
        $region82: #{painn_forward.1} parent=35 // pred_fallthru
          _
        // Predicated region
        $region83: #{painn_forward.1} parent=35 // pred_check
          %p843 = pneg %p159
        $region84: #{painn_forward.1} parent=35 // pred_check_branch
          %845 = sbr.rel (%p843) target = $region86
        $region85: #{painn_forward.1} parent=35 // pred_region
          %p846 = scmp.lt.s32.totalorder %s35, 2
          %s847 = scalar_select %p846, %s35, 2
          %s848 = scalar_lea.vmem %s4, %s847
        $region86: #{painn_forward.1} parent=35 // pred_fallthru
          _
        // Predicated region
        $region87: #{painn_forward.1} parent=35 // pred_check
          %p849 = pneg %p185
        $region88: #{painn_forward.1} parent=35 // pred_check_branch
          %851 = sbr.rel (%p849) target = $region90
        $region89: #{painn_forward.1} parent=35 // pred_region
          %p852 = scmp.lt.s32.totalorder %s35, 2
          %s853 = scalar_select %p852, %s35, 2
          %s854 = smul.addr %s853, 48
          %s855 = smul.addr %s854, 4
          %s856 = scalar_lea.vmem %s5, %s855
        $region90: #{painn_forward.1} parent=35 // pred_fallthru
          _
        // Predicated region
        $region91: #{painn_forward.1} parent=35 // pred_check
          %p857 = pneg %p211
        $region92: #{painn_forward.1} parent=35 // pred_check_branch
          %859 = sbr.rel (%p857) target = $region94
        $region93: #{painn_forward.1} parent=35 // pred_region
          %p860 = scmp.lt.s32.totalorder %s35, 2
          %s861 = scalar_select %p860, %s35, 2
          %s862 = smul.addr %s861, 3
          %s863 = scalar_lea.vmem %s6, %s862
        $region94: #{painn_forward.1} parent=35 // pred_fallthru
          _
        // Predicated region
        $region95: #{painn_forward.1} parent=35 // pred_check
          %p864 = pneg %p237
        $region96: #{painn_forward.1} parent=35 // pred_check_branch
          %866 = sbr.rel (%p864) target = $region98
        $region97: #{painn_forward.1} parent=35 // pred_region
          %p867 = scmp.lt.s32.totalorder %s35, 2
          %s868 = scalar_select %p867, %s35, 2
          %s869 = smul.addr %s868, 4
          %s870 = smul.addr %s869, 8
          %s871 = scalar_lea.vmem %s7, %s870
        $region98: #{painn_forward.1} parent=35 // pred_fallthru
          _
        // Predicated region
        $region99: #{painn_forward.1} parent=35 // pred_check
          %p872 = pneg %p263
        $region100: #{painn_forward.1} parent=35 // pred_check_branch
          %874 = sbr.rel (%p872) target = $region102
        $region101: #{painn_forward.1} parent=35 // pred_region
          %p875 = scmp.lt.s32.totalorder %s35, 2
          %s876 = scalar_select %p875, %s35, 2
          %s877 = smul.addr %s876, 4
          %s878 = smul.addr %s877, 8
          %s879 = scalar_lea.vmem %s8, %s878
        $region102: #{painn_forward.1} parent=35 // pred_fallthru
          _
        // Predicated region
        $region103: #{painn_forward.1} parent=35 // pred_check
          %p880 = pneg %p289
        $region104: #{painn_forward.1} parent=35 // pred_check_branch
          %882 = sbr.rel (%p880) target = $region106
        $region105: #{painn_forward.1} parent=35 // pred_region
          %p883 = scmp.lt.s32.totalorder %s35, 2
          %s884 = scalar_select %p883, %s35, 2
          %s885 = smul.addr %s884, 4
          %s886 = smul.addr %s885, 8
          %s887 = scalar_lea.vmem %s9, %s886
        $region106: #{painn_forward.1} parent=35 // pred_fallthru
          _
        // Predicated region
        $region107: #{painn_forward.1} parent=35 // pred_check
          %p888 = pneg %p315
        $region108: #{painn_forward.1} parent=35 // pred_check_branch
          %890 = sbr.rel (%p888) target = $region110
        $region109: #{painn_forward.1} parent=35 // pred_region
          %p891 = scmp.lt.s32.totalorder %s35, 2
          %s892 = scalar_select %p891, %s35, 2
          %s893 = smul.addr %s892, 32
          %s894 = smul.addr %s893, 4
          %s895 = scalar_lea.vmem %s10, %s894
        $region110: #{painn_forward.1} parent=35 // pred_fallthru
          _
        // Predicated region
        $region111: #{painn_forward.1} parent=35 // pred_check
          %p896 = pneg %p341
        $region112: #{painn_forward.1} parent=35 // pred_check_branch
          %898 = sbr.rel (%p896) target = $region114
        $region113: #{painn_forward.1} parent=35 // pred_region
          %p899 = scmp.lt.s32.totalorder %s35, 2
          %s900 = scalar_select %p899, %s35, 2
          %s901 = smul.addr %s900, 16
          %s902 = smul.addr %s901, 4
          %s903 = scalar_lea.vmem %s11, %s902
        $region114: #{painn_forward.1} parent=35 // pred_fallthru
          _
        // Predicated region
        $region115: #{painn_forward.1} parent=35 // pred_check
          %p904 = pneg %p367
        $region116: #{painn_forward.1} parent=35 // pred_check_branch
          %906 = sbr.rel (%p904) target = $region118
        $region117: #{painn_forward.1} parent=35 // pred_region
          %p907 = scmp.lt.s32.totalorder %s35, 2
          %s908 = scalar_select %p907, %s35, 2
          %s909 = smul.addr %s908, 16
          %s910 = smul.addr %s909, 4
          %s911 = scalar_lea.vmem %s12, %s910
        $region118: #{painn_forward.1} parent=35 // pred_fallthru
          _
        // Predicated region
        $region119: #{painn_forward.1} parent=35 // pred_check
          %p912 = pneg %p393
        $region120: #{painn_forward.1} parent=35 // pred_check_branch
          %914 = sbr.rel (%p912) target = $region122
        $region121: #{painn_forward.1} parent=35 // pred_region
          %p915 = scmp.lt.s32.totalorder %s35, 2
          %s916 = scalar_select %p915, %s35, 2
          %s917 = scalar_lea.vmem %s13, %s916
        $region122: #{painn_forward.1} parent=35 // pred_fallthru
          _
        // Predicated region
        $region123: #{painn_forward.1} parent=35 // pred_check
          %p918 = pneg %p419
        $region124: #{painn_forward.1} parent=35 // pred_check_branch
          %920 = sbr.rel (%p918) target = $region126
        $region125: #{painn_forward.1} parent=35 // pred_region
          %p921 = scmp.lt.s32.totalorder %s35, 2
          %s922 = scalar_select %p921, %s35, 2
          %s923 = smul.addr %s922, 48
          %s924 = smul.addr %s923, 4
          %s925 = scalar_lea.vmem %s14, %s924
        $region126: #{painn_forward.1} parent=35 // pred_fallthru
          _
        // Predicated region
        $region127: #{painn_forward.1} parent=35 // pred_check
          %p926 = pneg %p445
        $region128: #{painn_forward.1} parent=35 // pred_check_branch
          %928 = sbr.rel (%p926) target = $region130
        $region129: #{painn_forward.1} parent=35 // pred_region
          %p929 = scmp.lt.s32.totalorder %s35, 2
          %s930 = scalar_select %p929, %s35, 2
          %s931 = smul.addr %s930, 3
          %s932 = scalar_lea.vmem %s15, %s931
        $region130: #{painn_forward.1} parent=35 // pred_fallthru
          _
      $region36: #{painn_forward.1} parent=5 // pred_fallthru
        _
      %p933 = scmp.le.s32.totalorder 1, %s28
      %p934 = scmp.lt.s32.totalorder %s28, 7
      %p935 = pnand %p933, %p934
      %p936 = pneg %p935
      // Predicated region
      $region131: #{painn_forward.1} parent=5 // pred_check
        _
      $region132: #{painn_forward.1} parent=5 // pred_check_branch
        %938 = sbr.rel (%p935) target = $region134
      $region133: #{painn_forward.1} parent=5 // pred_region
        %s939 = ssub.s32 %s28, 1
        %s940 = sand.u32 %s100, 1
        %s941 = sand.u32 %s100, 1
        %s942 = smul.addr %s941, 384
        %s943 = scalar_lea.vmem [#allocation7], %s942
        // Predicated region
        $region135: #{painn_forward.1} parent=133 // pred_check
          %p944 = pneg %p113
        $region136: #{painn_forward.1} parent=133 // pred_check_branch
          %946 = sbr.rel (%p944) target = $region138
        $region137: #{painn_forward.1} parent=133 // pred_region
          _
        $region138: #{painn_forward.1} parent=133 // pred_fallthru
          _
        %p947 = pneg %p61
        %p948 = pneg %p58
        %s949 = smul.u32 16, %s38
        %p950 = scmp.lt.s32.totalorder %s949, 31
        %s951 = scalar_select %p950, %s949, 31
        %s952 = smul.addr %s951, 8
        %s953 = scalar_lea.vmem %s1, %s952
        %p954 = pneg %p87
        %p955 = pneg %p84
        %s956 = sand.u32 %s100, 1
        %s957 = sand.u32 %s100, 1
        %s958 = smul.addr %s957, 384
        %s959 = scalar_lea.vmem [#allocation7], %s958
        %p960 = pneg %p113
        %p961 = pneg %p110
        %p962 = scmp.lt.s32.totalorder %s37, 2
        %s963 = scalar_select %p962, %s37, 2
        %s964 = smul.addr %s963, 16
        %s965 = smul.addr %s964, 4
        %s966 = scalar_lea.vmem %s3, %s965
        %p967 = pneg %p139
        %p968 = pneg %p136
        %p969 = scmp.lt.s32.totalorder %s37, 2
        %s970 = scalar_select %p969, %s37, 2
        %s971 = scalar_lea.vmem %s4, %s970
        %p972 = pneg %p165
        %p973 = pneg %p162
        %p974 = scmp.lt.s32.totalorder %s37, 2
        %s975 = scalar_select %p974, %s37, 2
        %s976 = smul.addr %s975, 48
        %s977 = smul.addr %s976, 4
        %s978 = scalar_lea.vmem %s5, %s977
        %p979 = pneg %p191
        %p980 = pneg %p188
        %p981 = scmp.lt.s32.totalorder %s37, 2
        %s982 = scalar_select %p981, %s37, 2
        %s983 = smul.addr %s982, 3
        %s984 = scalar_lea.vmem %s6, %s983
        %p985 = pneg %p217
        %p986 = pneg %p214
        %p987 = scmp.lt.s32.totalorder %s37, 2
        %s988 = scalar_select %p987, %s37, 2
        %s989 = smul.addr %s988, 4
        %s990 = smul.addr %s989, 8
        %s991 = scalar_lea.vmem %s7, %s990
        %p992 = pneg %p243
        %p993 = pneg %p240
        %p994 = scmp.lt.s32.totalorder %s37, 2
        %s995 = scalar_select %p994, %s37, 2
        %s996 = smul.addr %s995, 4
        %s997 = smul.addr %s996, 8
        %s998 = scalar_lea.vmem %s8, %s997
        %p999 = pneg %p269
        %p1000 = pneg %p266
        %p1001 = scmp.lt.s32.totalorder %s37, 2
        %s1002 = scalar_select %p1001, %s37, 2
        %s1003 = smul.addr %s1002, 4
        %s1004 = smul.addr %s1003, 8
        %s1005 = scalar_lea.vmem %s9, %s1004
        %p1006 = pneg %p295
        %p1007 = pneg %p292
        %p1008 = scmp.lt.s32.totalorder %s37, 2
        %s1009 = scalar_select %p1008, %s37, 2
        %s1010 = smul.addr %s1009, 32
        %s1011 = smul.addr %s1010, 4
        %s1012 = scalar_lea.vmem %s10, %s1011
        %p1013 = pneg %p321
        %p1014 = pneg %p318
        %p1015 = scmp.lt.s32.totalorder %s37, 2
        %s1016 = scalar_select %p1015, %s37, 2
        %s1017 = smul.addr %s1016, 16
        %s1018 = smul.addr %s1017, 4
        %s1019 = scalar_lea.vmem %s11, %s1018
        %p1020 = pneg %p347
        %p1021 = pneg %p344
        %p1022 = scmp.lt.s32.totalorder %s37, 2
        %s1023 = scalar_select %p1022, %s37, 2
        %s1024 = smul.addr %s1023, 16
        %s1025 = smul.addr %s1024, 4
        %s1026 = scalar_lea.vmem %s12, %s1025
        %p1027 = pneg %p373
        %p1028 = pneg %p370
        %p1029 = scmp.lt.s32.totalorder %s37, 2
        %s1030 = scalar_select %p1029, %s37, 2
        %s1031 = scalar_lea.vmem %s13, %s1030
        %p1032 = pneg %p399
        %p1033 = pneg %p396
        %p1034 = scmp.lt.s32.totalorder %s37, 2
        %s1035 = scalar_select %p1034, %s37, 2
        %s1036 = smul.addr %s1035, 48
        %s1037 = smul.addr %s1036, 4
        %s1038 = scalar_lea.vmem %s14, %s1037
        %p1039 = pneg %p425
        %p1040 = pneg %p422
        %p1041 = scmp.lt.s32.totalorder %s37, 2
        %s1042 = scalar_select %p1041, %s37, 2
        %s1043 = smul.addr %s1042, 3
        %s1044 = scalar_lea.vmem %s15, %s1043
        %p1045 = pneg %p451
        %p1046 = pneg %p448
        %p1047 = pneg %p472
        %p1048 = pneg %p469
        %p1049 = pneg %p493
        %p1050 = pneg %p490
        %p1051 = pneg %p514
        %p1052 = pneg %p511
        %p1053 = pneg %p535
        %p1054 = pneg %p532
        %p1055 = pneg %p561
        %p1056 = pneg %p558
        %p1057 = scmp.lt.s32.totalorder %s38, 1
        %s1058 = scalar_select %p1057, %s38, 1
        %s1059 = smul.addr %s1058, 8
        %s1060 = scalar_lea.vmem %s20, %s1059
        %s1061 = smul.u32 16, %s38
        %p1062 = scmp.lt.s32.totalorder %s1061, 31
        %s1063 = scalar_select %p1062, %s1061, 31
        %s1064 = smul.addr %s1063, 8
        %s1065 = scalar_lea.vmem %s1, %s1064
        %s1066 = smul.u32 16, %s38
        %s1067 = smul.u32 16, %s38
        %p1068 = scmp.lt.s32.totalorder %s37, 2
        %s1069 = scalar_select %p1068, %s37, 2
        %s1070 = smul.addr %s1069, 16
        %s1071 = smul.addr %s1070, 4
        %s1072 = scalar_lea.vmem %s3, %s1071
        %p1073 = scmp.lt.s32.totalorder %s37, 2
        %s1074 = scalar_select %p1073, %s37, 2
        %s1075 = scalar_lea.vmem %s4, %s1074
        %p1076 = scmp.lt.s32.totalorder %s37, 2
        %s1077 = scalar_select %p1076, %s37, 2
        %s1078 = smul.addr %s1077, 48
        %s1079 = smul.addr %s1078, 4
        %s1080 = scalar_lea.vmem %s5, %s1079
        %p1081 = scmp.lt.s32.totalorder %s37, 2
        %s1082 = scalar_select %p1081, %s37, 2
        %s1083 = smul.addr %s1082, 3
        %s1084 = scalar_lea.vmem %s6, %s1083
        %p1085 = scmp.lt.s32.totalorder %s37, 2
        %s1086 = scalar_select %p1085, %s37, 2
        %s1087 = smul.addr %s1086, 4
        %s1088 = smul.addr %s1087, 8
        %s1089 = scalar_lea.vmem %s7, %s1088
        %p1090 = scmp.lt.s32.totalorder %s37, 2
        %s1091 = scalar_select %p1090, %s37, 2
        %s1092 = smul.addr %s1091, 4
        %s1093 = smul.addr %s1092, 8
        %s1094 = scalar_lea.vmem %s8, %s1093
        %p1095 = scmp.lt.s32.totalorder %s37, 2
        %s1096 = scalar_select %p1095, %s37, 2
        %s1097 = smul.addr %s1096, 4
        %s1098 = smul.addr %s1097, 8
        %s1099 = scalar_lea.vmem %s9, %s1098
        %p1100 = scmp.lt.s32.totalorder %s37, 2
        %s1101 = scalar_select %p1100, %s37, 2
        %s1102 = smul.addr %s1101, 32
        %s1103 = smul.addr %s1102, 4
        %s1104 = scalar_lea.vmem %s10, %s1103
        %p1105 = scmp.lt.s32.totalorder %s37, 2
        %s1106 = scalar_select %p1105, %s37, 2
        %s1107 = smul.addr %s1106, 16
        %s1108 = smul.addr %s1107, 4
        %s1109 = scalar_lea.vmem %s11, %s1108
        %p1110 = scmp.lt.s32.totalorder %s37, 2
        %s1111 = scalar_select %p1110, %s37, 2
        %s1112 = smul.addr %s1111, 16
        %s1113 = smul.addr %s1112, 4
        %s1114 = scalar_lea.vmem %s12, %s1113
        %p1115 = scmp.lt.s32.totalorder %s37, 2
        %s1116 = scalar_select %p1115, %s37, 2
        %s1117 = scalar_lea.vmem %s13, %s1116
        %p1118 = scmp.lt.s32.totalorder %s37, 2
        %s1119 = scalar_select %p1118, %s37, 2
        %s1120 = smul.addr %s1119, 48
        %s1121 = smul.addr %s1120, 4
        %s1122 = scalar_lea.vmem %s14, %s1121
        %p1123 = scmp.lt.s32.totalorder %s37, 2
        %s1124 = scalar_select %p1123, %s37, 2
        %s1125 = smul.addr %s1124, 3
        %s1126 = scalar_lea.vmem %s15, %s1125
        %p1127 = scmp.lt.s32.totalorder %s38, 1
        %s1128 = scalar_select %p1127, %s38, 1
        %s1129 = smul.addr %s1128, 8
        %s1130 = scalar_lea.vmem %s20, %s1129
        %p1132 = scmp.lt.s32.totalorder %s37, 0
        %s1133 = ssub.s32 0, %s37
        %s1134 = scalar_select %p1132, %s1133, %s37
        %s1135 = sand.u32 %s1134, 1
        %s1136 = ssub.s32 0, %s1135
        %s1137 = scalar_select %p1132, %s1136, %s1135
        %p1138 = scmp.ne.s32.totalorder %s1137, 0
        %p1139 = scmp.lt.s32.totalorder %s1137, 0
        %p1140 = pnand %p1139, %p1138
        %p1141 = pneg %p1140
        %s1142 = sadd.s32 %s1137, 2
        %s1143 = scalar_select %p1141, %s1142, %s1137
        %s1144 = ssub.s32 1, %s1143
        %s1145 = smul.u32 %s38, 8
        %p1146 = scmp.eq.s32.totalorder %s37, 0
        %p1147 = scmp.eq.s32.totalorder %s38, 0
        %p1148 = pnand %p1146, %p1147
        %p1149 = pneg %p1148
        // Predicated region
        $region139: #{painn_forward.1} parent=133 // pred_check
          _
        $region140: #{painn_forward.1} parent=133 // pred_check_branch
          %1151 = sbr.rel (%p1148) target = $region142
        $region141: #{painn_forward.1} parent=133 // pred_region
          %v1152 = vld [vmem:[%s0] sm:$0xff]
          %v1153 = vld [vmem:[%s0 + $0x8] sm:$0xff]
          %1154 = vst [vmem:[#allocation2] sm:$0xff] %v1152
          %1155 = vst [vmem:[#allocation2 + $0x8] sm:$0xff] %v1153
          %1156 = vst [vmem:[#allocation3] sm:$0xff] 0.0
          %1157 = vst [vmem:[#allocation3 + $0x8] sm:$0xff] 0.0
          %1158 = vst [vmem:[#allocation3 + $0x10] sm:$0xff] 0.0
          %1159 = vst [vmem:[#allocation3 + $0x18] sm:$0xff] 0.0
          %1160 = vst [vmem:[#allocation3 + $0x20] sm:$0xff] 0.0
          %1161 = vst [vmem:[#allocation3 + $0x28] sm:$0xff] 0.0
        $region142: #{painn_forward.1} parent=133 // pred_fallthru
          _
        // Predicated region
        $region143: #{painn_forward.1} parent=133 // pred_check
          %p1162 = pneg %p1147
        $region144: #{painn_forward.1} parent=133 // pred_check_branch
          %1164 = sbr.rel (%p1162) target = $region146
        $region145: #{painn_forward.1} parent=133 // pred_region
          %s1165 = smul.u32 %s1143, 16
          %s1166 = scalar_lea.vmem [#allocation2], %s1165
          %v1167 = vld [vmem:[%s1166] sm:$0xff]
          %v1168 = vld [vmem:[%s1166 + $0x8] sm:$0xff]
          %v1169 = vpack.c.bf16 %v1168, %v1167
          %v1170 = vld [vmem:[%s1072] sm:$0xf]
          %v1171 = vld [vmem:[%s1072 + $0x4] sm:$0xf]
          %v1172 = vld [vmem:[%s1072 + $0x8] sm:$0xf]
          %v1173 = vld [vmem:[%s1072 + $0xc] sm:$0xf]
          %v1174 = vld [vmem:[%s1072 + $0x10] sm:$0xf]
          %v1175 = vld [vmem:[%s1072 + $0x14] sm:$0xf]
          %v1176 = vld [vmem:[%s1072 + $0x18] sm:$0xf]
          %v1177 = vld [vmem:[%s1072 + $0x1c] sm:$0xf]
          %v1178 = vld [vmem:[%s1072 + $0x20] sm:$0xf]
          %v1179 = vld [vmem:[%s1072 + $0x24] sm:$0xf]
          %v1180 = vld [vmem:[%s1072 + $0x28] sm:$0xf]
          %v1181 = vld [vmem:[%s1072 + $0x2c] sm:$0xf]
          %v1182 = vld [vmem:[%s1072 + $0x30] sm:$0xf]
          %v1183 = vld [vmem:[%s1072 + $0x34] sm:$0xf]
          %v1184 = vld [vmem:[%s1072 + $0x38] sm:$0xf]
          %v1185 = vld [vmem:[%s1072 + $0x3c] sm:$0xf]
          %v1186 = vld [vmem:[%s1075] sm:$0x1]
          %v1188 = vlaneseq
          %v1189 = vshrl.u32 %v1188, 7
          %v1190 = vsub.s32 0, %v1189
          %v1191 = vrot.slane %v1186, %v1190
          %v1209 = vunpack.c.l.b16 %v1170
          %v1210 = vunpack.c.l.b16 %v1171
          %v1211 = vunpack.c.l.b16 %v1172
          %v1212 = vunpack.c.l.b16 %v1173
          %v1213 = vunpack.c.l.b16 %v1174
          %v1214 = vunpack.c.l.b16 %v1175
          %v1215 = vunpack.c.l.b16 %v1176
          %v1216 = vunpack.c.l.b16 %v1177
          %v1217 = vunpack.c.l.b16 %v1178
          %v1218 = vunpack.c.l.b16 %v1179
          %v1219 = vunpack.c.l.b16 %v1180
          %v1220 = vunpack.c.l.b16 %v1181
          %v1221 = vunpack.c.l.b16 %v1182
          %v1222 = vunpack.c.l.b16 %v1183
          %v1223 = vunpack.c.l.b16 %v1184
          %v1224 = vunpack.c.l.b16 %v1185
          %v1225 = vpack.c.b16 %v1210, %v1209
          %v1226 = vpack.c.b16 %v1212, %v1211
          %v1227 = vpack.c.b16 %v1214, %v1213
          %v1228 = vpack.c.b16 %v1216, %v1215
          %v1229 = vpack.c.b16 %v1218, %v1217
          %v1230 = vpack.c.b16 %v1220, %v1219
          %v1231 = vpack.c.b16 %v1222, %v1221
          %v1232 = vpack.c.b16 %v1224, %v1223
          %1241 = vmatprep.subr.bf16.mxu0 0
          %1242 = vmatpush1.bf16.msra.mxu0 %v1232
          %1243 = vmatprep.subr.bf16.mxu0 0
          %1244 = vmatpush1.bf16.msra.mxu0 %v1231
          %1245 = vmatprep.subr.bf16.mxu0 0
          %1246 = vmatpush1.bf16.msra.mxu0 %v1230
          %1247 = vmatprep.subr.bf16.mxu0 0
          %1248 = vmatpush1.bf16.msra.mxu0 %v1229
          %1249 = vmatprep.subr.bf16.mxu0 0
          %1250 = vmatpush1.bf16.msra.mxu0 %v1228
          %1251 = vmatprep.subr.bf16.mxu0 0
          %1252 = vmatpush1.bf16.msra.mxu0 %v1227
          %1253 = vmatprep.subr.bf16.mxu0 0
          %1254 = vmatpush1.bf16.msra.mxu0 %v1226
          %1255 = vmatprep.subr.bf16.mxu0 0
          %1256 = vmatpush1.bf16.msra.mxu0 %v1225
          %1257 = vmatprep.subr.bf16.mxu0 0
          %1258 = vmatpush2.bf16.msra.mxu0 0
          %1259 = vmatprep.subr.bf16.mxu0 0
          %1260 = vmatpush2.bf16.msra.mxu0 0
          %1261 = vmatprep.subr.bf16.mxu0 0
          %1262 = vmatpush2.bf16.msra.mxu0 0
          %1263 = vmatprep.subr.bf16.mxu0 0
          %1264 = vmatpush2.bf16.msra.mxu0 0
          %1265 = vmatprep.subr.bf16.mxu0 0
          %1266 = vmatpush2.bf16.msra.mxu0 0
          %1267 = vmatprep.subr.bf16.mxu0 0
          %1268 = vmatpush2.bf16.msra.mxu0 0
          %1269 = vmatprep.subr.bf16.mxu0 0
          %1270 = vmatpush2.bf16.msra.mxu0 0
          %1271 = vmatprep.subr.bf16.mxu0 0
          %1272 = vmatpush2.bf16.msra.mxu0 0
          %1273 = vmatprep.mubr.bf16.mxu0 0
          %1274 = vmatmul.mubr.bf16.gmra.mxu0 %v1169
          %v1275 = vpop.f32.mrf.mxu0
          %v1276 = vadd.f32 %v1191, %v1275
          %v1277 = vpop.f32.mrf.mxu0
          %v1278 = vpop.f32.mrf.mxu0
          %v1279 = vadd.f32 %v1191, %v1278
          %v1280 = vpop.f32.mrf.mxu0
          %1281 = vdwg.mxu0
          %v1282 = vxor.u32 %v1276, 2147483648
          %v1283 = vxor.u32 %v1279, 2147483648
          %v1284 = vmul.f32 %v1282, 1.442695
          %v1285 = vpow.pop %v1284
          %v1286 = vmul.f32 %v1283, 1.442695
          %v1287 = vpow.pop %v1286
          %v1288 = vadd.f32 %v1285, 1.0
          %v1289 = vadd.f32 %v1287, 1.0
          %v1290 = vrcp.pop %v1288
          %v1291 = vmul.f32 1.0, %v1290
          %v1292 = vrcp.pop %v1289
          %v1293 = vmul.f32 1.0, %v1292
          %v1294 = vmul.f32 %v1276, %v1291
          %v1295 = vmul.f32 %v1279, %v1293
          %v1296 = vpack.c.bf16 %v1295, %v1294
          %v1297 = vld [vmem:[%s1080] sm:$0xff]
          %v1298 = vld [vmem:[%s1080 + $0x8] sm:$0xf]
          %v1299 = vld [vmem:[%s1080 + $0xc] sm:$0xff]
          %v1300 = vld [vmem:[%s1080 + $0x14] sm:$0xf]
          %v1301 = vld [vmem:[%s1080 + $0x18] sm:$0xff]
          %v1302 = vld [vmem:[%s1080 + $0x20] sm:$0xf]
          %v1303 = vld [vmem:[%s1080 + $0x24] sm:$0xff]
          %v1304 = vld [vmem:[%s1080 + $0x2c] sm:$0xf]
          %v1305 = vld [vmem:[%s1080 + $0x30] sm:$0xff]
          %v1306 = vld [vmem:[%s1080 + $0x38] sm:$0xf]
          %v1307 = vld [vmem:[%s1080 + $0x3c] sm:$0xff]
          %v1308 = vld [vmem:[%s1080 + $0x44] sm:$0xf]
          %v1309 = vld [vmem:[%s1080 + $0x48] sm:$0xff]
          %v1310 = vld [vmem:[%s1080 + $0x50] sm:$0xf]
          %v1311 = vld [vmem:[%s1080 + $0x54] sm:$0xff]
          %v1312 = vld [vmem:[%s1080 + $0x5c] sm:$0xf]
          %v1313 = vld [vmem:[%s1080 + $0x60] sm:$0xff]
          %v1314 = vld [vmem:[%s1080 + $0x68] sm:$0xf]
          %v1315 = vld [vmem:[%s1080 + $0x6c] sm:$0xff]
          %v1316 = vld [vmem:[%s1080 + $0x74] sm:$0xf]
          %v1317 = vld [vmem:[%s1080 + $0x78] sm:$0xff]
          %v1318 = vld [vmem:[%s1080 + $0x80] sm:$0xf]
          %v1319 = vld [vmem:[%s1080 + $0x84] sm:$0xff]
          %v1320 = vld [vmem:[%s1080 + $0x8c] sm:$0xf]
          %v1321 = vld [vmem:[%s1080 + $0x90] sm:$0xff]
          %v1322 = vld [vmem:[%s1080 + $0x98] sm:$0xf]
          %v1323 = vld [vmem:[%s1080 + $0x9c] sm:$0xff]
          %v1324 = vld [vmem:[%s1080 + $0xa4] sm:$0xf]
          %v1325 = vld [vmem:[%s1080 + $0xa8] sm:$0xff]
          %v1326 = vld [vmem:[%s1080 + $0xb0] sm:$0xf]
          %v1327 = vld [vmem:[%s1080 + $0xb4] sm:$0xff]
          %v1328 = vld [vmem:[%s1080 + $0xbc] sm:$0xf]
          %v1329 = vld [vmem:[%s1084] sm:$0x7]
          %v1331 = vlaneseq
          %v1332 = vshrl.u32 %v1331, 7
          %v1333 = vsub.s32 0, %v1332
          %v1334 = vrot.slane %v1329, %v1333
          %v1335 = vlaneseq
          %v1336 = vshrl.u32 %v1335, 7
          %v1337 = vsub.s32 1, %v1336
          %v1338 = vrot.slane %v1329, %v1337
          %v1339 = vlaneseq
          %v1340 = vshrl.u32 %v1339, 7
          %v1341 = vsub.s32 2, %v1340
          %v1342 = vrot.slane %v1329, %v1341
          %v1378 = vunpack.c.l.b16 %v1297
          %v1379 = vunpack.c.h.b16 %v1297
          %v1380 = vunpack.c.l.b16 %v1298
          %v1381 = vunpack.c.l.b16 %v1299
          %v1382 = vunpack.c.h.b16 %v1299
          %v1383 = vunpack.c.l.b16 %v1300
          %v1384 = vunpack.c.l.b16 %v1301
          %v1385 = vunpack.c.h.b16 %v1301
          %v1386 = vunpack.c.l.b16 %v1302
          %v1387 = vunpack.c.l.b16 %v1303
          %v1388 = vunpack.c.h.b16 %v1303
          %v1389 = vunpack.c.l.b16 %v1304
          %v1390 = vunpack.c.l.b16 %v1305
          %v1391 = vunpack.c.h.b16 %v1305
          %v1392 = vunpack.c.l.b16 %v1306
          %v1393 = vunpack.c.l.b16 %v1307
          %v1394 = vunpack.c.h.b16 %v1307
          %v1395 = vunpack.c.l.b16 %v1308
          %v1396 = vunpack.c.l.b16 %v1309
          %v1397 = vunpack.c.h.b16 %v1309
          %v1398 = vunpack.c.l.b16 %v1310
          %v1399 = vunpack.c.l.b16 %v1311
          %v1400 = vunpack.c.h.b16 %v1311
          %v1401 = vunpack.c.l.b16 %v1312
          %v1402 = vunpack.c.l.b16 %v1313
          %v1403 = vunpack.c.h.b16 %v1313
          %v1404 = vunpack.c.l.b16 %v1314
          %v1405 = vunpack.c.l.b16 %v1315
          %v1406 = vunpack.c.h.b16 %v1315
          %v1407 = vunpack.c.l.b16 %v1316
          %v1408 = vunpack.c.l.b16 %v1317
          %v1409 = vunpack.c.h.b16 %v1317
          %v1410 = vunpack.c.l.b16 %v1318
          %v1411 = vunpack.c.l.b16 %v1319
          %v1412 = vunpack.c.h.b16 %v1319
          %v1413 = vunpack.c.l.b16 %v1320
          %v1414 = vunpack.c.l.b16 %v1321
          %v1415 = vunpack.c.h.b16 %v1321
          %v1416 = vunpack.c.l.b16 %v1322
          %v1417 = vunpack.c.l.b16 %v1323
          %v1418 = vunpack.c.h.b16 %v1323
          %v1419 = vunpack.c.l.b16 %v1324
          %v1420 = vunpack.c.l.b16 %v1325
          %v1421 = vunpack.c.h.b16 %v1325
          %v1422 = vunpack.c.l.b16 %v1326
          %v1423 = vunpack.c.l.b16 %v1327
          %v1424 = vunpack.c.h.b16 %v1327
          %v1425 = vunpack.c.l.b16 %v1328
          %v1426 = vpack.c.b16 %v1381, %v1378
          %v1427 = vpack.c.b16 %v1382, %v1379
          %v1428 = vpack.c.b16 %v1383, %v1380
          %v1429 = vpack.c.b16 %v1387, %v1384
          %v1430 = vpack.c.b16 %v1388, %v1385
          %v1431 = vpack.c.b16 %v1389, %v1386
          %v1432 = vpack.c.b16 %v1393, %v1390
          %v1433 = vpack.c.b16 %v1394, %v1391
          %v1434 = vpack.c.b16 %v1395, %v1392
          %v1435 = vpack.c.b16 %v1399, %v1396
          %v1436 = vpack.c.b16 %v1400, %v1397
          %v1437 = vpack.c.b16 %v1401, %v1398
          %v1438 = vpack.c.b16 %v1405, %v1402
          %v1439 = vpack.c.b16 %v1406, %v1403
          %v1440 = vpack.c.b16 %v1407, %v1404
          %v1441 = vpack.c.b16 %v1411, %v1408
          %v1442 = vpack.c.b16 %v1412, %v1409
          %v1443 = vpack.c.b16 %v1413, %v1410
          %v1444 = vpack.c.b16 %v1417, %v1414
          %v1445 = vpack.c.b16 %v1418, %v1415
          %v1446 = vpack.c.b16 %v1419, %v1416
          %v1447 = vpack.c.b16 %v1423, %v1420
          %v1448 = vpack.c.b16 %v1424, %v1421
          %v1449 = vpack.c.b16 %v1425, %v1422
          %1474 = vmatprep.subr.bf16.mxu0 %v1448
          %1475 = vmatpush1.bf16.msra.mxu0 %v1447
          %1476 = vmatprep.subr.bf16.mxu0 %v1445
          %1477 = vmatpush1.bf16.msra.mxu0 %v1444
          %1478 = vmatprep.subr.bf16.mxu0 %v1442
          %1479 = vmatpush1.bf16.msra.mxu0 %v1441
          %1480 = vmatprep.subr.bf16.mxu0 %v1439
          %1481 = vmatpush1.bf16.msra.mxu0 %v1438
          %1482 = vmatprep.subr.bf16.mxu0 %v1436
          %1483 = vmatpush1.bf16.msra.mxu0 %v1435
          %1484 = vmatprep.subr.bf16.mxu0 %v1433
          %1485 = vmatpush1.bf16.msra.mxu0 %v1432
          %1486 = vmatprep.subr.bf16.mxu0 %v1430
          %1487 = vmatpush1.bf16.msra.mxu0 %v1429
          %1488 = vmatprep.subr.bf16.mxu0 %v1427
          %1489 = vmatpush1.bf16.msra.mxu0 %v1426
          %1490 = vmatprep.subr.bf16.mxu0 0
          %1491 = vmatpush2.bf16.msra.mxu0 0
          %1492 = vmatprep.subr.bf16.mxu0 0
          %1493 = vmatpush2.bf16.msra.mxu0 0
          %1494 = vmatprep.subr.bf16.mxu0 0
          %1495 = vmatpush2.bf16.msra.mxu0 0
          %1496 = vmatprep.subr.bf16.mxu0 0
          %1497 = vmatpush2.bf16.msra.mxu0 0
          %1498 = vmatprep.subr.bf16.mxu0 0
          %1499 = vmatpush2.bf16.msra.mxu0 0
          %1500 = vmatprep.subr.bf16.mxu0 0
          %1501 = vmatpush2.bf16.msra.mxu0 0
          %1502 = vmatprep.subr.bf16.mxu0 0
          %1503 = vmatpush2.bf16.msra.mxu0 0
          %1504 = vmatprep.subr.bf16.mxu0 0
          %1505 = vmatpush2.bf16.msra.mxu0 0
          %1506 = vmatprep.mubr.bf16.mxu0 0
          %1507 = vmatmul.mubr.bf16.gmra.mxu0 %v1296
          %v1508 = vpop.f32.mrf.mxu0
          %v1509 = vadd.f32 %v1334, %v1508
          %v1510 = vpop.f32.mrf.mxu0
          %v1511 = vadd.f32 %v1338, %v1510
          %v1512 = vpop.f32.mrf.mxu0
          %v1513 = vadd.f32 %v1334, %v1512
          %v1514 = vpop.f32.mrf.mxu0
          %v1515 = vadd.f32 %v1338, %v1514
          %1516 = vdwg.mxu0
          %1517 = vmatprep.subr.bf16.mxu0 0
          %1518 = vmatpush1.bf16.msra.mxu0 %v1449
          %1519 = vmatprep.subr.bf16.mxu0 0
          %1520 = vmatpush1.bf16.msra.mxu0 %v1446
          %1521 = vmatprep.subr.bf16.mxu0 0
          %1522 = vmatpush1.bf16.msra.mxu0 %v1443
          %1523 = vmatprep.subr.bf16.mxu0 0
          %1524 = vmatpush1.bf16.msra.mxu0 %v1440
          %1525 = vmatprep.subr.bf16.mxu0 0
          %1526 = vmatpush1.bf16.msra.mxu0 %v1437
          %1527 = vmatprep.subr.bf16.mxu0 0
          %1528 = vmatpush1.bf16.msra.mxu0 %v1434
          %1529 = vmatprep.subr.bf16.mxu0 0
          %1530 = vmatpush1.bf16.msra.mxu0 %v1431
          %1531 = vmatprep.subr.bf16.mxu0 0
          %1532 = vmatpush1.bf16.msra.mxu0 %v1428
          %1533 = vmatprep.subr.bf16.mxu0 0
          %1534 = vmatpush2.bf16.msra.mxu0 0
          %1535 = vmatprep.subr.bf16.mxu0 0
          %1536 = vmatpush2.bf16.msra.mxu0 0
          %1537 = vmatprep.subr.bf16.mxu0 0
          %1538 = vmatpush2.bf16.msra.mxu0 0
          %1539 = vmatprep.subr.bf16.mxu0 0
          %1540 = vmatpush2.bf16.msra.mxu0 0
          %1541 = vmatprep.subr.bf16.mxu0 0
          %1542 = vmatpush2.bf16.msra.mxu0 0
          %1543 = vmatprep.subr.bf16.mxu0 0
          %1544 = vmatpush2.bf16.msra.mxu0 0
          %1545 = vmatprep.subr.bf16.mxu0 0
          %1546 = vmatpush2.bf16.msra.mxu0 0
          %1547 = vmatprep.subr.bf16.mxu0 0
          %1548 = vmatpush2.bf16.msra.mxu0 0
          %1549 = vmatprep.mubr.bf16.mxu0 0
          %1550 = vmatmul.mubr.bf16.gmra.mxu0 %v1296
          %v1551 = vpop.f32.mrf.mxu0
          %v1552 = vadd.f32 %v1342, %v1551
          %v1553 = vpop.f32.mrf.mxu0
          %v1554 = vpop.f32.mrf.mxu0
          %v1555 = vadd.f32 %v1342, %v1554
          %v1556 = vpop.f32.mrf.mxu0
          %1557 = vdwg.mxu0
          %1558 = vst [vmem:[#allocation4] sm:$0xff] %v1509
          %1559 = vst [vmem:[#allocation4 + $0x8] sm:$0xff] %v1511
          %1560 = vst [vmem:[#allocation4 + $0x10] sm:$0xff] %v1552
          %1561 = vst [vmem:[#allocation4 + $0x18] sm:$0xff] %v1513
          %1562 = vst [vmem:[#allocation4 + $0x20] sm:$0xff] %v1515
          %1563 = vst [vmem:[#allocation4 + $0x28] sm:$0xff] %v1555
        $region146: #{painn_forward.1} parent=133 // pred_fallthru
          _
        %v1564 = vld [vmem:[#allocation4] sm:$0xff]
        %v1565 = vld [vmem:[#allocation4 + $0x8] sm:$0xff]
        %v1566 = vld [vmem:[#allocation4 + $0x10] sm:$0xff]
        %v1567 = vld [vmem:[#allocation4 + $0x18] sm:$0xff]
        %v1568 = vld [vmem:[#allocation4 + $0x20] sm:$0xff]
        %v1569 = vld [vmem:[#allocation4 + $0x28] sm:$0xff]
        %v1570 = vld [vmem:[%s1065] sm:$0xff]
        %v1571 = vld [vmem:[%s1065 + $0x8] sm:$0xff]
        %v1572 = vld [vmem:[%s1065 + $0x10] sm:$0xff]
        %v1573 = vld [vmem:[%s1065 + $0x18] sm:$0xff]
        %v1574 = vld [vmem:[%s1065 + $0x20] sm:$0xff]
        %v1575 = vld [vmem:[%s1065 + $0x28] sm:$0xff]
        %v1576 = vld [vmem:[%s1065 + $0x30] sm:$0xff]
        %v1577 = vld [vmem:[%s1065 + $0x38] sm:$0xff]
        %v1578 = vld [vmem:[%s1065 + $0x40] sm:$0xff]
        %v1579 = vld [vmem:[%s1065 + $0x48] sm:$0xff]
        %v1580 = vld [vmem:[%s1065 + $0x50] sm:$0xff]
        %v1581 = vld [vmem:[%s1065 + $0x58] sm:$0xff]
        %v1582 = vld [vmem:[%s1065 + $0x60] sm:$0xff]
        %v1583 = vld [vmem:[%s1065 + $0x68] sm:$0xff]
        %v1584 = vld [vmem:[%s1065 + $0x70] sm:$0xff]
        %v1585 = vld [vmem:[%s1065 + $0x78] sm:$0xff]
        %v1586 = vld [vmem:[%s1089] sm:$0xff]
        %v1587 = vld [vmem:[%s1089 + $0x8] sm:$0xff]
        %v1588 = vld [vmem:[%s1089 + $0x10] sm:$0xff]
        %v1589 = vld [vmem:[%s1089 + $0x18] sm:$0xff]
        %vm1590 = vcmask 261120
        %v1592 = vsel %vm1590, %v1570, 0
        %v1595 = vsel %vm1590, %v1571, 0
        %v1598 = vsel %vm1590, %v1572, 0
        %v1601 = vsel %vm1590, %v1573, 0
        %v1604 = vsel %vm1590, %v1574, 0
        %v1607 = vsel %vm1590, %v1575, 0
        %v1610 = vsel %vm1590, %v1576, 0
        %v1613 = vsel %vm1590, %v1577, 0
        %v1616 = vsel %vm1590, %v1578, 0
        %v1619 = vsel %vm1590, %v1579, 0
        %v1622 = vsel %vm1590, %v1580, 0
        %v1625 = vsel %vm1590, %v1581, 0
        %v1628 = vsel %vm1590, %v1582, 0
        %v1631 = vsel %vm1590, %v1583, 0
        %v1634 = vsel %vm1590, %v1584, 0
        %v1637 = vsel %vm1590, %v1585, 0
        %1639 = vmatprep.subr.mxu0 0.0
        %1640 = vmatpush1.msra.mxu0 0.0
        %1641 = vmatprep.subr.mxu0 0.0
        %1642 = vmatpush1.msra.mxu0 0.0
        %1643 = vmatprep.subr.mxu0 0.0
        %1644 = vmatpush1.msra.mxu0 0.0
        %1645 = vmatprep.subr.mxu0 0.0
        %1646 = vmatpush1.msra.mxu0 0.0
        %1647 = vmatprep.subr.mxu0 0.0
        %1648 = vmatpush1.msra.mxu0 0.0
        %1649 = vmatprep.subr.mxu0 0.0
        %1650 = vmatpush1.msra.mxu0 0.0
        %1651 = vmatprep.subr.mxu0 0.0
        %1652 = vmatpush1.msra.mxu0 0.0
        %1653 = vmatprep.subr.mxu0 0.0
        %1654 = vmatpush1.msra.mxu0 0.0
        %1655 = vmatprep.subr.mxu0 0.0
        %1656 = vmatpush1.msra.mxu0 0.0
        %1657 = vmatprep.subr.mxu0 0.0
        %1658 = vmatpush1.msra.mxu0 0.0
        %1659 = vmatprep.subr.mxu0 0.0
        %1660 = vmatpush1.msra.mxu0 0.0
        %1661 = vmatprep.subr.mxu0 0.0
        %1662 = vmatpush1.msra.mxu0 0.0
        %1663 = vmatprep.subr.mxu0 0.0
        %1664 = vmatpush1.msra.mxu0 %v1589
        %1665 = vmatprep.subr.mxu0 0.0
        %1666 = vmatpush1.msra.mxu0 %v1588
        %1667 = vmatprep.subr.mxu0 0.0
        %1668 = vmatpush1.msra.mxu0 %v1587
        %1669 = vmatprep.subr.mxu0 0.0
        %1670 = vmatpush1.msra.mxu0 %v1586
        %1671 = vmatprep.subr.mxu0 0.0
        %1672 = vmatpush2.msra.mxu0 0.0
        %1673 = vmatprep.subr.mxu0 0.0
        %1674 = vmatpush2.msra.mxu0 0.0
        %1675 = vmatprep.subr.mxu0 0.0
        %1676 = vmatpush2.msra.mxu0 0.0
        %1677 = vmatprep.subr.mxu0 0.0
        %1678 = vmatpush2.msra.mxu0 0.0
        %1679 = vmatprep.subr.mxu0 0.0
        %1680 = vmatpush2.msra.mxu0 0.0
        %1681 = vmatprep.subr.mxu0 0.0
        %1682 = vmatpush2.msra.mxu0 0.0
        %1683 = vmatprep.subr.mxu0 0.0
        %1684 = vmatpush2.msra.mxu0 0.0
        %1685 = vmatprep.subr.mxu0 0.0
        %1686 = vmatpush2.msra.mxu0 0.0
        %1687 = vmatprep.subr.mxu0 0.0
        %1688 = vmatpush2.msra.mxu0 0.0
        %1689 = vmatprep.subr.mxu0 0.0
        %1690 = vmatpush2.msra.mxu0 0.0
        %1691 = vmatprep.subr.mxu0 0.0
        %1692 = vmatpush2.msra.mxu0 0.0
        %1693 = vmatprep.subr.mxu0 0.0
        %1694 = vmatpush2.msra.mxu0 0.0
        %1695 = vmatprep.subr.mxu0 0.0
        %1696 = vmatpush2.msra.mxu0 0.0
        %1697 = vmatprep.subr.mxu0 0.0
        %1698 = vmatpush2.msra.mxu0 0.0
        %1699 = vmatprep.subr.mxu0 0.0
        %1700 = vmatpush2.msra.mxu0 0.0
        %1701 = vmatprep.subr.mxu0 0.0
        %1702 = vmatpush2.msra.mxu0 0.0
        %1703 = vmatprep.mubr.f32.mxu0 0.0
        %1704 = vmatmul.mubr.f32.gmra.mxu0 %v1592
        %v1705 = vpop.f32.mrf.mxu0
        %v1706 = vadd.f32 0.0, %v1705
        %v1707 = vpop.f32.mrf.mxu0
        %1708 = vmatprep.mubr.f32.mxu0 0.0
        %1709 = vmatmul.mubr.f32.gmra.mxu0 %v1595
        %v1710 = vpop.f32.mrf.mxu0
        %v1711 = vadd.f32 0.0, %v1710
        %v1712 = vpop.f32.mrf.mxu0
        %1713 = vmatprep.mubr.f32.mxu0 0.0
        %1714 = vmatmul.mubr.f32.gmra.mxu0 %v1598
        %v1715 = vpop.f32.mrf.mxu0
        %v1716 = vadd.f32 0.0, %v1715
        %v1717 = vpop.f32.mrf.mxu0
        %1718 = vmatprep.mubr.f32.mxu0 0.0
        %1719 = vmatmul.mubr.f32.gmra.mxu0 %v1601
        %v1720 = vpop.f32.mrf.mxu0
        %v1721 = vadd.f32 0.0, %v1720
        %v1722 = vpop.f32.mrf.mxu0
        %1723 = vmatprep.mubr.f32.mxu0 0.0
        %1724 = vmatmul.mubr.f32.gmra.mxu0 %v1604
        %v1725 = vpop.f32.mrf.mxu0
        %v1726 = vadd.f32 0.0, %v1725
        %v1727 = vpop.f32.mrf.mxu0
        %1728 = vmatprep.mubr.f32.mxu0 0.0
        %1729 = vmatmul.mubr.f32.gmra.mxu0 %v1607
        %v1730 = vpop.f32.mrf.mxu0
        %v1731 = vadd.f32 0.0, %v1730
        %v1732 = vpop.f32.mrf.mxu0
        %1733 = vmatprep.mubr.f32.mxu0 0.0
        %1734 = vmatmul.mubr.f32.gmra.mxu0 %v1610
        %v1735 = vpop.f32.mrf.mxu0
        %v1736 = vadd.f32 0.0, %v1735
        %v1737 = vpop.f32.mrf.mxu0
        %1738 = vmatprep.mubr.f32.mxu0 0.0
        %1739 = vmatmul.mubr.f32.gmra.mxu0 %v1613
        %v1740 = vpop.f32.mrf.mxu0
        %v1741 = vadd.f32 0.0, %v1740
        %v1742 = vpop.f32.mrf.mxu0
        %1743 = vmatprep.mubr.f32.mxu0 0.0
        %1744 = vmatmul.mubr.f32.gmra.mxu0 %v1616
        %v1745 = vpop.f32.mrf.mxu0
        %v1746 = vadd.f32 0.0, %v1745
        %v1747 = vpop.f32.mrf.mxu0
        %1748 = vmatprep.mubr.f32.mxu0 0.0
        %1749 = vmatmul.mubr.f32.gmra.mxu0 %v1619
        %v1750 = vpop.f32.mrf.mxu0
        %v1751 = vadd.f32 0.0, %v1750
        %v1752 = vpop.f32.mrf.mxu0
        %1753 = vmatprep.mubr.f32.mxu0 0.0
        %1754 = vmatmul.mubr.f32.gmra.mxu0 %v1622
        %v1755 = vpop.f32.mrf.mxu0
        %v1756 = vadd.f32 0.0, %v1755
        %v1757 = vpop.f32.mrf.mxu0
        %1758 = vmatprep.mubr.f32.mxu0 0.0
        %1759 = vmatmul.mubr.f32.gmra.mxu0 %v1625
        %v1760 = vpop.f32.mrf.mxu0
        %v1761 = vadd.f32 0.0, %v1760
        %v1762 = vpop.f32.mrf.mxu0
        %1763 = vmatprep.mubr.f32.mxu0 0.0
        %1764 = vmatmul.mubr.f32.gmra.mxu0 %v1628
        %v1765 = vpop.f32.mrf.mxu0
        %v1766 = vadd.f32 0.0, %v1765
        %v1767 = vpop.f32.mrf.mxu0
        %1768 = vmatprep.mubr.f32.mxu0 0.0
        %1769 = vmatmul.mubr.f32.gmra.mxu0 %v1631
        %v1770 = vpop.f32.mrf.mxu0
        %v1771 = vadd.f32 0.0, %v1770
        %v1772 = vpop.f32.mrf.mxu0
        %1773 = vmatprep.mubr.f32.mxu0 0.0
        %1774 = vmatmul.mubr.f32.gmra.mxu0 %v1634
        %v1775 = vpop.f32.mrf.mxu0
        %v1776 = vadd.f32 0.0, %v1775
        %v1777 = vpop.f32.mrf.mxu0
        %1778 = vmatprep.mubr.f32.mxu0 0.0
        %1779 = vmatmul.mubr.f32.gmra.mxu0 %v1637
        %v1780 = vpop.f32.mrf.mxu0
        %v1781 = vadd.f32 0.0, %v1780
        %v1782 = vpop.f32.mrf.mxu0
        %1783 = vdwg.mxu0
        %v1784 = vld [vmem:[%s1094] sm:$0xff]
        %v1785 = vld [vmem:[%s1094 + $0x8] sm:$0xff]
        %v1786 = vld [vmem:[%s1094 + $0x10] sm:$0xff]
        %v1787 = vld [vmem:[%s1094 + $0x18] sm:$0xff]
        %1788 = vmatprep.subr.mxu0 0.0
        %1789 = vmatpush1.msra.mxu0 0.0
        %1790 = vmatprep.subr.mxu0 0.0
        %1791 = vmatpush1.msra.mxu0 0.0
        %1792 = vmatprep.subr.mxu0 0.0
        %1793 = vmatpush1.msra.mxu0 0.0
        %1794 = vmatprep.subr.mxu0 0.0
        %1795 = vmatpush1.msra.mxu0 0.0
        %1796 = vmatprep.subr.mxu0 0.0
        %1797 = vmatpush1.msra.mxu0 0.0
        %1798 = vmatprep.subr.mxu0 0.0
        %1799 = vmatpush1.msra.mxu0 0.0
        %1800 = vmatprep.subr.mxu0 0.0
        %1801 = vmatpush1.msra.mxu0 0.0
        %1802 = vmatprep.subr.mxu0 0.0
        %1803 = vmatpush1.msra.mxu0 0.0
        %1804 = vmatprep.subr.mxu0 0.0
        %1805 = vmatpush1.msra.mxu0 0.0
        %1806 = vmatprep.subr.mxu0 0.0
        %1807 = vmatpush1.msra.mxu0 0.0
        %1808 = vmatprep.subr.mxu0 0.0
        %1809 = vmatpush1.msra.mxu0 0.0
        %1810 = vmatprep.subr.mxu0 0.0
        %1811 = vmatpush1.msra.mxu0 0.0
        %1812 = vmatprep.subr.mxu0 0.0
        %1813 = vmatpush1.msra.mxu0 %v1787
        %1814 = vmatprep.subr.mxu0 0.0
        %1815 = vmatpush1.msra.mxu0 %v1786
        %1816 = vmatprep.subr.mxu0 0.0
        %1817 = vmatpush1.msra.mxu0 %v1785
        %1818 = vmatprep.subr.mxu0 0.0
        %1819 = vmatpush1.msra.mxu0 %v1784
        %1820 = vmatprep.subr.mxu0 0.0
        %1821 = vmatpush2.msra.mxu0 0.0
        %1822 = vmatprep.subr.mxu0 0.0
        %1823 = vmatpush2.msra.mxu0 0.0
        %1824 = vmatprep.subr.mxu0 0.0
        %1825 = vmatpush2.msra.mxu0 0.0
        %1826 = vmatprep.subr.mxu0 0.0
        %1827 = vmatpush2.msra.mxu0 0.0
        %1828 = vmatprep.subr.mxu0 0.0
        %1829 = vmatpush2.msra.mxu0 0.0
        %1830 = vmatprep.subr.mxu0 0.0
        %1831 = vmatpush2.msra.mxu0 0.0
        %1832 = vmatprep.subr.mxu0 0.0
        %1833 = vmatpush2.msra.mxu0 0.0
        %1834 = vmatprep.subr.mxu0 0.0
        %1835 = vmatpush2.msra.mxu0 0.0
        %1836 = vmatprep.subr.mxu0 0.0
        %1837 = vmatpush2.msra.mxu0 0.0
        %1838 = vmatprep.subr.mxu0 0.0
        %1839 = vmatpush2.msra.mxu0 0.0
        %1840 = vmatprep.subr.mxu0 0.0
        %1841 = vmatpush2.msra.mxu0 0.0
        %1842 = vmatprep.subr.mxu0 0.0
        %1843 = vmatpush2.msra.mxu0 0.0
        %1844 = vmatprep.subr.mxu0 0.0
        %1845 = vmatpush2.msra.mxu0 0.0
        %1846 = vmatprep.subr.mxu0 0.0
        %1847 = vmatpush2.msra.mxu0 0.0
        %1848 = vmatprep.subr.mxu0 0.0
        %1849 = vmatpush2.msra.mxu0 0.0
        %1850 = vmatprep.subr.mxu0 0.0
        %1851 = vmatpush2.msra.mxu0 0.0
        %1852 = vmatprep.mubr.f32.mxu0 0.0
        %1853 = vmatmul.mubr.f32.gmra.mxu0 %v1592
        %v1854 = vpop.f32.mrf.mxu0
        %v1855 = vadd.f32 0.0, %v1854
        %v1856 = vpop.f32.mrf.mxu0
        %1857 = vmatprep.mubr.f32.mxu0 0.0
        %1858 = vmatmul.mubr.f32.gmra.mxu0 %v1595
        %v1859 = vpop.f32.mrf.mxu0
        %v1860 = vadd.f32 0.0, %v1859
        %v1861 = vpop.f32.mrf.mxu0
        %1862 = vmatprep.mubr.f32.mxu0 0.0
        %1863 = vmatmul.mubr.f32.gmra.mxu0 %v1598
        %v1864 = vpop.f32.mrf.mxu0
        %v1865 = vadd.f32 0.0, %v1864
        %v1866 = vpop.f32.mrf.mxu0
        %1867 = vmatprep.mubr.f32.mxu0 0.0
        %1868 = vmatmul.mubr.f32.gmra.mxu0 %v1601
        %v1869 = vpop.f32.mrf.mxu0
        %v1870 = vadd.f32 0.0, %v1869
        %v1871 = vpop.f32.mrf.mxu0
        %1872 = vmatprep.mubr.f32.mxu0 0.0
        %1873 = vmatmul.mubr.f32.gmra.mxu0 %v1604
        %v1874 = vpop.f32.mrf.mxu0
        %v1875 = vadd.f32 0.0, %v1874
        %v1876 = vpop.f32.mrf.mxu0
        %1877 = vmatprep.mubr.f32.mxu0 0.0
        %1878 = vmatmul.mubr.f32.gmra.mxu0 %v1607
        %v1879 = vpop.f32.mrf.mxu0
        %v1880 = vadd.f32 0.0, %v1879
        %v1881 = vpop.f32.mrf.mxu0
        %1882 = vmatprep.mubr.f32.mxu0 0.0
        %1883 = vmatmul.mubr.f32.gmra.mxu0 %v1610
        %v1884 = vpop.f32.mrf.mxu0
        %v1885 = vadd.f32 0.0, %v1884
        %v1886 = vpop.f32.mrf.mxu0
        %1887 = vmatprep.mubr.f32.mxu0 0.0
        %1888 = vmatmul.mubr.f32.gmra.mxu0 %v1613
        %v1889 = vpop.f32.mrf.mxu0
        %v1890 = vadd.f32 0.0, %v1889
        %v1891 = vpop.f32.mrf.mxu0
        %1892 = vmatprep.mubr.f32.mxu0 0.0
        %1893 = vmatmul.mubr.f32.gmra.mxu0 %v1616
        %v1894 = vpop.f32.mrf.mxu0
        %v1895 = vadd.f32 0.0, %v1894
        %v1896 = vpop.f32.mrf.mxu0
        %1897 = vmatprep.mubr.f32.mxu0 0.0
        %1898 = vmatmul.mubr.f32.gmra.mxu0 %v1619
        %v1899 = vpop.f32.mrf.mxu0
        %v1900 = vadd.f32 0.0, %v1899
        %v1901 = vpop.f32.mrf.mxu0
        %1902 = vmatprep.mubr.f32.mxu0 0.0
        %1903 = vmatmul.mubr.f32.gmra.mxu0 %v1622
        %v1904 = vpop.f32.mrf.mxu0
        %v1905 = vadd.f32 0.0, %v1904
        %v1906 = vpop.f32.mrf.mxu0
        %1907 = vmatprep.mubr.f32.mxu0 0.0
        %1908 = vmatmul.mubr.f32.gmra.mxu0 %v1625
        %v1909 = vpop.f32.mrf.mxu0
        %v1910 = vadd.f32 0.0, %v1909
        %v1911 = vpop.f32.mrf.mxu0
        %1912 = vmatprep.mubr.f32.mxu0 0.0
        %1913 = vmatmul.mubr.f32.gmra.mxu0 %v1628
        %v1914 = vpop.f32.mrf.mxu0
        %v1915 = vadd.f32 0.0, %v1914
        %v1916 = vpop.f32.mrf.mxu0
        %1917 = vmatprep.mubr.f32.mxu0 0.0
        %1918 = vmatmul.mubr.f32.gmra.mxu0 %v1631
        %v1919 = vpop.f32.mrf.mxu0
        %v1920 = vadd.f32 0.0, %v1919
        %v1921 = vpop.f32.mrf.mxu0
        %1922 = vmatprep.mubr.f32.mxu0 0.0
        %1923 = vmatmul.mubr.f32.gmra.mxu0 %v1634
        %v1924 = vpop.f32.mrf.mxu0
        %v1925 = vadd.f32 0.0, %v1924
        %v1926 = vpop.f32.mrf.mxu0
        %1927 = vmatprep.mubr.f32.mxu0 0.0
        %1928 = vmatmul.mubr.f32.gmra.mxu0 %v1637
        %v1929 = vpop.f32.mrf.mxu0
        %v1930 = vadd.f32 0.0, %v1929
        %v1931 = vpop.f32.mrf.mxu0
        %1932 = vdwg.mxu0
        %v1933 = vmul.f32 %v1706, %v1564
        %v1934 = vmul.f32 %v1711, %v1567
        %v1935 = vmul.f32 %v1716, %v1564
        %v1936 = vmul.f32 %v1721, %v1567
        %v1937 = vmul.f32 %v1726, %v1564
        %v1938 = vmul.f32 %v1731, %v1567
        %v1939 = vmul.f32 %v1736, %v1564
        %v1940 = vmul.f32 %v1741, %v1567
        %v1941 = vmul.f32 %v1746, %v1564
        %v1942 = vmul.f32 %v1751, %v1567
        %v1943 = vmul.f32 %v1756, %v1564
        %v1944 = vmul.f32 %v1761, %v1567
        %v1945 = vmul.f32 %v1766, %v1564
        %v1946 = vmul.f32 %v1771, %v1567
        %v1947 = vmul.f32 %v1776, %v1564
        %v1948 = vmul.f32 %v1781, %v1567
        %v1949 = vadd.f32 %v1933, %v1934
        %v1950 = vrot.slane %v1949, 4
        %v1951 = vadd.f32 %v1949, %v1950
        %v1952 = vrot.slane %v1951, 2
        %v1953 = vadd.f32 %v1951, %v1952
        %v1954 = vrot.slane %v1953, 1
        %v1955 = vadd.f32 %v1953, %v1954
        %v1956 = vadd.f32 %v1935, %v1936
        %v1957 = vrot.slane %v1956, 4
        %v1958 = vadd.f32 %v1956, %v1957
        %v1959 = vrot.slane %v1958, 2
        %v1960 = vadd.f32 %v1958, %v1959
        %v1961 = vrot.slane %v1960, 1
        %v1962 = vadd.f32 %v1960, %v1961
        %v1963 = vadd.f32 %v1937, %v1938
        %v1964 = vrot.slane %v1963, 4
        %v1965 = vadd.f32 %v1963, %v1964
        %v1966 = vrot.slane %v1965, 2
        %v1967 = vadd.f32 %v1965, %v1966
        %v1968 = vrot.slane %v1967, 1
        %v1969 = vadd.f32 %v1967, %v1968
        %v1970 = vadd.f32 %v1939, %v1940
        %v1971 = vrot.slane %v1970, 4
        %v1972 = vadd.f32 %v1970, %v1971
        %v1973 = vrot.slane %v1972, 2
        %v1974 = vadd.f32 %v1972, %v1973
        %v1975 = vrot.slane %v1974, 1
        %v1976 = vadd.f32 %v1974, %v1975
        %v1977 = vadd.f32 %v1941, %v1942
        %v1978 = vrot.slane %v1977, 4
        %v1979 = vadd.f32 %v1977, %v1978
        %v1980 = vrot.slane %v1979, 2
        %v1981 = vadd.f32 %v1979, %v1980
        %v1982 = vrot.slane %v1981, 1
        %v1983 = vadd.f32 %v1981, %v1982
        %v1984 = vadd.f32 %v1943, %v1944
        %v1985 = vrot.slane %v1984, 4
        %v1986 = vadd.f32 %v1984, %v1985
        %v1987 = vrot.slane %v1986, 2
        %v1988 = vadd.f32 %v1986, %v1987
        %v1989 = vrot.slane %v1988, 1
        %v1990 = vadd.f32 %v1988, %v1989
        %v1991 = vadd.f32 %v1945, %v1946
        %v1992 = vrot.slane %v1991, 4
        %v1993 = vadd.f32 %v1991, %v1992
        %v1994 = vrot.slane %v1993, 2
        %v1995 = vadd.f32 %v1993, %v1994
        %v1996 = vrot.slane %v1995, 1
        %v1997 = vadd.f32 %v1995, %v1996
        %v1998 = vadd.f32 %v1947, %v1948
        %v1999 = vrot.slane %v1998, 4
        %v2000 = vadd.f32 %v1998, %v1999
        %v2001 = vrot.slane %v2000, 2
        %v2002 = vadd.f32 %v2000, %v2001
        %v2003 = vrot.slane %v2002, 1
        %v2004 = vadd.f32 %v2002, %v2003
        %v2005 = vld [vmem:[%s1099] sm:$0xff]
        %v2006 = vld [vmem:[%s1099 + $0x8] sm:$0xff]
        %v2007 = vld [vmem:[%s1099 + $0x10] sm:$0xff]
        %v2008 = vld [vmem:[%s1099 + $0x18] sm:$0xff]
        %v2009 = vld [vmem:[%s943] sm:$0xff]
        %v2010 = vld [vmem:[%s943 + $0x8] sm:$0xff]
        %v2011 = vld [vmem:[%s943 + $0x10] sm:$0xff]
        %v2012 = vld [vmem:[%s943 + $0x18] sm:$0xff]
        %v2013 = vld [vmem:[%s943 + $0x20] sm:$0xff]
        %v2014 = vld [vmem:[%s943 + $0x28] sm:$0xff]
        %v2015 = vld [vmem:[%s943 + $0x30] sm:$0xff]
        %v2016 = vld [vmem:[%s943 + $0x38] sm:$0xff]
        %v2017 = vld [vmem:[%s943 + $0x40] sm:$0xff]
        %v2018 = vld [vmem:[%s943 + $0x48] sm:$0xff]
        %v2019 = vld [vmem:[%s943 + $0x50] sm:$0xff]
        %v2020 = vld [vmem:[%s943 + $0x58] sm:$0xff]
        %v2021 = vld [vmem:[%s943 + $0x60] sm:$0xff]
        %v2022 = vld [vmem:[%s943 + $0x68] sm:$0xff]
        %v2023 = vld [vmem:[%s943 + $0x70] sm:$0xff]
        %v2024 = vld [vmem:[%s943 + $0x78] sm:$0xff]
        %v2026 = vsel %vm1590, %v2009, 0
        %v2029 = vsel %vm1590, %v2010, 0
        %v2032 = vsel %vm1590, %v2011, 0
        %v2035 = vsel %vm1590, %v2012, 0
        %v2038 = vsel %vm1590, %v2013, 0
        %v2041 = vsel %vm1590, %v2014, 0
        %v2044 = vsel %vm1590, %v2015, 0
        %v2047 = vsel %vm1590, %v2016, 0
        %v2050 = vsel %vm1590, %v2017, 0
        %v2053 = vsel %vm1590, %v2018, 0
        %v2056 = vsel %vm1590, %v2019, 0
        %v2059 = vsel %vm1590, %v2020, 0
        %v2062 = vsel %vm1590, %v2021, 0
        %v2065 = vsel %vm1590, %v2022, 0
        %v2068 = vsel %vm1590, %v2023, 0
        %v2071 = vsel %vm1590, %v2024, 0
        %2073 = vmatprep.subr.mxu0 0.0
        %2074 = vmatpush1.msra.mxu0 0.0
        %2075 = vmatprep.subr.mxu0 0.0
        %2076 = vmatpush1.msra.mxu0 0.0
        %2077 = vmatprep.subr.mxu0 0.0
        %2078 = vmatpush1.msra.mxu0 0.0
        %2079 = vmatprep.subr.mxu0 0.0
        %2080 = vmatpush1.msra.mxu0 0.0
        %2081 = vmatprep.subr.mxu0 0.0
        %2082 = vmatpush1.msra.mxu0 0.0
        %2083 = vmatprep.subr.mxu0 0.0
        %2084 = vmatpush1.msra.mxu0 0.0
        %2085 = vmatprep.subr.mxu0 0.0
        %2086 = vmatpush1.msra.mxu0 0.0
        %2087 = vmatprep.subr.mxu0 0.0
        %2088 = vmatpush1.msra.mxu0 0.0
        %2089 = vmatprep.subr.mxu0 0.0
        %2090 = vmatpush1.msra.mxu0 0.0
        %2091 = vmatprep.subr.mxu0 0.0
        %2092 = vmatpush1.msra.mxu0 0.0
        %2093 = vmatprep.subr.mxu0 0.0
        %2094 = vmatpush1.msra.mxu0 0.0
        %2095 = vmatprep.subr.mxu0 0.0
        %2096 = vmatpush1.msra.mxu0 0.0
        %2097 = vmatprep.subr.mxu0 0.0
        %2098 = vmatpush1.msra.mxu0 %v2008
        %2099 = vmatprep.subr.mxu0 0.0
        %2100 = vmatpush1.msra.mxu0 %v2007
        %2101 = vmatprep.subr.mxu0 0.0
        %2102 = vmatpush1.msra.mxu0 %v2006
        %2103 = vmatprep.subr.mxu0 0.0
        %2104 = vmatpush1.msra.mxu0 %v2005
        %2105 = vmatprep.subr.mxu0 0.0
        %2106 = vmatpush2.msra.mxu0 0.0
        %2107 = vmatprep.subr.mxu0 0.0
        %2108 = vmatpush2.msra.mxu0 0.0
        %2109 = vmatprep.subr.mxu0 0.0
        %2110 = vmatpush2.msra.mxu0 0.0
        %2111 = vmatprep.subr.mxu0 0.0
        %2112 = vmatpush2.msra.mxu0 0.0
        %2113 = vmatprep.subr.mxu0 0.0
        %2114 = vmatpush2.msra.mxu0 0.0
        %2115 = vmatprep.subr.mxu0 0.0
        %2116 = vmatpush2.msra.mxu0 0.0
        %2117 = vmatprep.subr.mxu0 0.0
        %2118 = vmatpush2.msra.mxu0 0.0
        %2119 = vmatprep.subr.mxu0 0.0
        %2120 = vmatpush2.msra.mxu0 0.0
        %2121 = vmatprep.subr.mxu0 0.0
        %2122 = vmatpush2.msra.mxu0 0.0
        %2123 = vmatprep.subr.mxu0 0.0
        %2124 = vmatpush2.msra.mxu0 0.0
        %2125 = vmatprep.subr.mxu0 0.0
        %2126 = vmatpush2.msra.mxu0 0.0
        %2127 = vmatprep.subr.mxu0 0.0
        %2128 = vmatpush2.msra.mxu0 0.0
        %2129 = vmatprep.subr.mxu0 0.0
        %2130 = vmatpush2.msra.mxu0 0.0
        %2131 = vmatprep.subr.mxu0 0.0
        %2132 = vmatpush2.msra.mxu0 0.0
        %2133 = vmatprep.subr.mxu0 0.0
        %2134 = vmatpush2.msra.mxu0 0.0
        %2135 = vmatprep.subr.mxu0 0.0
        %2136 = vmatpush2.msra.mxu0 0.0
        %2137 = vmatprep.mubr.f32.mxu0 0.0
        %2138 = vmatmul.mubr.f32.gmra.mxu0 %v2026
        %v2139 = vpop.f32.mrf.mxu0
        %v2140 = vadd.f32 0.0, %v2139
        %v2141 = vpop.f32.mrf.mxu0
        %2142 = vmatprep.mubr.f32.mxu0 0.0
        %2143 = vmatmul.mubr.f32.gmra.mxu0 %v2029
        %v2144 = vpop.f32.mrf.mxu0
        %v2145 = vadd.f32 0.0, %v2144
        %v2146 = vpop.f32.mrf.mxu0
        %2147 = vmatprep.mubr.f32.mxu0 0.0
        %2148 = vmatmul.mubr.f32.gmra.mxu0 %v2032
        %v2149 = vpop.f32.mrf.mxu0
        %v2150 = vadd.f32 0.0, %v2149
        %v2151 = vpop.f32.mrf.mxu0
        %2152 = vmatprep.mubr.f32.mxu0 0.0
        %2153 = vmatmul.mubr.f32.gmra.mxu0 %v2035
        %v2154 = vpop.f32.mrf.mxu0
        %v2155 = vadd.f32 0.0, %v2154
        %v2156 = vpop.f32.mrf.mxu0
        %2157 = vmatprep.mubr.f32.mxu0 0.0
        %2158 = vmatmul.mubr.f32.gmra.mxu0 %v2038
        %v2159 = vpop.f32.mrf.mxu0
        %v2160 = vadd.f32 0.0, %v2159
        %v2161 = vpop.f32.mrf.mxu0
        %2162 = vmatprep.mubr.f32.mxu0 0.0
        %2163 = vmatmul.mubr.f32.gmra.mxu0 %v2041
        %v2164 = vpop.f32.mrf.mxu0
        %v2165 = vadd.f32 0.0, %v2164
        %v2166 = vpop.f32.mrf.mxu0
        %2167 = vmatprep.mubr.f32.mxu0 0.0
        %2168 = vmatmul.mubr.f32.gmra.mxu0 %v2044
        %v2169 = vpop.f32.mrf.mxu0
        %v2170 = vadd.f32 0.0, %v2169
        %v2171 = vpop.f32.mrf.mxu0
        %2172 = vmatprep.mubr.f32.mxu0 0.0
        %2173 = vmatmul.mubr.f32.gmra.mxu0 %v2047
        %v2174 = vpop.f32.mrf.mxu0
        %v2175 = vadd.f32 0.0, %v2174
        %v2176 = vpop.f32.mrf.mxu0
        %2177 = vmatprep.mubr.f32.mxu0 0.0
        %2178 = vmatmul.mubr.f32.gmra.mxu0 %v2050
        %v2179 = vpop.f32.mrf.mxu0
        %v2180 = vadd.f32 0.0, %v2179
        %v2181 = vpop.f32.mrf.mxu0
        %2182 = vmatprep.mubr.f32.mxu0 0.0
        %2183 = vmatmul.mubr.f32.gmra.mxu0 %v2053
        %v2184 = vpop.f32.mrf.mxu0
        %v2185 = vadd.f32 0.0, %v2184
        %v2186 = vpop.f32.mrf.mxu0
        %2187 = vmatprep.mubr.f32.mxu0 0.0
        %2188 = vmatmul.mubr.f32.gmra.mxu0 %v2056
        %v2189 = vpop.f32.mrf.mxu0
        %v2190 = vadd.f32 0.0, %v2189
        %v2191 = vpop.f32.mrf.mxu0
        %2192 = vmatprep.mubr.f32.mxu0 0.0
        %2193 = vmatmul.mubr.f32.gmra.mxu0 %v2059
        %v2194 = vpop.f32.mrf.mxu0
        %v2195 = vadd.f32 0.0, %v2194
        %v2196 = vpop.f32.mrf.mxu0
        %2197 = vmatprep.mubr.f32.mxu0 0.0
        %2198 = vmatmul.mubr.f32.gmra.mxu0 %v2062
        %v2199 = vpop.f32.mrf.mxu0
        %v2200 = vadd.f32 0.0, %v2199
        %v2201 = vpop.f32.mrf.mxu0
        %2202 = vmatprep.mubr.f32.mxu0 0.0
        %2203 = vmatmul.mubr.f32.gmra.mxu0 %v2065
        %v2204 = vpop.f32.mrf.mxu0
        %v2205 = vadd.f32 0.0, %v2204
        %v2206 = vpop.f32.mrf.mxu0
        %2207 = vmatprep.mubr.f32.mxu0 0.0
        %2208 = vmatmul.mubr.f32.gmra.mxu0 %v2068
        %v2209 = vpop.f32.mrf.mxu0
        %v2210 = vadd.f32 0.0, %v2209
        %v2211 = vpop.f32.mrf.mxu0
        %2212 = vmatprep.mubr.f32.mxu0 0.0
        %2213 = vmatmul.mubr.f32.gmra.mxu0 %v2071
        %v2214 = vpop.f32.mrf.mxu0
        %v2215 = vadd.f32 0.0, %v2214
        %v2216 = vpop.f32.mrf.mxu0
        %2217 = vdwg.mxu0
        %v2218 = vmul.f32 %v2140, %v1566
        %v2219 = vmul.f32 %v2145, %v1569
        %v2220 = vmul.f32 %v2150, %v1566
        %v2221 = vmul.f32 %v2155, %v1569
        %v2222 = vmul.f32 %v2160, %v1566
        %v2223 = vmul.f32 %v2165, %v1569
        %v2224 = vmul.f32 %v2170, %v1566
        %v2225 = vmul.f32 %v2175, %v1569
        %v2226 = vmul.f32 %v2180, %v1566
        %v2227 = vmul.f32 %v2185, %v1569
        %v2228 = vmul.f32 %v2190, %v1566
        %v2229 = vmul.f32 %v2195, %v1569
        %v2230 = vmul.f32 %v2200, %v1566
        %v2231 = vmul.f32 %v2205, %v1569
        %v2232 = vmul.f32 %v2210, %v1566
        %v2233 = vmul.f32 %v2215, %v1569
        %v2234 = vadd.f32 %v2218, %v2219
        %v2235 = vrot.slane %v2234, 4
        %v2236 = vadd.f32 %v2234, %v2235
        %v2237 = vrot.slane %v2236, 2
        %v2238 = vadd.f32 %v2236, %v2237
        %v2239 = vrot.slane %v2238, 1
        %v2240 = vadd.f32 %v2238, %v2239
        %v2241 = vadd.f32 %v2220, %v2221
        %v2242 = vrot.slane %v2241, 4
        %v2243 = vadd.f32 %v2241, %v2242
        %v2244 = vrot.slane %v2243, 2
        %v2245 = vadd.f32 %v2243, %v2244
        %v2246 = vrot.slane %v2245, 1
        %v2247 = vadd.f32 %v2245, %v2246
        %v2248 = vadd.f32 %v2222, %v2223
        %v2249 = vrot.slane %v2248, 4
        %v2250 = vadd.f32 %v2248, %v2249
        %v2251 = vrot.slane %v2250, 2
        %v2252 = vadd.f32 %v2250, %v2251
        %v2253 = vrot.slane %v2252, 1
        %v2254 = vadd.f32 %v2252, %v2253
        %v2255 = vadd.f32 %v2224, %v2225
        %v2256 = vrot.slane %v2255, 4
        %v2257 = vadd.f32 %v2255, %v2256
        %v2258 = vrot.slane %v2257, 2
        %v2259 = vadd.f32 %v2257, %v2258
        %v2260 = vrot.slane %v2259, 1
        %v2261 = vadd.f32 %v2259, %v2260
        %v2262 = vadd.f32 %v2226, %v2227
        %v2263 = vrot.slane %v2262, 4
        %v2264 = vadd.f32 %v2262, %v2263
        %v2265 = vrot.slane %v2264, 2
        %v2266 = vadd.f32 %v2264, %v2265
        %v2267 = vrot.slane %v2266, 1
        %v2268 = vadd.f32 %v2266, %v2267
        %v2269 = vadd.f32 %v2228, %v2229
        %v2270 = vrot.slane %v2269, 4
        %v2271 = vadd.f32 %v2269, %v2270
        %v2272 = vrot.slane %v2271, 2
        %v2273 = vadd.f32 %v2271, %v2272
        %v2274 = vrot.slane %v2273, 1
        %v2275 = vadd.f32 %v2273, %v2274
        %v2276 = vadd.f32 %v2230, %v2231
        %v2277 = vrot.slane %v2276, 4
        %v2278 = vadd.f32 %v2276, %v2277
        %v2279 = vrot.slane %v2278, 2
        %v2280 = vadd.f32 %v2278, %v2279
        %v2281 = vrot.slane %v2280, 1
        %v2282 = vadd.f32 %v2280, %v2281
        %v2283 = vadd.f32 %v2232, %v2233
        %v2284 = vrot.slane %v2283, 4
        %v2285 = vadd.f32 %v2283, %v2284
        %v2286 = vrot.slane %v2285, 2
        %v2287 = vadd.f32 %v2285, %v2286
        %v2288 = vrot.slane %v2287, 1
        %v2289 = vadd.f32 %v2287, %v2288
        %vm2298 = vcmask 1041409
        %v2299 = vsel %vm2298, %v2247, %v2240
        %vm2300 = vcmask 1042434
        %v2301 = vsel %vm2300, %v2254, %v2299
        %vm2302 = vcmask 1043459
        %v2303 = vsel %vm2302, %v2261, %v2301
        %vm2304 = vcmask 1044484
        %v2305 = vsel %vm2304, %v2268, %v2303
        %vm2306 = vcmask 1045509
        %v2307 = vsel %vm2306, %v2275, %v2305
        %vm2308 = vcmask 1046534
        %v2309 = vsel %vm2308, %v2282, %v2307
        %vm2310 = vcmask 1047559
        %v2311 = vsel %vm2310, %v2289, %v2309
        %2313 = vst [vmem:[#allocation5] sm:$0xff] %v2311
        %s2314 = scalar_lea.vmem %s943, 128 [#allocation7]
        %v2315 = vld [vmem:[%s2314] sm:$0xff]
        %v2316 = vld [vmem:[%s2314 + $0x8] sm:$0xff]
        %v2317 = vld [vmem:[%s2314 + $0x10] sm:$0xff]
        %v2318 = vld [vmem:[%s2314 + $0x18] sm:$0xff]
        %v2319 = vld [vmem:[%s2314 + $0x20] sm:$0xff]
        %v2320 = vld [vmem:[%s2314 + $0x28] sm:$0xff]
        %v2321 = vld [vmem:[%s2314 + $0x30] sm:$0xff]
        %v2322 = vld [vmem:[%s2314 + $0x38] sm:$0xff]
        %v2323 = vld [vmem:[%s2314 + $0x40] sm:$0xff]
        %v2324 = vld [vmem:[%s2314 + $0x48] sm:$0xff]
        %v2325 = vld [vmem:[%s2314 + $0x50] sm:$0xff]
        %v2326 = vld [vmem:[%s2314 + $0x58] sm:$0xff]
        %v2327 = vld [vmem:[%s2314 + $0x60] sm:$0xff]
        %v2328 = vld [vmem:[%s2314 + $0x68] sm:$0xff]
        %v2329 = vld [vmem:[%s2314 + $0x70] sm:$0xff]
        %v2330 = vld [vmem:[%s2314 + $0x78] sm:$0xff]
        %v2332 = vsel %vm1590, %v2315, 0
        %v2335 = vsel %vm1590, %v2316, 0
        %v2338 = vsel %vm1590, %v2317, 0
        %v2341 = vsel %vm1590, %v2318, 0
        %v2344 = vsel %vm1590, %v2319, 0
        %v2347 = vsel %vm1590, %v2320, 0
        %v2350 = vsel %vm1590, %v2321, 0
        %v2353 = vsel %vm1590, %v2322, 0
        %v2356 = vsel %vm1590, %v2323, 0
        %v2359 = vsel %vm1590, %v2324, 0
        %v2362 = vsel %vm1590, %v2325, 0
        %v2365 = vsel %vm1590, %v2326, 0
        %v2368 = vsel %vm1590, %v2327, 0
        %v2371 = vsel %vm1590, %v2328, 0
        %v2374 = vsel %vm1590, %v2329, 0
        %v2377 = vsel %vm1590, %v2330, 0
        %2379 = vmatprep.subr.mxu0 0.0
        %2380 = vmatpush1.msra.mxu0 0.0
        %2381 = vmatprep.subr.mxu0 0.0
        %2382 = vmatpush1.msra.mxu0 0.0
        %2383 = vmatprep.subr.mxu0 0.0
        %2384 = vmatpush1.msra.mxu0 0.0
        %2385 = vmatprep.subr.mxu0 0.0
        %2386 = vmatpush1.msra.mxu0 0.0
        %2387 = vmatprep.subr.mxu0 0.0
        %2388 = vmatpush1.msra.mxu0 0.0
        %2389 = vmatprep.subr.mxu0 0.0
        %2390 = vmatpush1.msra.mxu0 0.0
        %2391 = vmatprep.subr.mxu0 0.0
        %2392 = vmatpush1.msra.mxu0 0.0
        %2393 = vmatprep.subr.mxu0 0.0
        %2394 = vmatpush1.msra.mxu0 0.0
        %2395 = vmatprep.subr.mxu0 0.0
        %2396 = vmatpush1.msra.mxu0 0.0
        %2397 = vmatprep.subr.mxu0 0.0
        %2398 = vmatpush1.msra.mxu0 0.0
        %2399 = vmatprep.subr.mxu0 0.0
        %2400 = vmatpush1.msra.mxu0 0.0
        %2401 = vmatprep.subr.mxu0 0.0
        %2402 = vmatpush1.msra.mxu0 0.0
        %2403 = vmatprep.subr.mxu0 0.0
        %2404 = vmatpush1.msra.mxu0 %v2008
        %2405 = vmatprep.subr.mxu0 0.0
        %2406 = vmatpush1.msra.mxu0 %v2007
        %2407 = vmatprep.subr.mxu0 0.0
        %2408 = vmatpush1.msra.mxu0 %v2006
        %2409 = vmatprep.subr.mxu0 0.0
        %2410 = vmatpush1.msra.mxu0 %v2005
        %2411 = vmatprep.subr.mxu0 0.0
        %2412 = vmatpush2.msra.mxu0 0.0
        %2413 = vmatprep.subr.mxu0 0.0
        %2414 = vmatpush2.msra.mxu0 0.0
        %2415 = vmatprep.subr.mxu0 0.0
        %2416 = vmatpush2.msra.mxu0 0.0
        %2417 = vmatprep.subr.mxu0 0.0
        %2418 = vmatpush2.msra.mxu0 0.0
        %2419 = vmatprep.subr.mxu0 0.0
        %2420 = vmatpush2.msra.mxu0 0.0
        %2421 = vmatprep.subr.mxu0 0.0
        %2422 = vmatpush2.msra.mxu0 0.0
        %2423 = vmatprep.subr.mxu0 0.0
        %2424 = vmatpush2.msra.mxu0 0.0
        %2425 = vmatprep.subr.mxu0 0.0
        %2426 = vmatpush2.msra.mxu0 0.0
        %2427 = vmatprep.subr.mxu0 0.0
        %2428 = vmatpush2.msra.mxu0 0.0
        %2429 = vmatprep.subr.mxu0 0.0
        %2430 = vmatpush2.msra.mxu0 0.0
        %2431 = vmatprep.subr.mxu0 0.0
        %2432 = vmatpush2.msra.mxu0 0.0
        %2433 = vmatprep.subr.mxu0 0.0
        %2434 = vmatpush2.msra.mxu0 0.0
        %2435 = vmatprep.subr.mxu0 0.0
        %2436 = vmatpush2.msra.mxu0 0.0
        %2437 = vmatprep.subr.mxu0 0.0
        %2438 = vmatpush2.msra.mxu0 0.0
        %2439 = vmatprep.subr.mxu0 0.0
        %2440 = vmatpush2.msra.mxu0 0.0
        %2441 = vmatprep.subr.mxu0 0.0
        %2442 = vmatpush2.msra.mxu0 0.0
        %2443 = vmatprep.mubr.f32.mxu0 0.0
        %2444 = vmatmul.mubr.f32.gmra.mxu0 %v2332
        %v2445 = vpop.f32.mrf.mxu0
        %v2446 = vadd.f32 0.0, %v2445
        %v2447 = vpop.f32.mrf.mxu0
        %2448 = vmatprep.mubr.f32.mxu0 0.0
        %2449 = vmatmul.mubr.f32.gmra.mxu0 %v2335
        %v2450 = vpop.f32.mrf.mxu0
        %v2451 = vadd.f32 0.0, %v2450
        %v2452 = vpop.f32.mrf.mxu0
        %2453 = vmatprep.mubr.f32.mxu0 0.0
        %2454 = vmatmul.mubr.f32.gmra.mxu0 %v2338
        %v2455 = vpop.f32.mrf.mxu0
        %v2456 = vadd.f32 0.0, %v2455
        %v2457 = vpop.f32.mrf.mxu0
        %2458 = vmatprep.mubr.f32.mxu0 0.0
        %2459 = vmatmul.mubr.f32.gmra.mxu0 %v2341
        %v2460 = vpop.f32.mrf.mxu0
        %v2461 = vadd.f32 0.0, %v2460
        %v2462 = vpop.f32.mrf.mxu0
        %2463 = vmatprep.mubr.f32.mxu0 0.0
        %2464 = vmatmul.mubr.f32.gmra.mxu0 %v2344
        %v2465 = vpop.f32.mrf.mxu0
        %v2466 = vadd.f32 0.0, %v2465
        %v2467 = vpop.f32.mrf.mxu0
        %2468 = vmatprep.mubr.f32.mxu0 0.0
        %2469 = vmatmul.mubr.f32.gmra.mxu0 %v2347
        %v2470 = vpop.f32.mrf.mxu0
        %v2471 = vadd.f32 0.0, %v2470
        %v2472 = vpop.f32.mrf.mxu0
        %2473 = vmatprep.mubr.f32.mxu0 0.0
        %2474 = vmatmul.mubr.f32.gmra.mxu0 %v2350
        %v2475 = vpop.f32.mrf.mxu0
        %v2476 = vadd.f32 0.0, %v2475
        %v2477 = vpop.f32.mrf.mxu0
        %2478 = vmatprep.mubr.f32.mxu0 0.0
        %2479 = vmatmul.mubr.f32.gmra.mxu0 %v2353
        %v2480 = vpop.f32.mrf.mxu0
        %v2481 = vadd.f32 0.0, %v2480
        %v2482 = vpop.f32.mrf.mxu0
        %2483 = vmatprep.mubr.f32.mxu0 0.0
        %2484 = vmatmul.mubr.f32.gmra.mxu0 %v2356
        %v2485 = vpop.f32.mrf.mxu0
        %v2486 = vadd.f32 0.0, %v2485
        %v2487 = vpop.f32.mrf.mxu0
        %2488 = vmatprep.mubr.f32.mxu0 0.0
        %2489 = vmatmul.mubr.f32.gmra.mxu0 %v2359
        %v2490 = vpop.f32.mrf.mxu0
        %v2491 = vadd.f32 0.0, %v2490
        %v2492 = vpop.f32.mrf.mxu0
        %2493 = vmatprep.mubr.f32.mxu0 0.0
        %2494 = vmatmul.mubr.f32.gmra.mxu0 %v2362
        %v2495 = vpop.f32.mrf.mxu0
        %v2496 = vadd.f32 0.0, %v2495
        %v2497 = vpop.f32.mrf.mxu0
        %2498 = vmatprep.mubr.f32.mxu0 0.0
        %2499 = vmatmul.mubr.f32.gmra.mxu0 %v2365
        %v2500 = vpop.f32.mrf.mxu0
        %v2501 = vadd.f32 0.0, %v2500
        %v2502 = vpop.f32.mrf.mxu0
        %2503 = vmatprep.mubr.f32.mxu0 0.0
        %2504 = vmatmul.mubr.f32.gmra.mxu0 %v2368
        %v2505 = vpop.f32.mrf.mxu0
        %v2506 = vadd.f32 0.0, %v2505
        %v2507 = vpop.f32.mrf.mxu0
        %2508 = vmatprep.mubr.f32.mxu0 0.0
        %2509 = vmatmul.mubr.f32.gmra.mxu0 %v2371
        %v2510 = vpop.f32.mrf.mxu0
        %v2511 = vadd.f32 0.0, %v2510
        %v2512 = vpop.f32.mrf.mxu0
        %2513 = vmatprep.mubr.f32.mxu0 0.0
        %2514 = vmatmul.mubr.f32.gmra.mxu0 %v2374
        %v2515 = vpop.f32.mrf.mxu0
        %v2516 = vadd.f32 0.0, %v2515
        %v2517 = vpop.f32.mrf.mxu0
        %2518 = vmatprep.mubr.f32.mxu0 0.0
        %2519 = vmatmul.mubr.f32.gmra.mxu0 %v2377
        %v2520 = vpop.f32.mrf.mxu0
        %v2521 = vadd.f32 0.0, %v2520
        %v2522 = vpop.f32.mrf.mxu0
        %2523 = vdwg.mxu0
        %v2524 = vmul.f32 %v2446, %v1566
        %v2525 = vmul.f32 %v2451, %v1569
        %v2526 = vmul.f32 %v2456, %v1566
        %v2527 = vmul.f32 %v2461, %v1569
        %v2528 = vmul.f32 %v2466, %v1566
        %v2529 = vmul.f32 %v2471, %v1569
        %v2530 = vmul.f32 %v2476, %v1566
        %v2531 = vmul.f32 %v2481, %v1569
        %v2532 = vmul.f32 %v2486, %v1566
        %v2533 = vmul.f32 %v2491, %v1569
        %v2534 = vmul.f32 %v2496, %v1566
        %v2535 = vmul.f32 %v2501, %v1569
        %v2536 = vmul.f32 %v2506, %v1566
        %v2537 = vmul.f32 %v2511, %v1569
        %v2538 = vmul.f32 %v2516, %v1566
        %v2539 = vmul.f32 %v2521, %v1569
        %v2540 = vadd.f32 %v2524, %v2525
        %v2541 = vrot.slane %v2540, 4
        %v2542 = vadd.f32 %v2540, %v2541
        %v2543 = vrot.slane %v2542, 2
        %v2544 = vadd.f32 %v2542, %v2543
        %v2545 = vrot.slane %v2544, 1
        %v2546 = vadd.f32 %v2544, %v2545
        %v2547 = vadd.f32 %v2526, %v2527
        %v2548 = vrot.slane %v2547, 4
        %v2549 = vadd.f32 %v2547, %v2548
        %v2550 = vrot.slane %v2549, 2
        %v2551 = vadd.f32 %v2549, %v2550
        %v2552 = vrot.slane %v2551, 1
        %v2553 = vadd.f32 %v2551, %v2552
        %v2554 = vadd.f32 %v2528, %v2529
        %v2555 = vrot.slane %v2554, 4
        %v2556 = vadd.f32 %v2554, %v2555
        %v2557 = vrot.slane %v2556, 2
        %v2558 = vadd.f32 %v2556, %v2557
        %v2559 = vrot.slane %v2558, 1
        %v2560 = vadd.f32 %v2558, %v2559
        %v2561 = vadd.f32 %v2530, %v2531
        %v2562 = vrot.slane %v2561, 4
        %v2563 = vadd.f32 %v2561, %v2562
        %v2564 = vrot.slane %v2563, 2
        %v2565 = vadd.f32 %v2563, %v2564
        %v2566 = vrot.slane %v2565, 1
        %v2567 = vadd.f32 %v2565, %v2566
        %v2568 = vadd.f32 %v2532, %v2533
        %v2569 = vrot.slane %v2568, 4
        %v2570 = vadd.f32 %v2568, %v2569
        %v2571 = vrot.slane %v2570, 2
        %v2572 = vadd.f32 %v2570, %v2571
        %v2573 = vrot.slane %v2572, 1
        %v2574 = vadd.f32 %v2572, %v2573
        %v2575 = vadd.f32 %v2534, %v2535
        %v2576 = vrot.slane %v2575, 4
        %v2577 = vadd.f32 %v2575, %v2576
        %v2578 = vrot.slane %v2577, 2
        %v2579 = vadd.f32 %v2577, %v2578
        %v2580 = vrot.slane %v2579, 1
        %v2581 = vadd.f32 %v2579, %v2580
        %v2582 = vadd.f32 %v2536, %v2537
        %v2583 = vrot.slane %v2582, 4
        %v2584 = vadd.f32 %v2582, %v2583
        %v2585 = vrot.slane %v2584, 2
        %v2586 = vadd.f32 %v2584, %v2585
        %v2587 = vrot.slane %v2586, 1
        %v2588 = vadd.f32 %v2586, %v2587
        %v2589 = vadd.f32 %v2538, %v2539
        %v2590 = vrot.slane %v2589, 4
        %v2591 = vadd.f32 %v2589, %v2590
        %v2592 = vrot.slane %v2591, 2
        %v2593 = vadd.f32 %v2591, %v2592
        %v2594 = vrot.slane %v2593, 1
        %v2595 = vadd.f32 %v2593, %v2594
        %v2604 = vsel %vm2298, %v2553, %v2546
        %v2605 = vsel %vm2300, %v2560, %v2604
        %v2606 = vsel %vm2302, %v2567, %v2605
        %v2607 = vsel %vm2304, %v2574, %v2606
        %v2608 = vsel %vm2306, %v2581, %v2607
        %v2609 = vsel %vm2308, %v2588, %v2608
        %v2610 = vsel %vm2310, %v2595, %v2609
        %s2612 = scalar_lea.vmem [#allocation5], 8
        %2613 = vst [vmem:[%s2612] sm:$0xff] %v2610
        %s2614 = scalar_lea.vmem %s943, 256 [#allocation7]
        %v2615 = vld [vmem:[%s2614] sm:$0xff]
        %v2616 = vld [vmem:[%s2614 + $0x8] sm:$0xff]
        %v2617 = vld [vmem:[%s2614 + $0x10] sm:$0xff]
        %v2618 = vld [vmem:[%s2614 + $0x18] sm:$0xff]
        %v2619 = vld [vmem:[%s2614 + $0x20] sm:$0xff]
        %v2620 = vld [vmem:[%s2614 + $0x28] sm:$0xff]
        %v2621 = vld [vmem:[%s2614 + $0x30] sm:$0xff]
        %v2622 = vld [vmem:[%s2614 + $0x38] sm:$0xff]
        %v2623 = vld [vmem:[%s2614 + $0x40] sm:$0xff]
        %v2624 = vld [vmem:[%s2614 + $0x48] sm:$0xff]
        %v2625 = vld [vmem:[%s2614 + $0x50] sm:$0xff]
        %v2626 = vld [vmem:[%s2614 + $0x58] sm:$0xff]
        %v2627 = vld [vmem:[%s2614 + $0x60] sm:$0xff]
        %v2628 = vld [vmem:[%s2614 + $0x68] sm:$0xff]
        %v2629 = vld [vmem:[%s2614 + $0x70] sm:$0xff]
        %v2630 = vld [vmem:[%s2614 + $0x78] sm:$0xff]
        %v2632 = vsel %vm1590, %v2615, 0
        %v2635 = vsel %vm1590, %v2616, 0
        %v2638 = vsel %vm1590, %v2617, 0
        %v2641 = vsel %vm1590, %v2618, 0
        %v2644 = vsel %vm1590, %v2619, 0
        %v2647 = vsel %vm1590, %v2620, 0
        %v2650 = vsel %vm1590, %v2621, 0
        %v2653 = vsel %vm1590, %v2622, 0
        %v2656 = vsel %vm1590, %v2623, 0
        %v2659 = vsel %vm1590, %v2624, 0
        %v2662 = vsel %vm1590, %v2625, 0
        %v2665 = vsel %vm1590, %v2626, 0
        %v2668 = vsel %vm1590, %v2627, 0
        %v2671 = vsel %vm1590, %v2628, 0
        %v2674 = vsel %vm1590, %v2629, 0
        %v2677 = vsel %vm1590, %v2630, 0
        %2679 = vmatprep.subr.mxu0 0.0
        %2680 = vmatpush1.msra.mxu0 0.0
        %2681 = vmatprep.subr.mxu0 0.0
        %2682 = vmatpush1.msra.mxu0 0.0
        %2683 = vmatprep.subr.mxu0 0.0
        %2684 = vmatpush1.msra.mxu0 0.0
        %2685 = vmatprep.subr.mxu0 0.0
        %2686 = vmatpush1.msra.mxu0 0.0
        %2687 = vmatprep.subr.mxu0 0.0
        %2688 = vmatpush1.msra.mxu0 0.0
        %2689 = vmatprep.subr.mxu0 0.0
        %2690 = vmatpush1.msra.mxu0 0.0
        %2691 = vmatprep.subr.mxu0 0.0
        %2692 = vmatpush1.msra.mxu0 0.0
        %2693 = vmatprep.subr.mxu0 0.0
        %2694 = vmatpush1.msra.mxu0 0.0
        %2695 = vmatprep.subr.mxu0 0.0
        %2696 = vmatpush1.msra.mxu0 0.0
        %2697 = vmatprep.subr.mxu0 0.0
        %2698 = vmatpush1.msra.mxu0 0.0
        %2699 = vmatprep.subr.mxu0 0.0
        %2700 = vmatpush1.msra.mxu0 0.0
        %2701 = vmatprep.subr.mxu0 0.0
        %2702 = vmatpush1.msra.mxu0 0.0
        %2703 = vmatprep.subr.mxu0 0.0
        %2704 = vmatpush1.msra.mxu0 %v2008
        %2705 = vmatprep.subr.mxu0 0.0
        %2706 = vmatpush1.msra.mxu0 %v2007
        %2707 = vmatprep.subr.mxu0 0.0
        %2708 = vmatpush1.msra.mxu0 %v2006
        %2709 = vmatprep.subr.mxu0 0.0
        %2710 = vmatpush1.msra.mxu0 %v2005
        %2711 = vmatprep.subr.mxu0 0.0
        %2712 = vmatpush2.msra.mxu0 0.0
        %2713 = vmatprep.subr.mxu0 0.0
        %2714 = vmatpush2.msra.mxu0 0.0
        %2715 = vmatprep.subr.mxu0 0.0
        %2716 = vmatpush2.msra.mxu0 0.0
        %2717 = vmatprep.subr.mxu0 0.0
        %2718 = vmatpush2.msra.mxu0 0.0
        %2719 = vmatprep.subr.mxu0 0.0
        %2720 = vmatpush2.msra.mxu0 0.0
        %2721 = vmatprep.subr.mxu0 0.0
        %2722 = vmatpush2.msra.mxu0 0.0
        %2723 = vmatprep.subr.mxu0 0.0
        %2724 = vmatpush2.msra.mxu0 0.0
        %2725 = vmatprep.subr.mxu0 0.0
        %2726 = vmatpush2.msra.mxu0 0.0
        %2727 = vmatprep.subr.mxu0 0.0
        %2728 = vmatpush2.msra.mxu0 0.0
        %2729 = vmatprep.subr.mxu0 0.0
        %2730 = vmatpush2.msra.mxu0 0.0
        %2731 = vmatprep.subr.mxu0 0.0
        %2732 = vmatpush2.msra.mxu0 0.0
        %2733 = vmatprep.subr.mxu0 0.0
        %2734 = vmatpush2.msra.mxu0 0.0
        %2735 = vmatprep.subr.mxu0 0.0
        %2736 = vmatpush2.msra.mxu0 0.0
        %2737 = vmatprep.subr.mxu0 0.0
        %2738 = vmatpush2.msra.mxu0 0.0
        %2739 = vmatprep.subr.mxu0 0.0
        %2740 = vmatpush2.msra.mxu0 0.0
        %2741 = vmatprep.subr.mxu0 0.0
        %2742 = vmatpush2.msra.mxu0 0.0
        %2743 = vmatprep.mubr.f32.mxu0 0.0
        %2744 = vmatmul.mubr.f32.gmra.mxu0 %v2632
        %v2745 = vpop.f32.mrf.mxu0
        %v2746 = vadd.f32 0.0, %v2745
        %v2747 = vpop.f32.mrf.mxu0
        %2748 = vmatprep.mubr.f32.mxu0 0.0
        %2749 = vmatmul.mubr.f32.gmra.mxu0 %v2635
        %v2750 = vpop.f32.mrf.mxu0
        %v2751 = vadd.f32 0.0, %v2750
        %v2752 = vpop.f32.mrf.mxu0
        %2753 = vmatprep.mubr.f32.mxu0 0.0
        %2754 = vmatmul.mubr.f32.gmra.mxu0 %v2638
        %v2755 = vpop.f32.mrf.mxu0
        %v2756 = vadd.f32 0.0, %v2755
        %v2757 = vpop.f32.mrf.mxu0
        %2758 = vmatprep.mubr.f32.mxu0 0.0
        %2759 = vmatmul.mubr.f32.gmra.mxu0 %v2641
        %v2760 = vpop.f32.mrf.mxu0
        %v2761 = vadd.f32 0.0, %v2760
        %v2762 = vpop.f32.mrf.mxu0
        %2763 = vmatprep.mubr.f32.mxu0 0.0
        %2764 = vmatmul.mubr.f32.gmra.mxu0 %v2644
        %v2765 = vpop.f32.mrf.mxu0
        %v2766 = vadd.f32 0.0, %v2765
        %v2767 = vpop.f32.mrf.mxu0
        %2768 = vmatprep.mubr.f32.mxu0 0.0
        %2769 = vmatmul.mubr.f32.gmra.mxu0 %v2647
        %v2770 = vpop.f32.mrf.mxu0
        %v2771 = vadd.f32 0.0, %v2770
        %v2772 = vpop.f32.mrf.mxu0
        %2773 = vmatprep.mubr.f32.mxu0 0.0
        %2774 = vmatmul.mubr.f32.gmra.mxu0 %v2650
        %v2775 = vpop.f32.mrf.mxu0
        %v2776 = vadd.f32 0.0, %v2775
        %v2777 = vpop.f32.mrf.mxu0
        %2778 = vmatprep.mubr.f32.mxu0 0.0
        %2779 = vmatmul.mubr.f32.gmra.mxu0 %v2653
        %v2780 = vpop.f32.mrf.mxu0
        %v2781 = vadd.f32 0.0, %v2780
        %v2782 = vpop.f32.mrf.mxu0
        %2783 = vmatprep.mubr.f32.mxu0 0.0
        %2784 = vmatmul.mubr.f32.gmra.mxu0 %v2656
        %v2785 = vpop.f32.mrf.mxu0
        %v2786 = vadd.f32 0.0, %v2785
        %v2787 = vpop.f32.mrf.mxu0
        %2788 = vmatprep.mubr.f32.mxu0 0.0
        %2789 = vmatmul.mubr.f32.gmra.mxu0 %v2659
        %v2790 = vpop.f32.mrf.mxu0
        %v2791 = vadd.f32 0.0, %v2790
        %v2792 = vpop.f32.mrf.mxu0
        %2793 = vmatprep.mubr.f32.mxu0 0.0
        %2794 = vmatmul.mubr.f32.gmra.mxu0 %v2662
        %v2795 = vpop.f32.mrf.mxu0
        %v2796 = vadd.f32 0.0, %v2795
        %v2797 = vpop.f32.mrf.mxu0
        %2798 = vmatprep.mubr.f32.mxu0 0.0
        %2799 = vmatmul.mubr.f32.gmra.mxu0 %v2665
        %v2800 = vpop.f32.mrf.mxu0
        %v2801 = vadd.f32 0.0, %v2800
        %v2802 = vpop.f32.mrf.mxu0
        %2803 = vmatprep.mubr.f32.mxu0 0.0
        %2804 = vmatmul.mubr.f32.gmra.mxu0 %v2668
        %v2805 = vpop.f32.mrf.mxu0
        %v2806 = vadd.f32 0.0, %v2805
        %v2807 = vpop.f32.mrf.mxu0
        %2808 = vmatprep.mubr.f32.mxu0 0.0
        %2809 = vmatmul.mubr.f32.gmra.mxu0 %v2671
        %v2810 = vpop.f32.mrf.mxu0
        %v2811 = vadd.f32 0.0, %v2810
        %v2812 = vpop.f32.mrf.mxu0
        %2813 = vmatprep.mubr.f32.mxu0 0.0
        %2814 = vmatmul.mubr.f32.gmra.mxu0 %v2674
        %v2815 = vpop.f32.mrf.mxu0
        %v2816 = vadd.f32 0.0, %v2815
        %v2817 = vpop.f32.mrf.mxu0
        %2818 = vmatprep.mubr.f32.mxu0 0.0
        %2819 = vmatmul.mubr.f32.gmra.mxu0 %v2677
        %v2820 = vpop.f32.mrf.mxu0
        %v2821 = vadd.f32 0.0, %v2820
        %v2822 = vpop.f32.mrf.mxu0
        %2823 = vdwg.mxu0
        %v2824 = vmul.f32 %v2746, %v1566
        %v2825 = vmul.f32 %v2751, %v1569
        %v2826 = vmul.f32 %v2756, %v1566
        %v2827 = vmul.f32 %v2761, %v1569
        %v2828 = vmul.f32 %v2766, %v1566
        %v2829 = vmul.f32 %v2771, %v1569
        %v2830 = vmul.f32 %v2776, %v1566
        %v2831 = vmul.f32 %v2781, %v1569
        %v2832 = vmul.f32 %v2786, %v1566
        %v2833 = vmul.f32 %v2791, %v1569
        %v2834 = vmul.f32 %v2796, %v1566
        %v2835 = vmul.f32 %v2801, %v1569
        %v2836 = vmul.f32 %v2806, %v1566
        %v2837 = vmul.f32 %v2811, %v1569
        %v2838 = vmul.f32 %v2816, %v1566
        %v2839 = vmul.f32 %v2821, %v1569
        %v2840 = vadd.f32 %v2824, %v2825
        %v2841 = vrot.slane %v2840, 4
        %v2842 = vadd.f32 %v2840, %v2841
        %v2843 = vrot.slane %v2842, 2
        %v2844 = vadd.f32 %v2842, %v2843
        %v2845 = vrot.slane %v2844, 1
        %v2846 = vadd.f32 %v2844, %v2845
        %v2847 = vadd.f32 %v2826, %v2827
        %v2848 = vrot.slane %v2847, 4
        %v2849 = vadd.f32 %v2847, %v2848
        %v2850 = vrot.slane %v2849, 2
        %v2851 = vadd.f32 %v2849, %v2850
        %v2852 = vrot.slane %v2851, 1
        %v2853 = vadd.f32 %v2851, %v2852
        %v2854 = vadd.f32 %v2828, %v2829
        %v2855 = vrot.slane %v2854, 4
        %v2856 = vadd.f32 %v2854, %v2855
        %v2857 = vrot.slane %v2856, 2
        %v2858 = vadd.f32 %v2856, %v2857
        %v2859 = vrot.slane %v2858, 1
        %v2860 = vadd.f32 %v2858, %v2859
        %v2861 = vadd.f32 %v2830, %v2831
        %v2862 = vrot.slane %v2861, 4
        %v2863 = vadd.f32 %v2861, %v2862
        %v2864 = vrot.slane %v2863, 2
        %v2865 = vadd.f32 %v2863, %v2864
        %v2866 = vrot.slane %v2865, 1
        %v2867 = vadd.f32 %v2865, %v2866
        %v2868 = vadd.f32 %v2832, %v2833
        %v2869 = vrot.slane %v2868, 4
        %v2870 = vadd.f32 %v2868, %v2869
        %v2871 = vrot.slane %v2870, 2
        %v2872 = vadd.f32 %v2870, %v2871
        %v2873 = vrot.slane %v2872, 1
        %v2874 = vadd.f32 %v2872, %v2873
        %v2875 = vadd.f32 %v2834, %v2835
        %v2876 = vrot.slane %v2875, 4
        %v2877 = vadd.f32 %v2875, %v2876
        %v2878 = vrot.slane %v2877, 2
        %v2879 = vadd.f32 %v2877, %v2878
        %v2880 = vrot.slane %v2879, 1
        %v2881 = vadd.f32 %v2879, %v2880
        %v2882 = vadd.f32 %v2836, %v2837
        %v2883 = vrot.slane %v2882, 4
        %v2884 = vadd.f32 %v2882, %v2883
        %v2885 = vrot.slane %v2884, 2
        %v2886 = vadd.f32 %v2884, %v2885
        %v2887 = vrot.slane %v2886, 1
        %v2888 = vadd.f32 %v2886, %v2887
        %v2889 = vadd.f32 %v2838, %v2839
        %v2890 = vrot.slane %v2889, 4
        %v2891 = vadd.f32 %v2889, %v2890
        %v2892 = vrot.slane %v2891, 2
        %v2893 = vadd.f32 %v2891, %v2892
        %v2894 = vrot.slane %v2893, 1
        %v2895 = vadd.f32 %v2893, %v2894
        %v2904 = vsel %vm2298, %v2853, %v2846
        %v2905 = vsel %vm2300, %v2860, %v2904
        %v2906 = vsel %vm2302, %v2867, %v2905
        %v2907 = vsel %vm2304, %v2874, %v2906
        %v2908 = vsel %vm2306, %v2881, %v2907
        %v2909 = vsel %vm2308, %v2888, %v2908
        %v2910 = vsel %vm2310, %v2895, %v2909
        %s2912 = scalar_lea.vmem [#allocation5], 16
        %2913 = vst [vmem:[%s2912] sm:$0xff] %v2910
        %p2914 = scmp.gt.s32.totalorder %s37, 0
        // Predicated region
        $region147: #{painn_forward.1} parent=133 // pred_check
          %p2915 = pneg %p2914
        $region148: #{painn_forward.1} parent=133 // pred_check_branch
          %2917 = sbr.rel (%p2915) target = $region150
        $region149: #{painn_forward.1} parent=133 // pred_region
          %v2918 = vmul.f32 %v1855, %v1565
          %v2919 = vmul.f32 %v1860, %v1568
          %v2920 = vmul.f32 %v1865, %v1565
          %v2921 = vmul.f32 %v1870, %v1568
          %v2922 = vmul.f32 %v1875, %v1565
          %v2923 = vmul.f32 %v1880, %v1568
          %v2924 = vmul.f32 %v1885, %v1565
          %v2925 = vmul.f32 %v1890, %v1568
          %v2926 = vmul.f32 %v1895, %v1565
          %v2927 = vmul.f32 %v1900, %v1568
          %v2928 = vmul.f32 %v1905, %v1565
          %v2929 = vmul.f32 %v1910, %v1568
          %v2930 = vmul.f32 %v1915, %v1565
          %v2931 = vmul.f32 %v1920, %v1568
          %v2932 = vmul.f32 %v1925, %v1565
          %v2933 = vmul.f32 %v1930, %v1568
          %s2934 = smul.u32 %s1143, 48
          %s2935 = scalar_lea.vmem [#allocation3], %s2934
          %v2936 = vld [vmem:[%s2935] sm:$0xff]
          %v2937 = vld [vmem:[%s2935 + $0x8] sm:$0xff]
          %v2938 = vld [vmem:[%s2935 + $0x10] sm:$0xff]
          %v2939 = vld [vmem:[%s2935 + $0x18] sm:$0xff]
          %v2940 = vld [vmem:[%s2935 + $0x20] sm:$0xff]
          %v2941 = vld [vmem:[%s2935 + $0x28] sm:$0xff]
          %v2942 = vld [vmem:[#allocation5] sm:$0xff]
          %v2943 = vmul.f32 %v2918, %v2936
          %v2944 = vmul.f32 %v2919, %v2937
          %v2945 = vmul.f32 %v2920, %v2936
          %v2946 = vmul.f32 %v2921, %v2937
          %v2947 = vmul.f32 %v2922, %v2936
          %v2948 = vmul.f32 %v2923, %v2937
          %v2949 = vmul.f32 %v2924, %v2936
          %v2950 = vmul.f32 %v2925, %v2937
          %v2951 = vmul.f32 %v2926, %v2936
          %v2952 = vmul.f32 %v2927, %v2937
          %v2953 = vmul.f32 %v2928, %v2936
          %v2954 = vmul.f32 %v2929, %v2937
          %v2955 = vmul.f32 %v2930, %v2936
          %v2956 = vmul.f32 %v2931, %v2937
          %v2957 = vmul.f32 %v2932, %v2936
          %v2958 = vmul.f32 %v2933, %v2937
          %v2959 = vadd.f32 %v2943, %v2944
          %v2960 = vrot.slane %v2959, 4
          %v2961 = vadd.f32 %v2959, %v2960
          %v2962 = vrot.slane %v2961, 2
          %v2963 = vadd.f32 %v2961, %v2962
          %v2964 = vrot.slane %v2963, 1
          %v2965 = vadd.f32 %v2963, %v2964
          %v2966 = vadd.f32 %v2945, %v2946
          %v2967 = vrot.slane %v2966, 4
          %v2968 = vadd.f32 %v2966, %v2967
          %v2969 = vrot.slane %v2968, 2
          %v2970 = vadd.f32 %v2968, %v2969
          %v2971 = vrot.slane %v2970, 1
          %v2972 = vadd.f32 %v2970, %v2971
          %v2973 = vadd.f32 %v2947, %v2948
          %v2974 = vrot.slane %v2973, 4
          %v2975 = vadd.f32 %v2973, %v2974
          %v2976 = vrot.slane %v2975, 2
          %v2977 = vadd.f32 %v2975, %v2976
          %v2978 = vrot.slane %v2977, 1
          %v2979 = vadd.f32 %v2977, %v2978
          %v2980 = vadd.f32 %v2949, %v2950
          %v2981 = vrot.slane %v2980, 4
          %v2982 = vadd.f32 %v2980, %v2981
          %v2983 = vrot.slane %v2982, 2
          %v2984 = vadd.f32 %v2982, %v2983
          %v2985 = vrot.slane %v2984, 1
          %v2986 = vadd.f32 %v2984, %v2985
          %v2987 = vadd.f32 %v2951, %v2952
          %v2988 = vrot.slane %v2987, 4
          %v2989 = vadd.f32 %v2987, %v2988
          %v2990 = vrot.slane %v2989, 2
          %v2991 = vadd.f32 %v2989, %v2990
          %v2992 = vrot.slane %v2991, 1
          %v2993 = vadd.f32 %v2991, %v2992
          %v2994 = vadd.f32 %v2953, %v2954
          %v2995 = vrot.slane %v2994, 4
          %v2996 = vadd.f32 %v2994, %v2995
          %v2997 = vrot.slane %v2996, 2
          %v2998 = vadd.f32 %v2996, %v2997
          %v2999 = vrot.slane %v2998, 1
          %v3000 = vadd.f32 %v2998, %v2999
          %v3001 = vadd.f32 %v2955, %v2956
          %v3002 = vrot.slane %v3001, 4
          %v3003 = vadd.f32 %v3001, %v3002
          %v3004 = vrot.slane %v3003, 2
          %v3005 = vadd.f32 %v3003, %v3004
          %v3006 = vrot.slane %v3005, 1
          %v3007 = vadd.f32 %v3005, %v3006
          %v3008 = vadd.f32 %v2957, %v2958
          %v3009 = vrot.slane %v3008, 4
          %v3010 = vadd.f32 %v3008, %v3009
          %v3011 = vrot.slane %v3010, 2
          %v3012 = vadd.f32 %v3010, %v3011
          %v3013 = vrot.slane %v3012, 1
          %v3014 = vadd.f32 %v3012, %v3013
          %v3023 = vsel %vm2298, %v2972, %v2965
          %v3024 = vsel %vm2300, %v2979, %v3023
          %v3025 = vsel %vm2302, %v2986, %v3024
          %v3026 = vsel %vm2304, %v2993, %v3025
          %v3027 = vsel %vm2306, %v3000, %v3026
          %v3028 = vsel %vm2308, %v3007, %v3027
          %v3029 = vsel %vm2310, %v3014, %v3028
          %v3031 = vadd.f32 %v2942, %v3029
          %3032 = vst [vmem:[#allocation5] sm:$0xff] %v3031
          %v3033 = vld [vmem:[%s2612] sm:$0xff]
          %v3034 = vmul.f32 %v2918, %v2938
          %v3035 = vmul.f32 %v2919, %v2939
          %v3036 = vmul.f32 %v2920, %v2938
          %v3037 = vmul.f32 %v2921, %v2939
          %v3038 = vmul.f32 %v2922, %v2938
          %v3039 = vmul.f32 %v2923, %v2939
          %v3040 = vmul.f32 %v2924, %v2938
          %v3041 = vmul.f32 %v2925, %v2939
          %v3042 = vmul.f32 %v2926, %v2938
          %v3043 = vmul.f32 %v2927, %v2939
          %v3044 = vmul.f32 %v2928, %v2938
          %v3045 = vmul.f32 %v2929, %v2939
          %v3046 = vmul.f32 %v2930, %v2938
          %v3047 = vmul.f32 %v2931, %v2939
          %v3048 = vmul.f32 %v2932, %v2938
          %v3049 = vmul.f32 %v2933, %v2939
          %v3050 = vadd.f32 %v3034, %v3035
          %v3051 = vrot.slane %v3050, 4
          %v3052 = vadd.f32 %v3050, %v3051
          %v3053 = vrot.slane %v3052, 2
          %v3054 = vadd.f32 %v3052, %v3053
          %v3055 = vrot.slane %v3054, 1
          %v3056 = vadd.f32 %v3054, %v3055
          %v3057 = vadd.f32 %v3036, %v3037
          %v3058 = vrot.slane %v3057, 4
          %v3059 = vadd.f32 %v3057, %v3058
          %v3060 = vrot.slane %v3059, 2
          %v3061 = vadd.f32 %v3059, %v3060
          %v3062 = vrot.slane %v3061, 1
          %v3063 = vadd.f32 %v3061, %v3062
          %v3064 = vadd.f32 %v3038, %v3039
          %v3065 = vrot.slane %v3064, 4
          %v3066 = vadd.f32 %v3064, %v3065
          %v3067 = vrot.slane %v3066, 2
          %v3068 = vadd.f32 %v3066, %v3067
          %v3069 = vrot.slane %v3068, 1
          %v3070 = vadd.f32 %v3068, %v3069
          %v3071 = vadd.f32 %v3040, %v3041
          %v3072 = vrot.slane %v3071, 4
          %v3073 = vadd.f32 %v3071, %v3072
          %v3074 = vrot.slane %v3073, 2
          %v3075 = vadd.f32 %v3073, %v3074
          %v3076 = vrot.slane %v3075, 1
          %v3077 = vadd.f32 %v3075, %v3076
          %v3078 = vadd.f32 %v3042, %v3043
          %v3079 = vrot.slane %v3078, 4
          %v3080 = vadd.f32 %v3078, %v3079
          %v3081 = vrot.slane %v3080, 2
          %v3082 = vadd.f32 %v3080, %v3081
          %v3083 = vrot.slane %v3082, 1
          %v3084 = vadd.f32 %v3082, %v3083
          %v3085 = vadd.f32 %v3044, %v3045
          %v3086 = vrot.slane %v3085, 4
          %v3087 = vadd.f32 %v3085, %v3086
          %v3088 = vrot.slane %v3087, 2
          %v3089 = vadd.f32 %v3087, %v3088
          %v3090 = vrot.slane %v3089, 1
          %v3091 = vadd.f32 %v3089, %v3090
          %v3092 = vadd.f32 %v3046, %v3047
          %v3093 = vrot.slane %v3092, 4
          %v3094 = vadd.f32 %v3092, %v3093
          %v3095 = vrot.slane %v3094, 2
          %v3096 = vadd.f32 %v3094, %v3095
          %v3097 = vrot.slane %v3096, 1
          %v3098 = vadd.f32 %v3096, %v3097
          %v3099 = vadd.f32 %v3048, %v3049
          %v3100 = vrot.slane %v3099, 4
          %v3101 = vadd.f32 %v3099, %v3100
          %v3102 = vrot.slane %v3101, 2
          %v3103 = vadd.f32 %v3101, %v3102
          %v3104 = vrot.slane %v3103, 1
          %v3105 = vadd.f32 %v3103, %v3104
          %v3114 = vsel %vm2298, %v3063, %v3056
          %v3115 = vsel %vm2300, %v3070, %v3114
          %v3116 = vsel %vm2302, %v3077, %v3115
          %v3117 = vsel %vm2304, %v3084, %v3116
          %v3118 = vsel %vm2306, %v3091, %v3117
          %v3119 = vsel %vm2308, %v3098, %v3118
          %v3120 = vsel %vm2310, %v3105, %v3119
          %v3122 = vadd.f32 %v3033, %v3120
          %3123 = vst [vmem:[%s2612] sm:$0xff] %v3122
          %v3124 = vld [vmem:[%s2912] sm:$0xff]
          %v3125 = vmul.f32 %v2918, %v2940
          %v3126 = vmul.f32 %v2919, %v2941
          %v3127 = vmul.f32 %v2920, %v2940
          %v3128 = vmul.f32 %v2921, %v2941
          %v3129 = vmul.f32 %v2922, %v2940
          %v3130 = vmul.f32 %v2923, %v2941
          %v3131 = vmul.f32 %v2924, %v2940
          %v3132 = vmul.f32 %v2925, %v2941
          %v3133 = vmul.f32 %v2926, %v2940
          %v3134 = vmul.f32 %v2927, %v2941
          %v3135 = vmul.f32 %v2928, %v2940
          %v3136 = vmul.f32 %v2929, %v2941
          %v3137 = vmul.f32 %v2930, %v2940
          %v3138 = vmul.f32 %v2931, %v2941
          %v3139 = vmul.f32 %v2932, %v2940
          %v3140 = vmul.f32 %v2933, %v2941
          %v3141 = vadd.f32 %v3125, %v3126
          %v3142 = vrot.slane %v3141, 4
          %v3143 = vadd.f32 %v3141, %v3142
          %v3144 = vrot.slane %v3143, 2
          %v3145 = vadd.f32 %v3143, %v3144
          %v3146 = vrot.slane %v3145, 1
          %v3147 = vadd.f32 %v3145, %v3146
          %v3148 = vadd.f32 %v3127, %v3128
          %v3149 = vrot.slane %v3148, 4
          %v3150 = vadd.f32 %v3148, %v3149
          %v3151 = vrot.slane %v3150, 2
          %v3152 = vadd.f32 %v3150, %v3151
          %v3153 = vrot.slane %v3152, 1
          %v3154 = vadd.f32 %v3152, %v3153
          %v3155 = vadd.f32 %v3129, %v3130
          %v3156 = vrot.slane %v3155, 4
          %v3157 = vadd.f32 %v3155, %v3156
          %v3158 = vrot.slane %v3157, 2
          %v3159 = vadd.f32 %v3157, %v3158
          %v3160 = vrot.slane %v3159, 1
          %v3161 = vadd.f32 %v3159, %v3160
          %v3162 = vadd.f32 %v3131, %v3132
          %v3163 = vrot.slane %v3162, 4
          %v3164 = vadd.f32 %v3162, %v3163
          %v3165 = vrot.slane %v3164, 2
          %v3166 = vadd.f32 %v3164, %v3165
          %v3167 = vrot.slane %v3166, 1
          %v3168 = vadd.f32 %v3166, %v3167
          %v3169 = vadd.f32 %v3133, %v3134
          %v3170 = vrot.slane %v3169, 4
          %v3171 = vadd.f32 %v3169, %v3170
          %v3172 = vrot.slane %v3171, 2
          %v3173 = vadd.f32 %v3171, %v3172
          %v3174 = vrot.slane %v3173, 1
          %v3175 = vadd.f32 %v3173, %v3174
          %v3176 = vadd.f32 %v3135, %v3136
          %v3177 = vrot.slane %v3176, 4
          %v3178 = vadd.f32 %v3176, %v3177
          %v3179 = vrot.slane %v3178, 2
          %v3180 = vadd.f32 %v3178, %v3179
          %v3181 = vrot.slane %v3180, 1
          %v3182 = vadd.f32 %v3180, %v3181
          %v3183 = vadd.f32 %v3137, %v3138
          %v3184 = vrot.slane %v3183, 4
          %v3185 = vadd.f32 %v3183, %v3184
          %v3186 = vrot.slane %v3185, 2
          %v3187 = vadd.f32 %v3185, %v3186
          %v3188 = vrot.slane %v3187, 1
          %v3189 = vadd.f32 %v3187, %v3188
          %v3190 = vadd.f32 %v3139, %v3140
          %v3191 = vrot.slane %v3190, 4
          %v3192 = vadd.f32 %v3190, %v3191
          %v3193 = vrot.slane %v3192, 2
          %v3194 = vadd.f32 %v3192, %v3193
          %v3195 = vrot.slane %v3194, 1
          %v3196 = vadd.f32 %v3194, %v3195
          %v3205 = vsel %vm2298, %v3154, %v3147
          %v3206 = vsel %vm2300, %v3161, %v3205
          %v3207 = vsel %vm2302, %v3168, %v3206
          %v3208 = vsel %vm2304, %v3175, %v3207
          %v3209 = vsel %vm2306, %v3182, %v3208
          %v3210 = vsel %vm2308, %v3189, %v3209
          %v3211 = vsel %vm2310, %v3196, %v3210
          %v3213 = vadd.f32 %v3124, %v3211
          %3214 = vst [vmem:[%s2912] sm:$0xff] %v3213
        $region150: #{painn_forward.1} parent=133 // pred_fallthru
          _
        %v3215 = vld [vmem:[#allocation5] sm:$0xff]
        %v3216 = vld [vmem:[#allocation5 + $0x8] sm:$0xff]
        %v3217 = vld [vmem:[#allocation5 + $0x10] sm:$0xff]
        %s3218 = smul.u32 %s1143, 16
        %s3219 = sadd.s32 %s1145, %s3218
        %s3220 = scalar_lea.vmem [#allocation2], %s3219
        %v3221 = vld [vmem:[%s3220] sm:$0xff]
        %s3222 = smul.u32 %s1143, 48
        %s3223 = sadd.s32 %s1145, %s3222
        %s3224 = scalar_lea.vmem [#allocation3], %s3223
        %v3225 = vld [vmem:[%s3224] sm:$0xff]
        %v3226 = vld [vmem:[%s3224 + $0x10] sm:$0xff]
        %v3227 = vld [vmem:[%s3224 + $0x20] sm:$0xff]
        %v3236 = vsel %vm2298, %v1962, %v1955
        %v3237 = vsel %vm2300, %v1969, %v3236
        %v3238 = vsel %vm2302, %v1976, %v3237
        %v3239 = vsel %vm2304, %v1983, %v3238
        %v3240 = vsel %vm2306, %v1990, %v3239
        %v3241 = vsel %vm2308, %v1997, %v3240
        %v3242 = vsel %vm2310, %v2004, %v3241
        %v3244 = vadd.f32 %v3221, %v3242
        %v3245 = vadd.f32 %v3225, %v3215
        %v3246 = vadd.f32 %v3226, %v3216
        %v3247 = vadd.f32 %v3227, %v3217
        %v3248 = vpack.c.bf16 %v3246, %v3245
        %v3249 = vpack.c.bf16 %v3247, %v3247
        %v3250 = vld [vmem:[%s1104] sm:$0xff]
        %v3251 = vld [vmem:[%s1104 + $0x8] sm:$0xff]
        %v3252 = vld [vmem:[%s1104 + $0x10] sm:$0xff]
        %v3253 = vld [vmem:[%s1104 + $0x18] sm:$0xff]
        %v3254 = vld [vmem:[%s1104 + $0x20] sm:$0xff]
        %v3255 = vld [vmem:[%s1104 + $0x28] sm:$0xff]
        %v3256 = vld [vmem:[%s1104 + $0x30] sm:$0xff]
        %v3257 = vld [vmem:[%s1104 + $0x38] sm:$0xff]
        %v3258 = vld [vmem:[%s1104 + $0x40] sm:$0xff]
        %v3259 = vld [vmem:[%s1104 + $0x48] sm:$0xff]
        %v3260 = vld [vmem:[%s1104 + $0x50] sm:$0xff]
        %v3261 = vld [vmem:[%s1104 + $0x58] sm:$0xff]
        %v3262 = vld [vmem:[%s1104 + $0x60] sm:$0xff]
        %v3263 = vld [vmem:[%s1104 + $0x68] sm:$0xff]
        %v3264 = vld [vmem:[%s1104 + $0x70] sm:$0xff]
        %v3265 = vld [vmem:[%s1104 + $0x78] sm:$0xff]
        %v3282 = vunpack.c.l.b16 %v3250
        %v3283 = vunpack.c.h.b16 %v3250
        %v3284 = vunpack.c.l.b16 %v3251
        %v3285 = vunpack.c.h.b16 %v3251
        %v3286 = vunpack.c.l.b16 %v3252
        %v3287 = vunpack.c.h.b16 %v3252
        %v3288 = vunpack.c.l.b16 %v3253
        %v3289 = vunpack.c.h.b16 %v3253
        %v3290 = vunpack.c.l.b16 %v3254
        %v3291 = vunpack.c.h.b16 %v3254
        %v3292 = vunpack.c.l.b16 %v3255
        %v3293 = vunpack.c.h.b16 %v3255
        %v3294 = vunpack.c.l.b16 %v3256
        %v3295 = vunpack.c.h.b16 %v3256
        %v3296 = vunpack.c.l.b16 %v3257
        %v3297 = vunpack.c.h.b16 %v3257
        %v3298 = vunpack.c.l.b16 %v3258
        %v3299 = vunpack.c.h.b16 %v3258
        %v3300 = vunpack.c.l.b16 %v3259
        %v3301 = vunpack.c.h.b16 %v3259
        %v3302 = vunpack.c.l.b16 %v3260
        %v3303 = vunpack.c.h.b16 %v3260
        %v3304 = vunpack.c.l.b16 %v3261
        %v3305 = vunpack.c.h.b16 %v3261
        %v3306 = vunpack.c.l.b16 %v3262
        %v3307 = vunpack.c.h.b16 %v3262
        %v3308 = vunpack.c.l.b16 %v3263
        %v3309 = vunpack.c.h.b16 %v3263
        %v3310 = vunpack.c.l.b16 %v3264
        %v3311 = vunpack.c.h.b16 %v3264
        %v3312 = vunpack.c.l.b16 %v3265
        %v3313 = vunpack.c.h.b16 %v3265
        %v3314 = vpack.c.b16 %v3284, %v3282
        %v3315 = vpack.c.b16 %v3285, %v3283
        %v3316 = vpack.c.b16 %v3288, %v3286
        %v3317 = vpack.c.b16 %v3289, %v3287
        %v3318 = vpack.c.b16 %v3292, %v3290
        %v3319 = vpack.c.b16 %v3293, %v3291
        %v3320 = vpack.c.b16 %v3296, %v3294
        %v3321 = vpack.c.b16 %v3297, %v3295
        %v3322 = vpack.c.b16 %v3300, %v3298
        %v3323 = vpack.c.b16 %v3301, %v3299
        %v3324 = vpack.c.b16 %v3304, %v3302
        %v3325 = vpack.c.b16 %v3305, %v3303
        %v3326 = vpack.c.b16 %v3308, %v3306
        %v3327 = vpack.c.b16 %v3309, %v3307
        %v3328 = vpack.c.b16 %v3312, %v3310
        %v3329 = vpack.c.b16 %v3313, %v3311
        %3346 = vmatprep.subr.bf16.mxu0 %v3329
        %3347 = vmatpush1.bf16.msra.mxu0 %v3328
        %3348 = vmatprep.subr.bf16.mxu0 %v3327
        %3349 = vmatpush1.bf16.msra.mxu0 %v3326
        %3350 = vmatprep.subr.bf16.mxu0 %v3325
        %3351 = vmatpush1.bf16.msra.mxu0 %v3324
        %3352 = vmatprep.subr.bf16.mxu0 %v3323
        %3353 = vmatpush1.bf16.msra.mxu0 %v3322
        %3354 = vmatprep.subr.bf16.mxu0 %v3321
        %3355 = vmatpush1.bf16.msra.mxu0 %v3320
        %3356 = vmatprep.subr.bf16.mxu0 %v3319
        %3357 = vmatpush1.bf16.msra.mxu0 %v3318
        %3358 = vmatprep.subr.bf16.mxu0 %v3317
        %3359 = vmatpush1.bf16.msra.mxu0 %v3316
        %3360 = vmatprep.subr.bf16.mxu0 %v3315
        %3361 = vmatpush1.bf16.msra.mxu0 %v3314
        %3362 = vmatprep.subr.bf16.mxu0 0
        %3363 = vmatpush2.bf16.msra.mxu0 0
        %3364 = vmatprep.subr.bf16.mxu0 0
        %3365 = vmatpush2.bf16.msra.mxu0 0
        %3366 = vmatprep.subr.bf16.mxu0 0
        %3367 = vmatpush2.bf16.msra.mxu0 0
        %3368 = vmatprep.subr.bf16.mxu0 0
        %3369 = vmatpush2.bf16.msra.mxu0 0
        %3370 = vmatprep.subr.bf16.mxu0 0
        %3371 = vmatpush2.bf16.msra.mxu0 0
        %3372 = vmatprep.subr.bf16.mxu0 0
        %3373 = vmatpush2.bf16.msra.mxu0 0
        %3374 = vmatprep.subr.bf16.mxu0 0
        %3375 = vmatpush2.bf16.msra.mxu0 0
        %3376 = vmatprep.subr.bf16.mxu0 0
        %3377 = vmatpush2.bf16.msra.mxu0 0
        %3378 = vmatprep.mubr.bf16.mxu0 0
        %3379 = vmatmul.mubr.bf16.gmra.mxu0 %v3248
        %v3380 = vpop.f32.mrf.mxu0
        %v3381 = vadd.f32 0.0, %v3380
        %v3382 = vpop.f32.mrf.mxu0
        %v3383 = vadd.f32 0.0, %v3382
        %v3384 = vpop.f32.mrf.mxu0
        %v3385 = vadd.f32 0.0, %v3384
        %v3386 = vpop.f32.mrf.mxu0
        %v3387 = vadd.f32 0.0, %v3386
        %3388 = vmatprep.mubr.bf16.mxu0 0
        %3389 = vmatmul.mubr.bf16.gmra.mxu0 %v3249
        %v3390 = vpop.f32.mrf.mxu0
        %v3391 = vadd.f32 0.0, %v3390
        %v3392 = vpop.f32.mrf.mxu0
        %v3393 = vadd.f32 0.0, %v3392
        %v3394 = vpop.f32.mrf.mxu0
        %v3395 = vpop.f32.mrf.mxu0
        %3396 = vdwg.mxu0
        %v3397 = vmul.f32 %v3383, %v3383
        %v3398 = vmul.f32 %v3387, %v3387
        %v3399 = vadd.f32 %v3397, %v3398
        %v3400 = vmul.f32 %v3393, %v3393
        %v3401 = vadd.f32 %v3399, %v3400
        %v3402 = vadd.f32 %v3401, 1e-08
        %v3403 = vrsqrt.pop %v3402
        %v3404 = vmul.f32 %v3402, %v3403
        %vm3405 = vcmp.eq.f32.partialorder %v3402, inf
        %v3406 = vsel %vm3405, %v3402, %v3404
        %vm3407 = vcmp.eq.f32.partialorder %v3402, 0.0
        %v3408 = vand.u32 %v3402, 2147483648
        %v3409 = vsel %vm3407, %v3408, %v3406
        %v3410 = vpack.c.bf16 %v3244, %v3244
        %v3411 = vld [vmem:[%s1109] sm:$0xf]
        %v3412 = vld [vmem:[%s1109 + $0x4] sm:$0xf]
        %v3413 = vld [vmem:[%s1109 + $0x8] sm:$0xf]
        %v3414 = vld [vmem:[%s1109 + $0xc] sm:$0xf]
        %v3415 = vld [vmem:[%s1109 + $0x10] sm:$0xf]
        %v3416 = vld [vmem:[%s1109 + $0x14] sm:$0xf]
        %v3417 = vld [vmem:[%s1109 + $0x18] sm:$0xf]
        %v3418 = vld [vmem:[%s1109 + $0x1c] sm:$0xf]
        %v3419 = vld [vmem:[%s1109 + $0x20] sm:$0xf]
        %v3420 = vld [vmem:[%s1109 + $0x24] sm:$0xf]
        %v3421 = vld [vmem:[%s1109 + $0x28] sm:$0xf]
        %v3422 = vld [vmem:[%s1109 + $0x2c] sm:$0xf]
        %v3423 = vld [vmem:[%s1109 + $0x30] sm:$0xf]
        %v3424 = vld [vmem:[%s1109 + $0x34] sm:$0xf]
        %v3425 = vld [vmem:[%s1109 + $0x38] sm:$0xf]
        %v3426 = vld [vmem:[%s1109 + $0x3c] sm:$0xf]
        %v3427 = vpack.c.bf16 %v3409, %v3409
        %v3428 = vld [vmem:[%s1114] sm:$0xf]
        %v3429 = vld [vmem:[%s1114 + $0x4] sm:$0xf]
        %v3430 = vld [vmem:[%s1114 + $0x8] sm:$0xf]
        %v3431 = vld [vmem:[%s1114 + $0xc] sm:$0xf]
        %v3432 = vld [vmem:[%s1114 + $0x10] sm:$0xf]
        %v3433 = vld [vmem:[%s1114 + $0x14] sm:$0xf]
        %v3434 = vld [vmem:[%s1114 + $0x18] sm:$0xf]
        %v3435 = vld [vmem:[%s1114 + $0x1c] sm:$0xf]
        %v3436 = vld [vmem:[%s1114 + $0x20] sm:$0xf]
        %v3437 = vld [vmem:[%s1114 + $0x24] sm:$0xf]
        %v3438 = vld [vmem:[%s1114 + $0x28] sm:$0xf]
        %v3439 = vld [vmem:[%s1114 + $0x2c] sm:$0xf]
        %v3440 = vld [vmem:[%s1114 + $0x30] sm:$0xf]
        %v3441 = vld [vmem:[%s1114 + $0x34] sm:$0xf]
        %v3442 = vld [vmem:[%s1114 + $0x38] sm:$0xf]
        %v3443 = vld [vmem:[%s1114 + $0x3c] sm:$0xf]
        %v3460 = vunpack.c.l.b16 %v3428
        %v3461 = vunpack.c.l.b16 %v3429
        %v3462 = vunpack.c.l.b16 %v3430
        %v3463 = vunpack.c.l.b16 %v3431
        %v3464 = vunpack.c.l.b16 %v3432
        %v3465 = vunpack.c.l.b16 %v3433
        %v3466 = vunpack.c.l.b16 %v3434
        %v3467 = vunpack.c.l.b16 %v3435
        %v3468 = vunpack.c.l.b16 %v3436
        %v3469 = vunpack.c.l.b16 %v3437
        %v3470 = vunpack.c.l.b16 %v3438
        %v3471 = vunpack.c.l.b16 %v3439
        %v3472 = vunpack.c.l.b16 %v3440
        %v3473 = vunpack.c.l.b16 %v3441
        %v3474 = vunpack.c.l.b16 %v3442
        %v3475 = vunpack.c.l.b16 %v3443
        %v3476 = vpack.c.b16 %v3461, %v3460
        %v3477 = vpack.c.b16 %v3463, %v3462
        %v3478 = vpack.c.b16 %v3465, %v3464
        %v3479 = vpack.c.b16 %v3467, %v3466
        %v3480 = vpack.c.b16 %v3469, %v3468
        %v3481 = vpack.c.b16 %v3471, %v3470
        %v3482 = vpack.c.b16 %v3473, %v3472
        %v3483 = vpack.c.b16 %v3475, %v3474
        %3492 = vmatprep.subr.bf16.mxu0 0
        %3493 = vmatpush1.bf16.msra.mxu0 %v3483
        %3494 = vmatprep.subr.bf16.mxu0 0
        %3495 = vmatpush1.bf16.msra.mxu0 %v3482
        %3496 = vmatprep.subr.bf16.mxu0 0
        %3497 = vmatpush1.bf16.msra.mxu0 %v3481
        %3498 = vmatprep.subr.bf16.mxu0 0
        %3499 = vmatpush1.bf16.msra.mxu0 %v3480
        %3500 = vmatprep.subr.bf16.mxu0 0
        %3501 = vmatpush1.bf16.msra.mxu0 %v3479
        %3502 = vmatprep.subr.bf16.mxu0 0
        %3503 = vmatpush1.bf16.msra.mxu0 %v3478
        %3504 = vmatprep.subr.bf16.mxu0 0
        %3505 = vmatpush1.bf16.msra.mxu0 %v3477
        %3506 = vmatprep.subr.bf16.mxu0 0
        %3507 = vmatpush1.bf16.msra.mxu0 %v3476
        %3508 = vmatprep.subr.bf16.mxu0 0
        %3509 = vmatpush2.bf16.msra.mxu0 0
        %3510 = vmatprep.subr.bf16.mxu0 0
        %3511 = vmatpush2.bf16.msra.mxu0 0
        %3512 = vmatprep.subr.bf16.mxu0 0
        %3513 = vmatpush2.bf16.msra.mxu0 0
        %3514 = vmatprep.subr.bf16.mxu0 0
        %3515 = vmatpush2.bf16.msra.mxu0 0
        %3516 = vmatprep.subr.bf16.mxu0 0
        %3517 = vmatpush2.bf16.msra.mxu0 0
        %3518 = vmatprep.subr.bf16.mxu0 0
        %3519 = vmatpush2.bf16.msra.mxu0 0
        %3520 = vmatprep.subr.bf16.mxu0 0
        %3521 = vmatpush2.bf16.msra.mxu0 0
        %3522 = vmatprep.subr.bf16.mxu0 0
        %3523 = vmatpush2.bf16.msra.mxu0 0
        %3524 = vmatprep.mubr.bf16.mxu0 0
        %3525 = vmatmul.mubr.bf16.gmra.mxu0 %v3427
        %v3526 = vpop.f32.mrf.mxu0
        %v3527 = vadd.f32 0.0, %v3526
        %v3528 = vpop.f32.mrf.mxu0
        %v3529 = vpop.f32.mrf.mxu0
        %v3530 = vpop.f32.mrf.mxu0
        %3531 = vdwg.mxu0
        %v3548 = vunpack.c.l.b16 %v3411
        %v3549 = vunpack.c.l.b16 %v3412
        %v3550 = vunpack.c.l.b16 %v3413
        %v3551 = vunpack.c.l.b16 %v3414
        %v3552 = vunpack.c.l.b16 %v3415
        %v3553 = vunpack.c.l.b16 %v3416
        %v3554 = vunpack.c.l.b16 %v3417
        %v3555 = vunpack.c.l.b16 %v3418
        %v3556 = vunpack.c.l.b16 %v3419
        %v3557 = vunpack.c.l.b16 %v3420
        %v3558 = vunpack.c.l.b16 %v3421
        %v3559 = vunpack.c.l.b16 %v3422
        %v3560 = vunpack.c.l.b16 %v3423
        %v3561 = vunpack.c.l.b16 %v3424
        %v3562 = vunpack.c.l.b16 %v3425
        %v3563 = vunpack.c.l.b16 %v3426
        %v3564 = vpack.c.b16 %v3549, %v3548
        %v3565 = vpack.c.b16 %v3551, %v3550
        %v3566 = vpack.c.b16 %v3553, %v3552
        %v3567 = vpack.c.b16 %v3555, %v3554
        %v3568 = vpack.c.b16 %v3557, %v3556
        %v3569 = vpack.c.b16 %v3559, %v3558
        %v3570 = vpack.c.b16 %v3561, %v3560
        %v3571 = vpack.c.b16 %v3563, %v3562
        %3580 = vmatprep.subr.bf16.mxu0 0
        %3581 = vmatpush1.bf16.msra.mxu0 %v3571
        %3582 = vmatprep.subr.bf16.mxu0 0
        %3583 = vmatpush1.bf16.msra.mxu0 %v3570
        %3584 = vmatprep.subr.bf16.mxu0 0
        %3585 = vmatpush1.bf16.msra.mxu0 %v3569
        %3586 = vmatprep.subr.bf16.mxu0 0
        %3587 = vmatpush1.bf16.msra.mxu0 %v3568
        %3588 = vmatprep.subr.bf16.mxu0 0
        %3589 = vmatpush1.bf16.msra.mxu0 %v3567
        %3590 = vmatprep.subr.bf16.mxu0 0
        %3591 = vmatpush1.bf16.msra.mxu0 %v3566
        %3592 = vmatprep.subr.bf16.mxu0 0
        %3593 = vmatpush1.bf16.msra.mxu0 %v3565
        %3594 = vmatprep.subr.bf16.mxu0 0
        %3595 = vmatpush1.bf16.msra.mxu0 %v3564
        %3596 = vmatprep.subr.bf16.mxu0 0
        %3597 = vmatpush2.bf16.msra.mxu0 0
        %3598 = vmatprep.subr.bf16.mxu0 0
        %3599 = vmatpush2.bf16.msra.mxu0 0
        %3600 = vmatprep.subr.bf16.mxu0 0
        %3601 = vmatpush2.bf16.msra.mxu0 0
        %3602 = vmatprep.subr.bf16.mxu0 0
        %3603 = vmatpush2.bf16.msra.mxu0 0
        %3604 = vmatprep.subr.bf16.mxu0 0
        %3605 = vmatpush2.bf16.msra.mxu0 0
        %3606 = vmatprep.subr.bf16.mxu0 0
        %3607 = vmatpush2.bf16.msra.mxu0 0
        %3608 = vmatprep.subr.bf16.mxu0 0
        %3609 = vmatpush2.bf16.msra.mxu0 0
        %3610 = vmatprep.subr.bf16.mxu0 0
        %3611 = vmatpush2.bf16.msra.mxu0 0
        %3612 = vmatprep.mubr.bf16.mxu0 0
        %3613 = vmatmul.mubr.bf16.gmra.mxu0 %v3410
        %v3614 = vpop.f32.mrf.mxu0
        %v3615 = vadd.f32 %v3527, %v3614
        %v3616 = vpop.f32.mrf.mxu0
        %v3617 = vpop.f32.mrf.mxu0
        %v3618 = vpop.f32.mrf.mxu0
        %3619 = vdwg.mxu0
        %v3620 = vld [vmem:[%s1117] sm:$0x1]
        %v3622 = vlaneseq
        %v3623 = vshrl.u32 %v3622, 7
        %v3624 = vsub.s32 0, %v3623
        %v3625 = vrot.slane %v3620, %v3624
        %v3627 = vadd.f32 %v3615, %v3625
        %v3628 = vxor.u32 %v3627, 2147483648
        %v3629 = vmul.f32 %v3628, 1.442695
        %v3630 = vpow.pop %v3629
        %v3631 = vadd.f32 %v3630, 1.0
        %v3632 = vrcp.pop %v3631
        %v3633 = vmul.f32 1.0, %v3632
        %v3634 = vmul.f32 %v3627, %v3633
        %v3635 = vpack.c.bf16 %v3634, %v3634
        %v3636 = vld [vmem:[%s1122] sm:$0xff]
        %v3637 = vld [vmem:[%s1122 + $0x8] sm:$0xf]
        %v3638 = vld [vmem:[%s1122 + $0xc] sm:$0xff]
        %v3639 = vld [vmem:[%s1122 + $0x14] sm:$0xf]
        %v3640 = vld [vmem:[%s1122 + $0x18] sm:$0xff]
        %v3641 = vld [vmem:[%s1122 + $0x20] sm:$0xf]
        %v3642 = vld [vmem:[%s1122 + $0x24] sm:$0xff]
        %v3643 = vld [vmem:[%s1122 + $0x2c] sm:$0xf]
        %v3644 = vld [vmem:[%s1122 + $0x30] sm:$0xff]
        %v3645 = vld [vmem:[%s1122 + $0x38] sm:$0xf]
        %v3646 = vld [vmem:[%s1122 + $0x3c] sm:$0xff]
        %v3647 = vld [vmem:[%s1122 + $0x44] sm:$0xf]
        %v3648 = vld [vmem:[%s1122 + $0x48] sm:$0xff]
        %v3649 = vld [vmem:[%s1122 + $0x50] sm:$0xf]
        %v3650 = vld [vmem:[%s1122 + $0x54] sm:$0xff]
        %v3651 = vld [vmem:[%s1122 + $0x5c] sm:$0xf]
        %v3652 = vld [vmem:[%s1122 + $0x60] sm:$0xff]
        %v3653 = vld [vmem:[%s1122 + $0x68] sm:$0xf]
        %v3654 = vld [vmem:[%s1122 + $0x6c] sm:$0xff]
        %v3655 = vld [vmem:[%s1122 + $0x74] sm:$0xf]
        %v3656 = vld [vmem:[%s1122 + $0x78] sm:$0xff]
        %v3657 = vld [vmem:[%s1122 + $0x80] sm:$0xf]
        %v3658 = vld [vmem:[%s1122 + $0x84] sm:$0xff]
        %v3659 = vld [vmem:[%s1122 + $0x8c] sm:$0xf]
        %v3660 = vld [vmem:[%s1122 + $0x90] sm:$0xff]
        %v3661 = vld [vmem:[%s1122 + $0x98] sm:$0xf]
        %v3662 = vld [vmem:[%s1122 + $0x9c] sm:$0xff]
        %v3663 = vld [vmem:[%s1122 + $0xa4] sm:$0xf]
        %v3664 = vld [vmem:[%s1122 + $0xa8] sm:$0xff]
        %v3665 = vld [vmem:[%s1122 + $0xb0] sm:$0xf]
        %v3666 = vld [vmem:[%s1122 + $0xb4] sm:$0xff]
        %v3667 = vld [vmem:[%s1122 + $0xbc] sm:$0xf]
        %v3668 = vld [vmem:[%s1126] sm:$0x7]
        %v3670 = vlaneseq
        %v3671 = vshrl.u32 %v3670, 7
        %v3672 = vsub.s32 0, %v3671
        %v3673 = vrot.slane %v3668, %v3672
        %v3674 = vlaneseq
        %v3675 = vshrl.u32 %v3674, 7
        %v3676 = vsub.s32 1, %v3675
        %v3677 = vrot.slane %v3668, %v3676
        %v3678 = vlaneseq
        %v3679 = vshrl.u32 %v3678, 7
        %v3680 = vsub.s32 2, %v3679
        %v3681 = vrot.slane %v3668, %v3680
        %v3717 = vunpack.c.l.b16 %v3636
        %v3718 = vunpack.c.h.b16 %v3636
        %v3719 = vunpack.c.l.b16 %v3637
        %v3720 = vunpack.c.l.b16 %v3638
        %v3721 = vunpack.c.h.b16 %v3638
        %v3722 = vunpack.c.l.b16 %v3639
        %v3723 = vunpack.c.l.b16 %v3640
        %v3724 = vunpack.c.h.b16 %v3640
        %v3725 = vunpack.c.l.b16 %v3641
        %v3726 = vunpack.c.l.b16 %v3642
        %v3727 = vunpack.c.h.b16 %v3642
        %v3728 = vunpack.c.l.b16 %v3643
        %v3729 = vunpack.c.l.b16 %v3644
        %v3730 = vunpack.c.h.b16 %v3644
        %v3731 = vunpack.c.l.b16 %v3645
        %v3732 = vunpack.c.l.b16 %v3646
        %v3733 = vunpack.c.h.b16 %v3646
        %v3734 = vunpack.c.l.b16 %v3647
        %v3735 = vunpack.c.l.b16 %v3648
        %v3736 = vunpack.c.h.b16 %v3648
        %v3737 = vunpack.c.l.b16 %v3649
        %v3738 = vunpack.c.l.b16 %v3650
        %v3739 = vunpack.c.h.b16 %v3650
        %v3740 = vunpack.c.l.b16 %v3651
        %v3741 = vunpack.c.l.b16 %v3652
        %v3742 = vunpack.c.h.b16 %v3652
        %v3743 = vunpack.c.l.b16 %v3653
        %v3744 = vunpack.c.l.b16 %v3654
        %v3745 = vunpack.c.h.b16 %v3654
        %v3746 = vunpack.c.l.b16 %v3655
        %v3747 = vunpack.c.l.b16 %v3656
        %v3748 = vunpack.c.h.b16 %v3656
        %v3749 = vunpack.c.l.b16 %v3657
        %v3750 = vunpack.c.l.b16 %v3658
        %v3751 = vunpack.c.h.b16 %v3658
        %v3752 = vunpack.c.l.b16 %v3659
        %v3753 = vunpack.c.l.b16 %v3660
        %v3754 = vunpack.c.h.b16 %v3660
        %v3755 = vunpack.c.l.b16 %v3661
        %v3756 = vunpack.c.l.b16 %v3662
        %v3757 = vunpack.c.h.b16 %v3662
        %v3758 = vunpack.c.l.b16 %v3663
        %v3759 = vunpack.c.l.b16 %v3664
        %v3760 = vunpack.c.h.b16 %v3664
        %v3761 = vunpack.c.l.b16 %v3665
        %v3762 = vunpack.c.l.b16 %v3666
        %v3763 = vunpack.c.h.b16 %v3666
        %v3764 = vunpack.c.l.b16 %v3667
        %v3765 = vpack.c.b16 %v3720, %v3717
        %v3766 = vpack.c.b16 %v3721, %v3718
        %v3767 = vpack.c.b16 %v3722, %v3719
        %v3768 = vpack.c.b16 %v3726, %v3723
        %v3769 = vpack.c.b16 %v3727, %v3724
        %v3770 = vpack.c.b16 %v3728, %v3725
        %v3771 = vpack.c.b16 %v3732, %v3729
        %v3772 = vpack.c.b16 %v3733, %v3730
        %v3773 = vpack.c.b16 %v3734, %v3731
        %v3774 = vpack.c.b16 %v3738, %v3735
        %v3775 = vpack.c.b16 %v3739, %v3736
        %v3776 = vpack.c.b16 %v3740, %v3737
        %v3777 = vpack.c.b16 %v3744, %v3741
        %v3778 = vpack.c.b16 %v3745, %v3742
        %v3779 = vpack.c.b16 %v3746, %v3743
        %v3780 = vpack.c.b16 %v3750, %v3747
        %v3781 = vpack.c.b16 %v3751, %v3748
        %v3782 = vpack.c.b16 %v3752, %v3749
        %v3783 = vpack.c.b16 %v3756, %v3753
        %v3784 = vpack.c.b16 %v3757, %v3754
        %v3785 = vpack.c.b16 %v3758, %v3755
        %v3786 = vpack.c.b16 %v3762, %v3759
        %v3787 = vpack.c.b16 %v3763, %v3760
        %v3788 = vpack.c.b16 %v3764, %v3761
        %3813 = vmatprep.subr.bf16.mxu0 %v3787
        %3814 = vmatpush1.bf16.msra.mxu0 %v3786
        %3815 = vmatprep.subr.bf16.mxu0 %v3784
        %3816 = vmatpush1.bf16.msra.mxu0 %v3783
        %3817 = vmatprep.subr.bf16.mxu0 %v3781
        %3818 = vmatpush1.bf16.msra.mxu0 %v3780
        %3819 = vmatprep.subr.bf16.mxu0 %v3778
        %3820 = vmatpush1.bf16.msra.mxu0 %v3777
        %3821 = vmatprep.subr.bf16.mxu0 %v3775
        %3822 = vmatpush1.bf16.msra.mxu0 %v3774
        %3823 = vmatprep.subr.bf16.mxu0 %v3772
        %3824 = vmatpush1.bf16.msra.mxu0 %v3771
        %3825 = vmatprep.subr.bf16.mxu0 %v3769
        %3826 = vmatpush1.bf16.msra.mxu0 %v3768
        %3827 = vmatprep.subr.bf16.mxu0 %v3766
        %3828 = vmatpush1.bf16.msra.mxu0 %v3765
        %3829 = vmatprep.subr.bf16.mxu0 0
        %3830 = vmatpush2.bf16.msra.mxu0 0
        %3831 = vmatprep.subr.bf16.mxu0 0
        %3832 = vmatpush2.bf16.msra.mxu0 0
        %3833 = vmatprep.subr.bf16.mxu0 0
        %3834 = vmatpush2.bf16.msra.mxu0 0
        %3835 = vmatprep.subr.bf16.mxu0 0
        %3836 = vmatpush2.bf16.msra.mxu0 0
        %3837 = vmatprep.subr.bf16.mxu0 0
        %3838 = vmatpush2.bf16.msra.mxu0 0
        %3839 = vmatprep.subr.bf16.mxu0 0
        %3840 = vmatpush2.bf16.msra.mxu0 0
        %3841 = vmatprep.subr.bf16.mxu0 0
        %3842 = vmatpush2.bf16.msra.mxu0 0
        %3843 = vmatprep.subr.bf16.mxu0 0
        %3844 = vmatpush2.bf16.msra.mxu0 0
        %3845 = vmatprep.mubr.bf16.mxu0 0
        %3846 = vmatmul.mubr.bf16.gmra.mxu0 %v3635
        %v3847 = vpop.f32.mrf.mxu0
        %v3848 = vadd.f32 %v3673, %v3847
        %v3849 = vpop.f32.mrf.mxu0
        %v3850 = vadd.f32 %v3677, %v3849
        %v3851 = vpop.f32.mrf.mxu0
        %v3852 = vpop.f32.mrf.mxu0
        %3853 = vdwg.mxu0
        %3854 = vmatprep.subr.bf16.mxu0 0
        %3855 = vmatpush1.bf16.msra.mxu0 %v3788
        %3856 = vmatprep.subr.bf16.mxu0 0
        %3857 = vmatpush1.bf16.msra.mxu0 %v3785
        %3858 = vmatprep.subr.bf16.mxu0 0
        %3859 = vmatpush1.bf16.msra.mxu0 %v3782
        %3860 = vmatprep.subr.bf16.mxu0 0
        %3861 = vmatpush1.bf16.msra.mxu0 %v3779
        %3862 = vmatprep.subr.bf16.mxu0 0
        %3863 = vmatpush1.bf16.msra.mxu0 %v3776
        %3864 = vmatprep.subr.bf16.mxu0 0
        %3865 = vmatpush1.bf16.msra.mxu0 %v3773
        %3866 = vmatprep.subr.bf16.mxu0 0
        %3867 = vmatpush1.bf16.msra.mxu0 %v3770
        %3868 = vmatprep.subr.bf16.mxu0 0
        %3869 = vmatpush1.bf16.msra.mxu0 %v3767
        %3870 = vmatprep.subr.bf16.mxu0 0
        %3871 = vmatpush2.bf16.msra.mxu0 0
        %3872 = vmatprep.subr.bf16.mxu0 0
        %3873 = vmatpush2.bf16.msra.mxu0 0
        %3874 = vmatprep.subr.bf16.mxu0 0
        %3875 = vmatpush2.bf16.msra.mxu0 0
        %3876 = vmatprep.subr.bf16.mxu0 0
        %3877 = vmatpush2.bf16.msra.mxu0 0
        %3878 = vmatprep.subr.bf16.mxu0 0
        %3879 = vmatpush2.bf16.msra.mxu0 0
        %3880 = vmatprep.subr.bf16.mxu0 0
        %3881 = vmatpush2.bf16.msra.mxu0 0
        %3882 = vmatprep.subr.bf16.mxu0 0
        %3883 = vmatpush2.bf16.msra.mxu0 0
        %3884 = vmatprep.subr.bf16.mxu0 0
        %3885 = vmatpush2.bf16.msra.mxu0 0
        %3886 = vmatprep.mubr.bf16.mxu0 0
        %3887 = vmatmul.mubr.bf16.gmra.mxu0 %v3635
        %v3888 = vpop.f32.mrf.mxu0
        %v3889 = vadd.f32 %v3681, %v3888
        %v3890 = vpop.f32.mrf.mxu0
        %v3891 = vpop.f32.mrf.mxu0
        %v3892 = vpop.f32.mrf.mxu0
        %3893 = vdwg.mxu0
        %v3894 = vmul.f32 %v3381, %v3383
        %v3895 = vmul.f32 %v3385, %v3387
        %v3896 = vadd.f32 %v3894, %v3895
        %v3897 = vmul.f32 %v3391, %v3393
        %v3898 = vadd.f32 %v3896, %v3897
        %v3899 = vmul.f32 %v3850, %v3898
        %v3900 = vadd.f32 %v3244, %v3899
        %v3901 = vadd.f32 %v3900, %v3889
        %v3902 = vadd.f32 %v3901, %v3242
        %v3903 = vmul.f32 %v3848, %v3381
        %v3904 = vmul.f32 %v3848, %v3385
        %v3905 = vmul.f32 %v3848, %v3391
        %v3906 = vadd.f32 %v3245, %v3903
        %v3907 = vadd.f32 %v3246, %v3904
        %v3908 = vadd.f32 %v3247, %v3905
        %v3909 = vadd.f32 %v3906, %v3215
        %v3910 = vadd.f32 %v3907, %v3216
        %v3911 = vadd.f32 %v3908, %v3217
        %s3912 = smul.u32 %s1144, 16
        %s3913 = sadd.s32 %s1145, %s3912
        %s3914 = scalar_lea.vmem [#allocation2], %s3913
        %3915 = vst [vmem:[%s3914] sm:$0xff] %v3902
        %s3916 = smul.u32 %s1144, 48
        %s3917 = sadd.s32 %s1145, %s3916
        %s3918 = scalar_lea.vmem [#allocation3], %s3917
        %3919 = vst [vmem:[%s3918] sm:$0xff] %v3909
        %3920 = vst [vmem:[%s3918 + $0x10] sm:$0xff] %v3910
        %3921 = vst [vmem:[%s3918 + $0x20] sm:$0xff] %v3911
        %p3922 = scmp.eq.s32.totalorder %s37, 2
        // Predicated region
        $region151: #{painn_forward.1} parent=133 // pred_check
          %p3923 = pneg %p3922
        $region152: #{painn_forward.1} parent=133 // pred_check_branch
          %3925 = sbr.rel (%p3923) target = $region154
        $region153: #{painn_forward.1} parent=133 // pred_region
          %v3926 = vpack.c.bf16 %v3902, %v3902
          %v3927 = vld [vmem:[%s16] sm:$0xf]
          %v3928 = vld [vmem:[%s16 + $0x4] sm:$0xf]
          %v3929 = vld [vmem:[%s16 + $0x8] sm:$0xf]
          %v3930 = vld [vmem:[%s16 + $0xc] sm:$0xf]
          %v3931 = vld [vmem:[%s16 + $0x10] sm:$0xf]
          %v3932 = vld [vmem:[%s16 + $0x14] sm:$0xf]
          %v3933 = vld [vmem:[%s16 + $0x18] sm:$0xf]
          %v3934 = vld [vmem:[%s16 + $0x1c] sm:$0xf]
          %v3935 = vld [vmem:[%s16 + $0x20] sm:$0xf]
          %v3936 = vld [vmem:[%s16 + $0x24] sm:$0xf]
          %v3937 = vld [vmem:[%s16 + $0x28] sm:$0xf]
          %v3938 = vld [vmem:[%s16 + $0x2c] sm:$0xf]
          %v3939 = vld [vmem:[%s16 + $0x30] sm:$0xf]
          %v3940 = vld [vmem:[%s16 + $0x34] sm:$0xf]
          %v3941 = vld [vmem:[%s16 + $0x38] sm:$0xf]
          %v3942 = vld [vmem:[%s16 + $0x3c] sm:$0xf]
          %v3943 = vld [vmem:[%s17] sm:$0x1]
          %v3945 = vlaneseq
          %v3946 = vshrl.u32 %v3945, 7
          %v3947 = vsub.s32 0, %v3946
          %v3948 = vrot.slane %v3943, %v3947
          %v3966 = vunpack.c.l.b16 %v3927
          %v3967 = vunpack.c.l.b16 %v3928
          %v3968 = vunpack.c.l.b16 %v3929
          %v3969 = vunpack.c.l.b16 %v3930
          %v3970 = vunpack.c.l.b16 %v3931
          %v3971 = vunpack.c.l.b16 %v3932
          %v3972 = vunpack.c.l.b16 %v3933
          %v3973 = vunpack.c.l.b16 %v3934
          %v3974 = vunpack.c.l.b16 %v3935
          %v3975 = vunpack.c.l.b16 %v3936
          %v3976 = vunpack.c.l.b16 %v3937
          %v3977 = vunpack.c.l.b16 %v3938
          %v3978 = vunpack.c.l.b16 %v3939
          %v3979 = vunpack.c.l.b16 %v3940
          %v3980 = vunpack.c.l.b16 %v3941
          %v3981 = vunpack.c.l.b16 %v3942
          %v3982 = vpack.c.b16 %v3967, %v3966
          %v3983 = vpack.c.b16 %v3969, %v3968
          %v3984 = vpack.c.b16 %v3971, %v3970
          %v3985 = vpack.c.b16 %v3973, %v3972
          %v3986 = vpack.c.b16 %v3975, %v3974
          %v3987 = vpack.c.b16 %v3977, %v3976
          %v3988 = vpack.c.b16 %v3979, %v3978
          %v3989 = vpack.c.b16 %v3981, %v3980
          %3998 = vmatprep.subr.bf16.mxu0 0
          %3999 = vmatpush1.bf16.msra.mxu0 %v3989
          %4000 = vmatprep.subr.bf16.mxu0 0
          %4001 = vmatpush1.bf16.msra.mxu0 %v3988
          %4002 = vmatprep.subr.bf16.mxu0 0
          %4003 = vmatpush1.bf16.msra.mxu0 %v3987
          %4004 = vmatprep.subr.bf16.mxu0 0
          %4005 = vmatpush1.bf16.msra.mxu0 %v3986
          %4006 = vmatprep.subr.bf16.mxu0 0
          %4007 = vmatpush1.bf16.msra.mxu0 %v3985
          %4008 = vmatprep.subr.bf16.mxu0 0
          %4009 = vmatpush1.bf16.msra.mxu0 %v3984
          %4010 = vmatprep.subr.bf16.mxu0 0
          %4011 = vmatpush1.bf16.msra.mxu0 %v3983
          %4012 = vmatprep.subr.bf16.mxu0 0
          %4013 = vmatpush1.bf16.msra.mxu0 %v3982
          %4014 = vmatprep.subr.bf16.mxu0 0
          %4015 = vmatpush2.bf16.msra.mxu0 0
          %4016 = vmatprep.subr.bf16.mxu0 0
          %4017 = vmatpush2.bf16.msra.mxu0 0
          %4018 = vmatprep.subr.bf16.mxu0 0
          %4019 = vmatpush2.bf16.msra.mxu0 0
          %4020 = vmatprep.subr.bf16.mxu0 0
          %4021 = vmatpush2.bf16.msra.mxu0 0
          %4022 = vmatprep.subr.bf16.mxu0 0
          %4023 = vmatpush2.bf16.msra.mxu0 0
          %4024 = vmatprep.subr.bf16.mxu0 0
          %4025 = vmatpush2.bf16.msra.mxu0 0
          %4026 = vmatprep.subr.bf16.mxu0 0
          %4027 = vmatpush2.bf16.msra.mxu0 0
          %4028 = vmatprep.subr.bf16.mxu0 0
          %4029 = vmatpush2.bf16.msra.mxu0 0
          %4030 = vmatprep.mubr.bf16.mxu0 0
          %4031 = vmatmul.mubr.bf16.gmra.mxu0 %v3926
          %v4032 = vpop.f32.mrf.mxu0
          %v4033 = vadd.f32 %v3948, %v4032
          %v4034 = vpop.f32.mrf.mxu0
          %v4035 = vpop.f32.mrf.mxu0
          %v4036 = vpop.f32.mrf.mxu0
          %4037 = vdwg.mxu0
          %v4038 = vxor.u32 %v4033, 2147483648
          %v4039 = vmul.f32 %v4038, 1.442695
          %v4040 = vpow.pop %v4039
          %v4041 = vadd.f32 %v4040, 1.0
          %v4042 = vrcp.pop %v4041
          %v4043 = vmul.f32 1.0, %v4042
          %v4044 = vmul.f32 %v4033, %v4043
          %v4045 = vld [vmem:[%s18] sm:$0x1]
          %v4047 = vlaneseq
          %v4048 = vshrl.u32 %v4047, 7
          %v4049 = vsub.s32 0, %v4048
          %v4050 = vrot.slane %v4045, %v4049
          %v4052 = vmul.f32 %v4044, %v4050
          %4053 = vadd.xlane.f32.xlu0 %v4052
          %v4054 = vpop.xlane.xlu0 %4053
          %v4055 = vld [vmem:[#allocation6] sm:$0x1]
          %v4057 = vlaneseq
          %v4058 = vshrl.u32 %v4057, 7
          %v4059 = vsub.s32 0, %v4058
          %v4060 = vrot.slane %v4055, %v4059
          %v4062 = vadd.f32 %v4054, %v4060
          %vm4063 = vcmask 7168
          %4064 = vst.msk [vmem:[%s1130] sm:$0xff] %vm4063, %v4062
        $region154: #{painn_forward.1} parent=133 // pred_fallthru
          _
        %p4065 = scmp.lt.s32.totalorder %s38, 1
        %s4066 = scalar_select %p4065, %s38, 1
        %s4067 = smul.addr %s4066, 8
        %s4068 = scalar_lea.vmem %s20, %s4067
        // Predicated region
        $region155: #{painn_forward.1} parent=133 // pred_check
          %p4069 = pneg %p558
        $region156: #{painn_forward.1} parent=133 // pred_check_branch
          %4071 = sbr.rel (%p4069) target = $region158
        $region157: #{painn_forward.1} parent=133 // pred_region
          _
        $region158: #{painn_forward.1} parent=133 // pred_fallthru
          _
      $region134: #{painn_forward.1} parent=5 // pred_fallthru
        _
      %p4072 = scmp.le.s32.totalorder 2, %s28
      // Predicated region
      $region159: #{painn_forward.1} parent=5 // pred_check
        %p4073 = pneg %p4072
      $region160: #{painn_forward.1} parent=5 // pred_check_branch
        %4075 = sbr.rel (%p4073) target = $region162
      $region161: #{painn_forward.1} parent=5 // pred_region
        %s4076 = ssub.s32 %s28, 2
        // Predicated region
        $region163: #{painn_forward.1} parent=161 // pred_check
          %p4077 = pneg %p564
        $region164: #{painn_forward.1} parent=161 // pred_check_branch
          %4079 = sbr.rel (%p4077) target = $region166
        $region165: #{painn_forward.1} parent=161 // pred_region
          %p4080 = scmp.lt.s32.totalorder %s40, 1
          %s4081 = scalar_select %p4080, %s40, 1
          %s4082 = smul.addr %s4081, 8
          %s4083 = scalar_lea.vmem %s20, %s4082
        $region166: #{painn_forward.1} parent=161 // pred_fallthru
          _
      $region162: #{painn_forward.1} parent=5 // pred_fallthru
        _
    $region6: #{painn_forward.1} parent=1 // loop_footer
      %s32 = sadd.s32 1, %s28
    $region7: #{painn_forward.1} parent=1 // loop_footer_branch
      %27 = sbr.rel target = $region3
    $region8: #{painn_forward.1} parent=1 // loop_exit
      _

</llo_original>
